<compile_context>
chip_gen: v7x
topology: tpu7x:2x2x1
jax: 0.10.0
libtpu: 0.0.40
codegen_flags: <defaults>
</compile_context>

<pallas_src>
from functools import partial

import jax
import jax.numpy as jnp
from jax import lax
from jax.experimental import pallas as pl
from jax.experimental.pallas import tpu as pltpu


def _mha_kernel(x_ref, wq_ref, kv_or_wkv_ref, wo_ref, bo_ref, o_ref, *scratch,
                num_head, head_dim, tq, n_valid, fuse_kv, q_axis):
    # fuse_kv=True  (B > 1): x_ref is the full (Np, C) sequence of this batch
    #   element, kv_or_wkv_ref is the fused [Wk | Wv]^T weight (C, 2C) and the
    #   K/V projection is computed once per batch element into a VMEM scratch.
    # fuse_kv=False (B == 1): x_ref is just the (tq, C) query tile and
    #   kv_or_wkv_ref is the precomputed [K | V] (Np, 2C); the query-tile grid
    #   axis is then fully parallel (v7x megacore).
    # wq_ref: (C, C) Wq^T with the softmax scale pre-folded.
    # wo_ref: (C, C) Wo^T.     bo_ref: (1, C) output bias.
    # o_ref:  (tq, C) query tile of the output.
    C = num_head * head_dim
    dtype = x_ref.dtype
    qi = pl.program_id(q_axis)

    if fuse_kv:
        kv_ref, ctx_ref = scratch
        Np = kv_ref.shape[0]

        # K/V projection for this batch element, once per batch element.  The
        # Q projection is folded into every query-tile step below, so this
        # step only carries the 2C-wide half of the projection (no big spike).
        @pl.when(qi == 0)
        def _():
            kv_ref[...] = jnp.dot(
                x_ref[...], kv_or_wkv_ref[...],
                preferred_element_type=jnp.float32).astype(kv_ref.dtype)

        kv = kv_ref
        x_tile = x_ref[pl.ds(pl.multiple_of(qi * tq, tq), tq), :]   # (tq, C)
    else:
        (ctx_ref,) = scratch
        kv = kv_or_wkv_ref
        Np = kv.shape[0]
        x_tile = x_ref[...]                                          # (tq, C)

    # Q rows of this tile; softmax scale already folded into wq in the wrapper.
    q_rows = jnp.dot(x_tile, wq_ref[...],
                     preferred_element_type=jnp.float32).astype(dtype)

    # Key-padding mask, only materialized when the wrapper padded N.
    if n_valid < Np:
        key_mask = lax.broadcasted_iota(jnp.int32, (tq, Np), 1) < n_valid

    # Per-head attention.  Each head writes its (tq, head_dim) context into
    # its lane slice of ctx_ref so the output projection below is a single
    # K=C MXU pass instead of H passes with K=head_dim.
    # TODO(synk): a lax.fori_loop over heads would bound the live (tq, Np)
    # f32 temps, but needs dynamic lane-dim ref slices of the packed (Np, 2C)
    # K/V layout; keep the static unroll (H is 8-16 for ViT).
    for h in range(num_head):
        lo = h * head_dim
        hi = lo + head_dim
        q_h = q_rows[:, lo:hi]                                  # (tq, hd)
        k_h = kv[:, lo:hi]                                      # (Np, hd)
        v_h = kv[:, C + lo:C + hi]                              # (Np, hd)

        # (tq, Np) scores; contract last dims so K is consumed untransposed.
        s = lax.dot_general(q_h, k_h, (((1,), (1,)), ((), ())),
                            preferred_element_type=jnp.float32)
        if n_valid < Np:
            s = jnp.where(key_mask, s, -jnp.inf)
        s = s - jnp.max(s, axis=-1, keepdims=True)              # stable softmax
        p = jnp.exp(s)
        p = p * pl.reciprocal(jnp.sum(p, axis=-1, keepdims=True), approx=True)

        # TODO(synk): attn_drop / proj_drop are identity (default ratio 0.0);
        # non-zero dropout would need pltpu.prng_seed + stateful_bernoulli.
        ctx_ref[:, lo:hi] = jnp.dot(p.astype(v_h.dtype), v_h,
                                    preferred_element_type=jnp.float32
                                    ).astype(ctx_ref.dtype)

    # Single wide output projection: (tq, C) @ (C, C) with K = C.
    out = jnp.dot(ctx_ref[...], wo_ref[...],
                  preferred_element_type=jnp.float32)
    o_ref[...] = (out + bo_ref[...].astype(jnp.float32)).astype(o_ref.dtype)


def _choose_tiling(N, max_tq):
    """Pick (padded_len, query_tile).

    Prefers lane/sublane-friendly tiles that divide N; otherwise pads N up to
    a multiple of a tile <= 128 (e.g. ViT-B's N=197 -> Np=256, tq=128) so the
    kernel gets nq > 1 pipelining and lane-dense stores instead of a single
    197-wide masked step.
    """
    candidates = [t for t in (512, 256, 128, 64, 32, 16, 8) if t <= max_tq]
    for t in candidates:
        if N % t == 0:
            return N, t
    t = min(candidates[0], 128)          # bound padding waste to < 128 rows
    while t > 8 and t > N:
        t //= 2
    Np = t * ((N + t - 1) // t)
    return Np, t


def multihead_attention(x, w_qkv, w_proj, b_proj, *, num_head, qk_scale=None,
                        tq=None):
    """Pallas forward for the PyTorch MultiHeadAttention module.

    x:      (B, N, C)
    w_qkv:  (3C, C)  -- nn.Linear(C, 3C, bias=False).weight
    w_proj: (C, C)   -- nn.Linear(C, C).weight
    b_proj: (C,)     -- nn.Linear(C, C).bias
    """
    B, N, C = x.shape
    assert C % num_head == 0
    head_dim = C // num_head
    scale = float(qk_scale) if qk_scale is not None else head_dim ** (-0.5)
    dtype = x.dtype
    isz = jnp.dtype(dtype).itemsize

    # Generation-aware VMEM budget: v5e/v6e have 128 MiB physical VMEM per
    # core, v7x only 64 MiB.  Leave ~20% headroom under the physical capacity.
    try:
        vmem_cap = int(pltpu.get_tpu_info().vmem_capacity_bytes)
    except Exception:
        vmem_cap = 64 * 1024 * 1024          # conservative (v7x-sized) default
    vmem_ceiling = min(int(vmem_cap * 0.8), 100 * 1024 * 1024)
    max_tq = 512 if vmem_cap >= 100 * 1024 * 1024 else 256

    if tq is None:
        Np, tq = _choose_tiling(N, max_tq)
    else:
        assert tq % 8 == 0
        Np = tq * ((N + tq - 1) // tq)
    nq = Np // tq

    x_p = jnp.pad(x, ((0, 0), (0, Np - N), (0, 0))) if Np != N else x

    # Glue (plain JAX): split & pre-transpose weights so the kernel does plain
    # x @ w matmuls; softmax scale folded into Wq (free, one-time).
    w_qkv = jnp.asarray(w_qkv, dtype)
    w_q = w_qkv[0:C].T * jnp.asarray(scale, dtype)        # (C, C)
    w_kv = w_qkv[C:3 * C].T                               # (C, 2C) = [Wk | Wv]
    wo = jnp.asarray(w_proj, dtype).T                     # (C, C)
    bo = jnp.asarray(b_proj, dtype).reshape(1, C)         # (1, C)

    # With B == 1 there is no batch axis to feed the v7x megacore, so project
    # K/V outside the kernel; the query-tile axis then carries no scratch
    # dependency and can be marked "parallel".
    fuse_kv = B > 1
    kv_pre = None if fuse_kv else (x_p @ w_kv).astype(dtype)   # (1, Np, 2C)

    # Advisory cost for XLA's scheduler around the custom call.
    flops = int(2 * B * N * C * (4 * C) + 4 * B * N * N * C)
    cost = pl.CostEstimate(flops=flops,
                           transcendentals=int(B * num_head * N * N),
                           bytes_accessed=int((2 * B * N * C + 4 * C * C + C) * isz))

    # Rough VMEM estimate (pipelined blocks + scratch + f32 score temps).
    est = (2 * Np * C * isz                      # x blocks
           + (C * C + C * 2 * C + C * C + C) * isz   # weights (single-buffered)
           + 2 * tq * C * isz                    # output block
           + Np * 2 * C * isz                    # K/V (scratch or input block)
           + tq * C * isz                        # per-head context scratch
           + 6 * tq * Np * 4)                    # headroom: f32 scores/probs
    vmem_limit = int(min(vmem_ceiling, max(32 * 1024 * 1024, 2 * est)))

    def _call(single_buffer_weights):
        def _w(shape, index_map):
            # Grid-invariant operands: the second pipeline buffer is dead
            # weight, so request single-buffering when supported.
            if single_buffer_weights:
                return pl.BlockSpec(shape, index_map,
                                    pipeline_mode=pl.Buffered(1))
            return pl.BlockSpec(shape, index_map)

        if fuse_kv:
            grid = (B, nq)
            q_axis = 1
            in_specs = [
                # Full (padded) sequence per batch element; constant along the
                # query-tile axis -> DMA'd once per batch element.
                pl.BlockSpec((None, Np, C), lambda b, q: (b, 0, 0)),
                _w((C, C), lambda b, q: (0, 0)),
                _w((C, 2 * C), lambda b, q: (0, 0)),
                _w((C, C), lambda b, q: (0, 0)),
                _w((1, C), lambda b, q: (0, 0)),
            ]
            out_specs = pl.BlockSpec((None, tq, C), lambda b, q: (b, q, 0))
            scratch = [pltpu.VMEM((Np, 2 * C), dtype),   # K/V, carried over q
                       pltpu.VMEM((tq, C), dtype)]       # per-head context
            dims = ("parallel", "arbitrary")
            kv_arg = w_kv
        else:
            grid = (nq,)
            q_axis = 0
            in_specs = [
                pl.BlockSpec((None, tq, C), lambda q: (0, q, 0)),
                _w((C, C), lambda q: (0, 0)),
                _w((None, Np, 2 * C), lambda q: (0, 0, 0)),
                _w((C, C), lambda q: (0, 0)),
                _w((1, C), lambda q: (0, 0)),
            ]
            out_specs = pl.BlockSpec((None, tq, C), lambda q: (0, q, 0))
            scratch = [pltpu.VMEM((tq, C), dtype)]
            dims = ("parallel",)
            kv_arg = kv_pre

        kernel = partial(_mha_kernel, num_head=num_head, head_dim=head_dim,
                         tq=tq, n_valid=N, fuse_kv=fuse_kv, q_axis=q_axis)
        return pl.pallas_call(
            kernel,
            out_shape=jax.ShapeDtypeStruct((B, Np, C), dtype),
            grid_spec=pltpu.PrefetchScalarGridSpec(
                num_scalar_prefetch=0, grid=grid,
                in_specs=in_specs, out_specs=out_specs,
                scratch_shapes=scratch),
            compiler_params=pltpu.CompilerParams(
                dimension_semantics=dims, vmem_limit_bytes=vmem_limit),
            cost_estimate=cost,
        )(x_p, w_q, kv_arg, wo, bo)

    try:
        out = _call(True)
    except Exception:
        # pipeline_mode=pl.Buffered(1) not supported on this JAX/Mosaic build;
        # fall back to default double-buffering for the resident weights.
        out = _call(False)

    return out[:, :N, :] if Np != N else out


def reference_mha(x, w_qkv, w_proj, b_proj, *, num_head, qk_scale=None):
    """Pure-JAX reference mirroring the PyTorch forward exactly."""
    B, N, C = x.shape
    head_dim = C // num_head
    scale = qk_scale if qk_scale is not None else head_dim ** (-0.5)

    qkv = x @ w_qkv.T                                         # (B, N, 3C)
    qkv = qkv.reshape(B, N, 3, num_head, head_dim).transpose(2, 0, 3, 1, 4)
    q, k, v = qkv[0], qkv[1], qkv[2]                          # (B, H, N, hd)
    attn = jnp.einsum('bhqd,bhkd->bhqk', q, k) * scale
    attn = jax.nn.softmax(attn, axis=-1)
    out = jnp.einsum('bhqk,bhkd->bhqd', attn, v)              # (B, H, N, hd)
    out = out.transpose(0, 2, 1, 3).reshape(B, N, C)
    return out @ w_proj.T + b_proj


if __name__ == "__main__":
    key = jax.random.PRNGKey(0)

    def run_case(B, N, C, H, k):
        kx, kqkv, kp, kb = jax.random.split(k, 4)
        x = jax.random.normal(kx, (B, N, C), dtype=jnp.float32)
        w_qkv = 0.02 * jax.random.normal(kqkv, (3 * C, C), dtype=jnp.float32)
        w_proj = 0.02 * jax.random.normal(kp, (C, C), dtype=jnp.float32)
        b_proj = 0.02 * jax.random.normal(kb, (C,), dtype=jnp.float32)

        out = jax.block_until_ready(
            multihead_attention(x, w_qkv, w_proj, b_proj, num_head=H))
        ref = reference_mha(x, w_qkv, w_proj, b_proj, num_head=H)
        assert out.shape == (B, N, C)
        # Tolerance loosened vs. 1e-5: approx EUP reciprocal in the softmax
        # denominator introduces ~1e-4-level deviations.
        assert jnp.allclose(out, ref, atol=2e-3, rtol=2e-3), \
            f"mismatch vs reference (B={B}, N={N})"

    k1, k2, k3 = jax.random.split(key, 3)
    # Fused-KV path (B > 1), tile divides N (no padding).
    run_case(B=2, N=16, C=64, H=8, k=k1)
    # Fused-KV path with N padding + key masking (N=20 -> Np=32, tq=16).
    run_case(B=2, N=20, C=64, H=8, k=k2)
    # B == 1 path: precomputed K/V, query-tile axis parallel, padded + masked.
    run_case(B=1, N=20, C=64, H=8, k=k3)

    print("KERNEL_OK")
</pallas_src>

<mosaic_0001>
module attributes {stable_mosaic.version = 11 : i64} {
  func.func @_mha_kernel(%arg0: i32, %arg1: i32, %arg2: memref<1x16x64xf32, #tpu.memory_space<vmem>>, %arg3: memref<64x64xf32, #tpu.memory_space<vmem>>, %arg4: memref<64x128xf32, #tpu.memory_space<vmem>>, %arg5: memref<64x64xf32, #tpu.memory_space<vmem>>, %arg6: memref<1x64xf32, #tpu.memory_space<vmem>>, %arg7: memref<1x16x64xf32, #tpu.memory_space<vmem>>, %arg8: memref<16x128xf32, #tpu.memory_space<vmem>>, %arg9: memref<16x64xf32, #tpu.memory_space<vmem>>) attributes {dimension_semantics = [#tpu.dimension_semantics<parallel>, #tpu.dimension_semantics<arbitrary>], iteration_bounds = array<i64: 2, 1>, scalar_prefetch = 0 : i64, scratch_operands = 2 : i64, tpu.core_type = #tpu.core_type<tc>, window_params = [{transform_indices = @transform_0, window_bounds = array<i64: 1, 16, 64>}, {pipeline_mode = #tpu.pipeline_mode<synchronous>, transform_indices = @transform_1, window_bounds = array<i64: 64, 64>}, {pipeline_mode = #tpu.pipeline_mode<synchronous>, transform_indices = @transform_2, window_bounds = array<i64: 64, 128>}, {pipeline_mode = #tpu.pipeline_mode<synchronous>, transform_indices = @transform_3, window_bounds = array<i64: 64, 64>}, {pipeline_mode = #tpu.pipeline_mode<synchronous>, transform_indices = @transform_4, window_bounds = array<i64: 1, 64>}, {transform_indices = @transform_5, window_bounds = array<i64: 1, 16, 64>}]} {
    %c0_i32 = arith.constant 0 : i32
    %0 = arith.cmpi eq, %arg1, %c0_i32 : i32
    %1 = arith.extui %0 : i1 to i32
    %c0_i32_0 = arith.constant 0 : i32
    %2 = arith.cmpi ne, %1, %c0_i32_0 : i32
    scf.if %2 {
      %c0_79 = arith.constant 0 : index
      %c0_80 = arith.constant 0 : index
      %c0_81 = arith.constant 0 : index
      %147 = vector.load %arg2[%c0_79, %c0_80, %c0_81] : memref<1x16x64xf32, #tpu.memory_space<vmem>>, vector<1x16x64xf32>
      %148 = vector.shape_cast %147 : vector<1x16x64xf32> to vector<16x64xf32>
      %c0_82 = arith.constant 0 : index
      %c0_83 = arith.constant 0 : index
      %149 = vector.load %arg4[%c0_82, %c0_83] : memref<64x128xf32, #tpu.memory_space<vmem>>, vector<64x128xf32>
      %cst_84 = arith.constant dense<0.000000e+00> : vector<16x128xf32>
      %150 = tpu.matmul %148, %149, %cst_84 {dimension_numbers = #tpu.dot_dimension_numbers<[1], [0], [0], [1], [0, 0, 1, 1], [], []>} : vector<16x64xf32>, vector<64x128xf32>, vector<16x128xf32> -> vector<16x128xf32>
      %c0_85 = arith.constant 0 : index
      %c0_86 = arith.constant 0 : index
      %151 = vector.load %arg8[%c0_85, %c0_86] : memref<16x128xf32, #tpu.memory_space<vmem>>, vector<16x128xf32>
      tpu.vector_store %arg8[%c0_85, %c0_86], %150 {strides = array<i32>} : memref<16x128xf32, #tpu.memory_space<vmem>>, vector<16x128xf32>,
    } else {
    }
    %c16_i32 = arith.constant 16 : i32
    %3 = arith.muli %arg1, %c16_i32 : i32
    %4 = tpu.assume_multiple %3, 16 : i32
    %c0 = arith.constant 0 : index
    %5 = arith.index_cast %4 : i32 to index
    %c0_1 = arith.constant 0 : index
    %6 = vector.load %arg2[%c0, %5, %c0_1] : memref<1x16x64xf32, #tpu.memory_space<vmem>>, vector<1x16x64xf32>
    %7 = vector.shape_cast %6 : vector<1x16x64xf32> to vector<16x64xf32>
    %c0_2 = arith.constant 0 : index
    %c0_3 = arith.constant 0 : index
    %8 = vector.load %arg3[%c0_2, %c0_3] : memref<64x64xf32, #tpu.memory_space<vmem>>, vector<64x64xf32>
    %cst = arith.constant dense<0.000000e+00> : vector<16x64xf32>
    %9 = tpu.matmul %7, %8, %cst {dimension_numbers = #tpu.dot_dimension_numbers<[1], [0], [0], [1], [0, 0, 1, 1], [], []>} : vector<16x64xf32>, vector<64x64xf32>, vector<16x64xf32> -> vector<16x64xf32>
    %10 = vector.extract_strided_slice %9 {offsets = [0, 0], sizes = [16, 8], strides = [1, 1]} : vector<16x64xf32> to vector<16x8xf32>
    %c0_4 = arith.constant 0 : index
    %c0_5 = arith.constant 0 : index
    %11 = vector.load %arg8[%c0_4, %c0_5] : memref<16x128xf32, #tpu.memory_space<vmem>>, vector<16x8xf32>
    %c0_6 = arith.constant 0 : index
    %c64 = arith.constant 64 : index
    %12 = vector.load %arg8[%c0_6, %c64] : memref<16x128xf32, #tpu.memory_space<vmem>>, vector<16x8xf32>
    %cst_7 = arith.constant dense<0.000000e+00> : vector<16x16xf32>
    %13 = tpu.matmul %10, %11, %cst_7 {dimension_numbers = #tpu.dot_dimension_numbers<[1], [1], [0], [0], [0, 0, 1, 0], [], []>} : vector<16x8xf32>, vector<16x8xf32>, vector<16x16xf32> -> vector<16x16xf32>
    %cst_8 = arith.constant dense<0xFF800000> : vector<16xf32>
    %14 = vector.multi_reduction <maximumf>, %13, %cst_8 [1] : vector<16x16xf32> to vector<16xf32>
    %15 = vector.shape_cast %14 : vector<16xf32> to vector<16x1xf32>
    %16 = vector.broadcast %15 : vector<16x1xf32> to vector<16x16xf32>
    %17 = arith.subf %13, %16 : vector<16x16xf32>
    %18 = math.exp %17 : vector<16x16xf32>
    %cst_9 = arith.constant dense<0.000000e+00> : vector<16xf32>
    %19 = vector.multi_reduction <add>, %18, %cst_9 [1] : vector<16x16xf32> to vector<16xf32>
    %20 = vector.shape_cast %19 : vector<16xf32> to vector<16x1xf32>
    %21 = tpu.reciprocal %20 {approx = true} : vector<16x1xf32> -> vector<16x1xf32>
    %22 = vector.broadcast %21 : vector<16x1xf32> to vector<16x16xf32>
    %23 = arith.mulf %18, %22 : vector<16x16xf32>
    %cst_10 = arith.constant dense<0.000000e+00> : vector<16x8xf32>
    %24 = tpu.matmul %23, %12, %cst_10 {dimension_numbers = #tpu.dot_dimension_numbers<[1], [0], [0], [1], [0, 0, 1, 1], [], []>} : vector<16x16xf32>, vector<16x8xf32>, vector<16x8xf32> -> vector<16x8xf32>
    %c0_11 = arith.constant 0 : index
    %c0_12 = arith.constant 0 : index
    %25 = vector.load %arg9[%c0_11, %c0_12] : memref<16x64xf32, #tpu.memory_space<vmem>>, vector<16x8xf32>
    tpu.vector_store %arg9[%c0_11, %c0_12], %24 {strides = array<i32>} : memref<16x64xf32, #tpu.memory_space<vmem>>, vector<16x8xf32>,
    %26 = vector.extract_strided_slice %9 {offsets = [0, 8], sizes = [16, 8], strides = [1, 1]} : vector<16x64xf32> to vector<16x8xf32>
    %c0_13 = arith.constant 0 : index
    %c8 = arith.constant 8 : index
    %27 = vector.load %arg8[%c0_13, %c8] : memref<16x128xf32, #tpu.memory_space<vmem>>, vector<16x8xf32>
    %c0_14 = arith.constant 0 : index
    %c72 = arith.constant 72 : index
    %28 = vector.load %arg8[%c0_14, %c72] : memref<16x128xf32, #tpu.memory_space<vmem>>, vector<16x8xf32>
    %cst_15 = arith.constant dense<0.000000e+00> : vector<16x16xf32>
    %29 = tpu.matmul %26, %27, %cst_15 {dimension_numbers = #tpu.dot_dimension_numbers<[1], [1], [0], [0], [0, 0, 1, 0], [], []>} : vector<16x8xf32>, vector<16x8xf32>, vector<16x16xf32> -> vector<16x16xf32>
    %cst_16 = arith.constant dense<0xFF800000> : vector<16xf32>
    %30 = vector.multi_reduction <maximumf>, %29, %cst_16 [1] : vector<16x16xf32> to vector<16xf32>
    %31 = vector.shape_cast %30 : vector<16xf32> to vector<16x1xf32>
    %32 = vector.broadcast %31 : vector<16x1xf32> to vector<16x16xf32>
    %33 = arith.subf %29, %32 : vector<16x16xf32>
    %34 = math.exp %33 : vector<16x16xf32>
    %cst_17 = arith.constant dense<0.000000e+00> : vector<16xf32>
    %35 = vector.multi_reduction <add>, %34, %cst_17 [1] : vector<16x16xf32> to vector<16xf32>
    %36 = vector.shape_cast %35 : vector<16xf32> to vector<16x1xf32>
    %37 = tpu.reciprocal %36 {approx = true} : vector<16x1xf32> -> vector<16x1xf32>
    %38 = vector.broadcast %37 : vector<16x1xf32> to vector<16x16xf32>
    %39 = arith.mulf %34, %38 : vector<16x16xf32>
    %cst_18 = arith.constant dense<0.000000e+00> : vector<16x8xf32>
    %40 = tpu.matmul %39, %28, %cst_18 {dimension_numbers = #tpu.dot_dimension_numbers<[1], [0], [0], [1], [0, 0, 1, 1], [], []>} : vector<16x16xf32>, vector<16x8xf32>, vector<16x8xf32> -> vector<16x8xf32>
    %c0_19 = arith.constant 0 : index
    %c8_20 = arith.constant 8 : index
    %41 = vector.load %arg9[%c0_19, %c8_20] : memref<16x64xf32, #tpu.memory_space<vmem>>, vector<16x8xf32>
    tpu.vector_store %arg9[%c0_19, %c8_20], %40 {strides = array<i32>} : memref<16x64xf32, #tpu.memory_space<vmem>>, vector<16x8xf32>,
    %42 = vector.extract_strided_slice %9 {offsets = [0, 16], sizes = [16, 8], strides = [1, 1]} : vector<16x64xf32> to vector<16x8xf32>
    %c0_21 = arith.constant 0 : index
    %c16 = arith.constant 16 : index
    %43 = vector.load %arg8[%c0_21, %c16] : memref<16x128xf32, #tpu.memory_space<vmem>>, vector<16x8xf32>
    %c0_22 = arith.constant 0 : index
    %c80 = arith.constant 80 : index
    %44 = vector.load %arg8[%c0_22, %c80] : memref<16x128xf32, #tpu.memory_space<vmem>>, vector<16x8xf32>
    %cst_23 = arith.constant dense<0.000000e+00> : vector<16x16xf32>
    %45 = tpu.matmul %42, %43, %cst_23 {dimension_numbers = #tpu.dot_dimension_numbers<[1], [1], [0], [0], [0, 0, 1, 0], [], []>} : vector<16x8xf32>, vector<16x8xf32>, vector<16x16xf32> -> vector<16x16xf32>
    %cst_24 = arith.constant dense<0xFF800000> : vector<16xf32>
    %46 = vector.multi_reduction <maximumf>, %45, %cst_24 [1] : vector<16x16xf32> to vector<16xf32>
    %47 = vector.shape_cast %46 : vector<16xf32> to vector<16x1xf32>
    %48 = vector.broadcast %47 : vector<16x1xf32> to vector<16x16xf32>
    %49 = arith.subf %45, %48 : vector<16x16xf32>
    %50 = math.exp %49 : vector<16x16xf32>
    %cst_25 = arith.constant dense<0.000000e+00> : vector<16xf32>
    %51 = vector.multi_reduction <add>, %50, %cst_25 [1] : vector<16x16xf32> to vector<16xf32>
    %52 = vector.shape_cast %51 : vector<16xf32> to vector<16x1xf32>
    %53 = tpu.reciprocal %52 {approx = true} : vector<16x1xf32> -> vector<16x1xf32>
    %54 = vector.broadcast %53 : vector<16x1xf32> to vector<16x16xf32>
    %55 = arith.mulf %50, %54 : vector<16x16xf32>
    %cst_26 = arith.constant dense<0.000000e+00> : vector<16x8xf32>
    %56 = tpu.matmul %55, %44, %cst_26 {dimension_numbers = #tpu.dot_dimension_numbers<[1], [0], [0], [1], [0, 0, 1, 1], [], []>} : vector<16x16xf32>, vector<16x8xf32>, vector<16x8xf32> -> vector<16x8xf32>
    %c0_27 = arith.constant 0 : index
    %c16_28 = arith.constant 16 : index
    %57 = vector.load %arg9[%c0_27, %c16_28] : memref<16x64xf32, #tpu.memory_space<vmem>>, vector<16x8xf32>
    tpu.vector_store %arg9[%c0_27, %c16_28], %56 {strides = array<i32>} : memref<16x64xf32, #tpu.memory_space<vmem>>, vector<16x8xf32>,
    %58 = vector.extract_strided_slice %9 {offsets = [0, 24], sizes = [16, 8], strides = [1, 1]} : vector<16x64xf32> to vector<16x8xf32>
    %c0_29 = arith.constant 0 : index
    %c24 = arith.constant 24 : index
    %59 = vector.load %arg8[%c0_29, %c24] : memref<16x128xf32, #tpu.memory_space<vmem>>, vector<16x8xf32>
    %c0_30 = arith.constant 0 : index
    %c88 = arith.constant 88 : index
    %60 = vector.load %arg8[%c0_30, %c88] : memref<16x128xf32, #tpu.memory_space<vmem>>, vector<16x8xf32>
    %cst_31 = arith.constant dense<0.000000e+00> : vector<16x16xf32>
    %61 = tpu.matmul %58, %59, %cst_31 {dimension_numbers = #tpu.dot_dimension_numbers<[1], [1], [0], [0], [0, 0, 1, 0], [], []>} : vector<16x8xf32>, vector<16x8xf32>, vector<16x16xf32> -> vector<16x16xf32>
    %cst_32 = arith.constant dense<0xFF800000> : vector<16xf32>
    %62 = vector.multi_reduction <maximumf>, %61, %cst_32 [1] : vector<16x16xf32> to vector<16xf32>
    %63 = vector.shape_cast %62 : vector<16xf32> to vector<16x1xf32>
    %64 = vector.broadcast %63 : vector<16x1xf32> to vector<16x16xf32>
    %65 = arith.subf %61, %64 : vector<16x16xf32>
    %66 = math.exp %65 : vector<16x16xf32>
    %cst_33 = arith.constant dense<0.000000e+00> : vector<16xf32>
    %67 = vector.multi_reduction <add>, %66, %cst_33 [1] : vector<16x16xf32> to vector<16xf32>
    %68 = vector.shape_cast %67 : vector<16xf32> to vector<16x1xf32>
    %69 = tpu.reciprocal %68 {approx = true} : vector<16x1xf32> -> vector<16x1xf32>
    %70 = vector.broadcast %69 : vector<16x1xf32> to vector<16x16xf32>
    %71 = arith.mulf %66, %70 : vector<16x16xf32>
    %cst_34 = arith.constant dense<0.000000e+00> : vector<16x8xf32>
    %72 = tpu.matmul %71, %60, %cst_34 {dimension_numbers = #tpu.dot_dimension_numbers<[1], [0], [0], [1], [0, 0, 1, 1], [], []>} : vector<16x16xf32>, vector<16x8xf32>, vector<16x8xf32> -> vector<16x8xf32>
    %c0_35 = arith.constant 0 : index
    %c24_36 = arith.constant 24 : index
    %73 = vector.load %arg9[%c0_35, %c24_36] : memref<16x64xf32, #tpu.memory_space<vmem>>, vector<16x8xf32>
    tpu.vector_store %arg9[%c0_35, %c24_36], %72 {strides = array<i32>} : memref<16x64xf32, #tpu.memory_space<vmem>>, vector<16x8xf32>,
    %74 = vector.extract_strided_slice %9 {offsets = [0, 32], sizes = [16, 8], strides = [1, 1]} : vector<16x64xf32> to vector<16x8xf32>
    %c0_37 = arith.constant 0 : index
    %c32 = arith.constant 32 : index
    %75 = vector.load %arg8[%c0_37, %c32] : memref<16x128xf32, #tpu.memory_space<vmem>>, vector<16x8xf32>
    %c0_38 = arith.constant 0 : index
    %c96 = arith.constant 96 : index
    %76 = vector.load %arg8[%c0_38, %c96] : memref<16x128xf32, #tpu.memory_space<vmem>>, vector<16x8xf32>
    %cst_39 = arith.constant dense<0.000000e+00> : vector<16x16xf32>
    %77 = tpu.matmul %74, %75, %cst_39 {dimension_numbers = #tpu.dot_dimension_numbers<[1], [1], [0], [0], [0, 0, 1, 0], [], []>} : vector<16x8xf32>, vector<16x8xf32>, vector<16x16xf32> -> vector<16x16xf32>
    %cst_40 = arith.constant dense<0xFF800000> : vector<16xf32>
    %78 = vector.multi_reduction <maximumf>, %77, %cst_40 [1] : vector<16x16xf32> to vector<16xf32>
    %79 = vector.shape_cast %78 : vector<16xf32> to vector<16x1xf32>
    %80 = vector.broadcast %79 : vector<16x1xf32> to vector<16x16xf32>
    %81 = arith.subf %77, %80 : vector<16x16xf32>
    %82 = math.exp %81 : vector<16x16xf32>
    %cst_41 = arith.constant dense<0.000000e+00> : vector<16xf32>
    %83 = vector.multi_reduction <add>, %82, %cst_41 [1] : vector<16x16xf32> to vector<16xf32>
    %84 = vector.shape_cast %83 : vector<16xf32> to vector<16x1xf32>
    %85 = tpu.reciprocal %84 {approx = true} : vector<16x1xf32> -> vector<16x1xf32>
    %86 = vector.broadcast %85 : vector<16x1xf32> to vector<16x16xf32>
    %87 = arith.mulf %82, %86 : vector<16x16xf32>
    %cst_42 = arith.constant dense<0.000000e+00> : vector<16x8xf32>
    %88 = tpu.matmul %87, %76, %cst_42 {dimension_numbers = #tpu.dot_dimension_numbers<[1], [0], [0], [1], [0, 0, 1, 1], [], []>} : vector<16x16xf32>, vector<16x8xf32>, vector<16x8xf32> -> vector<16x8xf32>
    %c0_43 = arith.constant 0 : index
    %c32_44 = arith.constant 32 : index
    %89 = vector.load %arg9[%c0_43, %c32_44] : memref<16x64xf32, #tpu.memory_space<vmem>>, vector<16x8xf32>
    tpu.vector_store %arg9[%c0_43, %c32_44], %88 {strides = array<i32>} : memref<16x64xf32, #tpu.memory_space<vmem>>, vector<16x8xf32>,
    %90 = vector.extract_strided_slice %9 {offsets = [0, 40], sizes = [16, 8], strides = [1, 1]} : vector<16x64xf32> to vector<16x8xf32>
    %c0_45 = arith.constant 0 : index
    %c40 = arith.constant 40 : index
    %91 = vector.load %arg8[%c0_45, %c40] : memref<16x128xf32, #tpu.memory_space<vmem>>, vector<16x8xf32>
    %c0_46 = arith.constant 0 : index
    %c104 = arith.constant 104 : index
    %92 = vector.load %arg8[%c0_46, %c104] : memref<16x128xf32, #tpu.memory_space<vmem>>, vector<16x8xf32>
    %cst_47 = arith.constant dense<0.000000e+00> : vector<16x16xf32>
    %93 = tpu.matmul %90, %91, %cst_47 {dimension_numbers = #tpu.dot_dimension_numbers<[1], [1], [0], [0], [0, 0, 1, 0], [], []>} : vector<16x8xf32>, vector<16x8xf32>, vector<16x16xf32> -> vector<16x16xf32>
    %cst_48 = arith.constant dense<0xFF800000> : vector<16xf32>
    %94 = vector.multi_reduction <maximumf>, %93, %cst_48 [1] : vector<16x16xf32> to vector<16xf32>
    %95 = vector.shape_cast %94 : vector<16xf32> to vector<16x1xf32>
    %96 = vector.broadcast %95 : vector<16x1xf32> to vector<16x16xf32>
    %97 = arith.subf %93, %96 : vector<16x16xf32>
    %98 = math.exp %97 : vector<16x16xf32>
    %cst_49 = arith.constant dense<0.000000e+00> : vector<16xf32>
    %99 = vector.multi_reduction <add>, %98, %cst_49 [1] : vector<16x16xf32> to vector<16xf32>
    %100 = vector.shape_cast %99 : vector<16xf32> to vector<16x1xf32>
    %101 = tpu.reciprocal %100 {approx = true} : vector<16x1xf32> -> vector<16x1xf32>
    %102 = vector.broadcast %101 : vector<16x1xf32> to vector<16x16xf32>
    %103 = arith.mulf %98, %102 : vector<16x16xf32>
    %cst_50 = arith.constant dense<0.000000e+00> : vector<16x8xf32>
    %104 = tpu.matmul %103, %92, %cst_50 {dimension_numbers = #tpu.dot_dimension_numbers<[1], [0], [0], [1], [0, 0, 1, 1], [], []>} : vector<16x16xf32>, vector<16x8xf32>, vector<16x8xf32> -> vector<16x8xf32>
    %c0_51 = arith.constant 0 : index
    %c40_52 = arith.constant 40 : index
    %105 = vector.load %arg9[%c0_51, %c40_52] : memref<16x64xf32, #tpu.memory_space<vmem>>, vector<16x8xf32>
    tpu.vector_store %arg9[%c0_51, %c40_52], %104 {strides = array<i32>} : memref<16x64xf32, #tpu.memory_space<vmem>>, vector<16x8xf32>,
    %106 = vector.extract_strided_slice %9 {offsets = [0, 48], sizes = [16, 8], strides = [1, 1]} : vector<16x64xf32> to vector<16x8xf32>
    %c0_53 = arith.constant 0 : index
    %c48 = arith.constant 48 : index
    %107 = vector.load %arg8[%c0_53, %c48] : memref<16x128xf32, #tpu.memory_space<vmem>>, vector<16x8xf32>
    %c0_54 = arith.constant 0 : index
    %c112 = arith.constant 112 : index
    %108 = vector.load %arg8[%c0_54, %c112] : memref<16x128xf32, #tpu.memory_space<vmem>>, vector<16x8xf32>
    %cst_55 = arith.constant dense<0.000000e+00> : vector<16x16xf32>
    %109 = tpu.matmul %106, %107, %cst_55 {dimension_numbers = #tpu.dot_dimension_numbers<[1], [1], [0], [0], [0, 0, 1, 0], [], []>} : vector<16x8xf32>, vector<16x8xf32>, vector<16x16xf32> -> vector<16x16xf32>
    %cst_56 = arith.constant dense<0xFF800000> : vector<16xf32>
    %110 = vector.multi_reduction <maximumf>, %109, %cst_56 [1] : vector<16x16xf32> to vector<16xf32>
    %111 = vector.shape_cast %110 : vector<16xf32> to vector<16x1xf32>
    %112 = vector.broadcast %111 : vector<16x1xf32> to vector<16x16xf32>
    %113 = arith.subf %109, %112 : vector<16x16xf32>
    %114 = math.exp %113 : vector<16x16xf32>
    %cst_57 = arith.constant dense<0.000000e+00> : vector<16xf32>
    %115 = vector.multi_reduction <add>, %114, %cst_57 [1] : vector<16x16xf32> to vector<16xf32>
    %116 = vector.shape_cast %115 : vector<16xf32> to vector<16x1xf32>
    %117 = tpu.reciprocal %116 {approx = true} : vector<16x1xf32> -> vector<16x1xf32>
    %118 = vector.broadcast %117 : vector<16x1xf32> to vector<16x16xf32>
    %119 = arith.mulf %114, %118 : vector<16x16xf32>
    %cst_58 = arith.constant dense<0.000000e+00> : vector<16x8xf32>
    %120 = tpu.matmul %119, %108, %cst_58 {dimension_numbers = #tpu.dot_dimension_numbers<[1], [0], [0], [1], [0, 0, 1, 1], [], []>} : vector<16x16xf32>, vector<16x8xf32>, vector<16x8xf32> -> vector<16x8xf32>
    %c0_59 = arith.constant 0 : index
    %c48_60 = arith.constant 48 : index
    %121 = vector.load %arg9[%c0_59, %c48_60] : memref<16x64xf32, #tpu.memory_space<vmem>>, vector<16x8xf32>
    tpu.vector_store %arg9[%c0_59, %c48_60], %120 {strides = array<i32>} : memref<16x64xf32, #tpu.memory_space<vmem>>, vector<16x8xf32>,
    %122 = vector.extract_strided_slice %9 {offsets = [0, 56], sizes = [16, 8], strides = [1, 1]} : vector<16x64xf32> to vector<16x8xf32>
    %c0_61 = arith.constant 0 : index
    %c56 = arith.constant 56 : index
    %123 = vector.load %arg8[%c0_61, %c56] : memref<16x128xf32, #tpu.memory_space<vmem>>, vector<16x8xf32>
    %c0_62 = arith.constant 0 : index
    %c120 = arith.constant 120 : index
    %124 = vector.load %arg8[%c0_62, %c120] : memref<16x128xf32, #tpu.memory_space<vmem>>, vector<16x8xf32>
    %cst_63 = arith.constant dense<0.000000e+00> : vector<16x16xf32>
    %125 = tpu.matmul %122, %123, %cst_63 {dimension_numbers = #tpu.dot_dimension_numbers<[1], [1], [0], [0], [0, 0, 1, 0], [], []>} : vector<16x8xf32>, vector<16x8xf32>, vector<16x16xf32> -> vector<16x16xf32>
    %cst_64 = arith.constant dense<0xFF800000> : vector<16xf32>
    %126 = vector.multi_reduction <maximumf>, %125, %cst_64 [1] : vector<16x16xf32> to vector<16xf32>
    %127 = vector.shape_cast %126 : vector<16xf32> to vector<16x1xf32>
    %128 = vector.broadcast %127 : vector<16x1xf32> to vector<16x16xf32>
    %129 = arith.subf %125, %128 : vector<16x16xf32>
    %130 = math.exp %129 : vector<16x16xf32>
    %cst_65 = arith.constant dense<0.000000e+00> : vector<16xf32>
    %131 = vector.multi_reduction <add>, %130, %cst_65 [1] : vector<16x16xf32> to vector<16xf32>
    %132 = vector.shape_cast %131 : vector<16xf32> to vector<16x1xf32>
    %133 = tpu.reciprocal %132 {approx = true} : vector<16x1xf32> -> vector<16x1xf32>
    %134 = vector.broadcast %133 : vector<16x1xf32> to vector<16x16xf32>
    %135 = arith.mulf %130, %134 : vector<16x16xf32>
    %cst_66 = arith.constant dense<0.000000e+00> : vector<16x8xf32>
    %136 = tpu.matmul %135, %124, %cst_66 {dimension_numbers = #tpu.dot_dimension_numbers<[1], [0], [0], [1], [0, 0, 1, 1], [], []>} : vector<16x16xf32>, vector<16x8xf32>, vector<16x8xf32> -> vector<16x8xf32>
    %c0_67 = arith.constant 0 : index
    %c56_68 = arith.constant 56 : index
    %137 = vector.load %arg9[%c0_67, %c56_68] : memref<16x64xf32, #tpu.memory_space<vmem>>, vector<16x8xf32>
    tpu.vector_store %arg9[%c0_67, %c56_68], %136 {strides = array<i32>} : memref<16x64xf32, #tpu.memory_space<vmem>>, vector<16x8xf32>,
    %c0_69 = arith.constant 0 : index
    %c0_70 = arith.constant 0 : index
    %138 = vector.load %arg9[%c0_69, %c0_70] : memref<16x64xf32, #tpu.memory_space<vmem>>, vector<16x64xf32>
    %c0_71 = arith.constant 0 : index
    %c0_72 = arith.constant 0 : index
    %139 = vector.load %arg5[%c0_71, %c0_72] : memref<64x64xf32, #tpu.memory_space<vmem>>, vector<64x64xf32>
    %cst_73 = arith.constant dense<0.000000e+00> : vector<16x64xf32>
    %140 = tpu.matmul %138, %139, %cst_73 {dimension_numbers = #tpu.dot_dimension_numbers<[1], [0], [0], [1], [0, 0, 1, 1], [], []>} : vector<16x64xf32>, vector<64x64xf32>, vector<16x64xf32> -> vector<16x64xf32>
    %c0_74 = arith.constant 0 : index
    %c0_75 = arith.constant 0 : index
    %141 = vector.load %arg6[%c0_74, %c0_75] : memref<1x64xf32, #tpu.memory_space<vmem>>, vector<1x64xf32>
    %142 = vector.broadcast %141 : vector<1x64xf32> to vector<16x64xf32>
    %143 = arith.addf %140, %142 : vector<16x64xf32>
    %c0_76 = arith.constant 0 : index
    %c0_77 = arith.constant 0 : index
    %c0_78 = arith.constant 0 : index
    %144 = vector.load %arg7[%c0_76, %c0_77, %c0_78] : memref<1x16x64xf32, #tpu.memory_space<vmem>>, vector<1x16x64xf32>
    %145 = vector.shape_cast %144 : vector<1x16x64xf32> to vector<16x64xf32>
    %146 = vector.shape_cast %143 : vector<16x64xf32> to vector<1x16x64xf32>
    tpu.vector_store %arg7[%c0_76, %c0_77, %c0_78], %146 {strides = array<i32>} : memref<1x16x64xf32, #tpu.memory_space<vmem>>, vector<1x16x64xf32>,
    return
  }
  func.func @transform_0(%arg0: i32, %arg1: i32) -> (i32, i32, i32) {
    %c0_i32 = arith.constant 0 : i32
    %c0_i32_0 = arith.constant 0 : i32
    %c0_i32_1 = arith.constant 0 : i32
    return %arg0, %c0_i32, %c0_i32_0 : i32, i32, i32
  }
  func.func @transform_1(%arg0: i32, %arg1: i32) -> (i32, i32) {
    %c0_i32 = arith.constant 0 : i32
    %c0_i32_0 = arith.constant 0 : i32
    %c0_i32_1 = arith.constant 0 : i32
    return %c0_i32, %c0_i32_0 : i32, i32
  }
  func.func @transform_2(%arg0: i32, %arg1: i32) -> (i32, i32) {
    %c0_i32 = arith.constant 0 : i32
    %c0_i32_0 = arith.constant 0 : i32
    %c0_i32_1 = arith.constant 0 : i32
    return %c0_i32, %c0_i32_0 : i32, i32
  }
  func.func @transform_3(%arg0: i32, %arg1: i32) -> (i32, i32) {
    %c0_i32 = arith.constant 0 : i32
    %c0_i32_0 = arith.constant 0 : i32
    %c0_i32_1 = arith.constant 0 : i32
    return %c0_i32, %c0_i32_0 : i32, i32
  }
  func.func @transform_4(%arg0: i32, %arg1: i32) -> (i32, i32) {
    %c0_i32 = arith.constant 0 : i32
    %c0_i32_0 = arith.constant 0 : i32
    %c0_i32_1 = arith.constant 0 : i32
    return %c0_i32, %c0_i32_0 : i32, i32
  }
  func.func @transform_5(%arg0: i32, %arg1: i32) -> (i32, i32, i32) {
    %c0_i32 = arith.constant 0 : i32
    %c0_i32_0 = arith.constant 0 : i32
    return %arg0, %arg1, %c0_i32 : i32, i32, i32
  }
}

module attributes {stable_mosaic.version = 11 : i64} {
  func.func @_mha_kernel(%arg0: i32, %arg1: i32, %arg2: memref<1x16x64xf32, #tpu.memory_space<vmem>>, %arg3: memref<64x64xf32, #tpu.memory_space<vmem>>, %arg4: memref<64x128xf32, #tpu.memory_space<vmem>>, %arg5: memref<64x64xf32, #tpu.memory_space<vmem>>, %arg6: memref<1x64xf32, #tpu.memory_space<vmem>>, %arg7: memref<1x16x64xf32, #tpu.memory_space<vmem>>, %arg8: memref<16x128xf32, #tpu.memory_space<vmem>>, %arg9: memref<16x64xf32, #tpu.memory_space<vmem>>) attributes {dimension_semantics = [#tpu.dimension_semantics<parallel>, #tpu.dimension_semantics<arbitrary>], iteration_bounds = array<i64: 2, 1>, scalar_prefetch = 0 : i64, scratch_operands = 2 : i64, tpu.core_type = #tpu.core_type<tc>, window_params = [{transform_indices = @transform_0, window_bounds = array<i64: 1, 16, 64>}, {pipeline_mode = #tpu.pipeline_mode<synchronous>, transform_indices = @transform_1, window_bounds = array<i64: 64, 64>}, {pipeline_mode = #tpu.pipeline_mode<synchronous>, transform_indices = @transform_2, window_bounds = array<i64: 64, 128>}, {pipeline_mode = #tpu.pipeline_mode<synchronous>, transform_indices = @transform_3, window_bounds = array<i64: 64, 64>}, {pipeline_mode = #tpu.pipeline_mode<synchronous>, transform_indices = @transform_4, window_bounds = array<i64: 1, 64>}, {transform_indices = @transform_5, window_bounds = array<i64: 1, 16, 64>}]} {
    %c0_i32 = arith.constant 0 : i32
    %0 = arith.cmpi eq, %arg1, %c0_i32 : i32
    %1 = arith.extui %0 : i1 to i32
    %c0_i32_0 = arith.constant 0 : i32
    %2 = arith.cmpi ne, %1, %c0_i32_0 : i32
    scf.if %2 {
      %c0_79 = arith.constant 0 : index
      %c0_80 = arith.constant 0 : index
      %c0_81 = arith.constant 0 : index
      %147 = vector.load %arg2[%c0_79, %c0_80, %c0_81] : memref<1x16x64xf32, #tpu.memory_space<vmem>>, vector<1x16x64xf32>
      %148 = vector.shape_cast %147 : vector<1x16x64xf32> to vector<16x64xf32>
      %c0_82 = arith.constant 0 : index
      %c0_83 = arith.constant 0 : index
      %149 = vector.load %arg4[%c0_82, %c0_83] : memref<64x128xf32, #tpu.memory_space<vmem>>, vector<64x128xf32>
      %cst_84 = arith.constant dense<0.000000e+00> : vector<16x128xf32>
      %150 = tpu.matmul %148, %149, %cst_84 {dimension_numbers = #tpu.dot_dimension_numbers<[1], [0], [0], [1], [0, 0, 1, 1], [], []>} : vector<16x64xf32>, vector<64x128xf32>, vector<16x128xf32> -> vector<16x128xf32>
      %c0_85 = arith.constant 0 : index
      %c0_86 = arith.constant 0 : index
      %151 = vector.load %arg8[%c0_85, %c0_86] : memref<16x128xf32, #tpu.memory_space<vmem>>, vector<16x128xf32>
      tpu.vector_store %arg8[%c0_85, %c0_86], %150 {strides = array<i32>} : memref<16x128xf32, #tpu.memory_space<vmem>>, vector<16x128xf32>,
    } else {
    }
    %c16_i32 = arith.constant 16 : i32
    %3 = arith.muli %arg1, %c16_i32 : i32
    %4 = tpu.assume_multiple %3, 16 : i32
    %c0 = arith.constant 0 : index
    %5 = arith.index_cast %4 : i32 to index
    %c0_1 = arith.constant 0 : index
    %6 = vector.load %arg2[%c0, %5, %c0_1] : memref<1x16x64xf32, #tpu.memory_space<vmem>>, vector<1x16x64xf32>
    %7 = vector.shape_cast %6 : vector<1x16x64xf32> to vector<16x64xf32>
    %c0_2 = arith.constant 0 : index
    %c0_3 = arith.constant 0 : index
    %8 = vector.load %arg3[%c0_2, %c0_3] : memref<64x64xf32, #tpu.memory_space<vmem>>, vector<64x64xf32>
    %cst = arith.constant dense<0.000000e+00> : vector<16x64xf32>
    %9 = tpu.matmul %7, %8, %cst {dimension_numbers = #tpu.dot_dimension_numbers<[1], [0], [0], [1], [0, 0, 1, 1], [], []>} : vector<16x64xf32>, vector<64x64xf32>, vector<16x64xf32> -> vector<16x64xf32>
    %10 = vector.extract_strided_slice %9 {offsets = [0, 0], sizes = [16, 8], strides = [1, 1]} : vector<16x64xf32> to vector<16x8xf32>
    %c0_4 = arith.constant 0 : index
    %c0_5 = arith.constant 0 : index
    %11 = vector.load %arg8[%c0_4, %c0_5] : memref<16x128xf32, #tpu.memory_space<vmem>>, vector<16x8xf32>
    %c0_6 = arith.constant 0 : index
    %c64 = arith.constant 64 : index
    %12 = vector.load %arg8[%c0_6, %c64] : memref<16x128xf32, #tpu.memory_space<vmem>>, vector<16x8xf32>
    %cst_7 = arith.constant dense<0.000000e+00> : vector<16x16xf32>
    %13 = tpu.matmul %10, %11, %cst_7 {dimension_numbers = #tpu.dot_dimension_numbers<[1], [1], [0], [0], [0, 0, 1, 0], [], []>} : vector<16x8xf32>, vector<16x8xf32>, vector<16x16xf32> -> vector<16x16xf32>
    %cst_8 = arith.constant dense<0xFF800000> : vector<16xf32>
    %14 = vector.multi_reduction <maximumf>, %13, %cst_8 [1] : vector<16x16xf32> to vector<16xf32>
    %15 = vector.shape_cast %14 : vector<16xf32> to vector<16x1xf32>
    %16 = vector.broadcast %15 : vector<16x1xf32> to vector<16x16xf32>
    %17 = arith.subf %13, %16 : vector<16x16xf32>
    %18 = math.exp %17 : vector<16x16xf32>
    %cst_9 = arith.constant dense<0.000000e+00> : vector<16xf32>
    %19 = vector.multi_reduction <add>, %18, %cst_9 [1] : vector<16x16xf32> to vector<16xf32>
    %20 = vector.shape_cast %19 : vector<16xf32> to vector<16x1xf32>
    %21 = tpu.reciprocal %20 {approx = true} : vector<16x1xf32> -> vector<16x1xf32>
    %22 = vector.broadcast %21 : vector<16x1xf32> to vector<16x16xf32>
    %23 = arith.mulf %18, %22 : vector<16x16xf32>
    %cst_10 = arith.constant dense<0.000000e+00> : vector<16x8xf32>
    %24 = tpu.matmul %23, %12, %cst_10 {dimension_numbers = #tpu.dot_dimension_numbers<[1], [0], [0], [1], [0, 0, 1, 1], [], []>} : vector<16x16xf32>, vector<16x8xf32>, vector<16x8xf32> -> vector<16x8xf32>
    %c0_11 = arith.constant 0 : index
    %c0_12 = arith.constant 0 : index
    %25 = vector.load %arg9[%c0_11, %c0_12] : memref<16x64xf32, #tpu.memory_space<vmem>>, vector<16x8xf32>
    tpu.vector_store %arg9[%c0_11, %c0_12], %24 {strides = array<i32>} : memref<16x64xf32, #tpu.memory_space<vmem>>, vector<16x8xf32>,
    %26 = vector.extract_strided_slice %9 {offsets = [0, 8], sizes = [16, 8], strides = [1, 1]} : vector<16x64xf32> to vector<16x8xf32>
    %c0_13 = arith.constant 0 : index
    %c8 = arith.constant 8 : index
    %27 = vector.load %arg8[%c0_13, %c8] : memref<16x128xf32, #tpu.memory_space<vmem>>, vector<16x8xf32>
    %c0_14 = arith.constant 0 : index
    %c72 = arith.constant 72 : index
    %28 = vector.load %arg8[%c0_14, %c72] : memref<16x128xf32, #tpu.memory_space<vmem>>, vector<16x8xf32>
    %cst_15 = arith.constant dense<0.000000e+00> : vector<16x16xf32>
    %29 = tpu.matmul %26, %27, %cst_15 {dimension_numbers = #tpu.dot_dimension_numbers<[1], [1], [0], [0], [0, 0, 1, 0], [], []>} : vector<16x8xf32>, vector<16x8xf32>, vector<16x16xf32> -> vector<16x16xf32>
    %cst_16 = arith.constant dense<0xFF800000> : vector<16xf32>
    %30 = vector.multi_reduction <maximumf>, %29, %cst_16 [1] : vector<16x16xf32> to vector<16xf32>
    %31 = vector.shape_cast %30 : vector<16xf32> to vector<16x1xf32>
    %32 = vector.broadcast %31 : vector<16x1xf32> to vector<16x16xf32>
    %33 = arith.subf %29, %32 : vector<16x16xf32>
    %34 = math.exp %33 : vector<16x16xf32>
    %cst_17 = arith.constant dense<0.000000e+00> : vector<16xf32>
    %35 = vector.multi_reduction <add>, %34, %cst_17 [1] : vector<16x16xf32> to vector<16xf32>
    %36 = vector.shape_cast %35 : vector<16xf32> to vector<16x1xf32>
    %37 = tpu.reciprocal %36 {approx = true} : vector<16x1xf32> -> vector<16x1xf32>
    %38 = vector.broadcast %37 : vector<16x1xf32> to vector<16x16xf32>
    %39 = arith.mulf %34, %38 : vector<16x16xf32>
    %cst_18 = arith.constant dense<0.000000e+00> : vector<16x8xf32>
    %40 = tpu.matmul %39, %28, %cst_18 {dimension_numbers = #tpu.dot_dimension_numbers<[1], [0], [0], [1], [0, 0, 1, 1], [], []>} : vector<16x16xf32>, vector<16x8xf32>, vector<16x8xf32> -> vector<16x8xf32>
    %c0_19 = arith.constant 0 : index
    %c8_20 = arith.constant 8 : index
    %41 = vector.load %arg9[%c0_19, %c8_20] : memref<16x64xf32, #tpu.memory_space<vmem>>, vector<16x8xf32>
    tpu.vector_store %arg9[%c0_19, %c8_20], %40 {strides = array<i32>} : memref<16x64xf32, #tpu.memory_space<vmem>>, vector<16x8xf32>,
    %42 = vector.extract_strided_slice %9 {offsets = [0, 16], sizes = [16, 8], strides = [1, 1]} : vector<16x64xf32> to vector<16x8xf32>
    %c0_21 = arith.constant 0 : index
    %c16 = arith.constant 16 : index
    %43 = vector.load %arg8[%c0_21, %c16] : memref<16x128xf32, #tpu.memory_space<vmem>>, vector<16x8xf32>
    %c0_22 = arith.constant 0 : index
    %c80 = arith.constant 80 : index
    %44 = vector.load %arg8[%c0_22, %c80] : memref<16x128xf32, #tpu.memory_space<vmem>>, vector<16x8xf32>
    %cst_23 = arith.constant dense<0.000000e+00> : vector<16x16xf32>
    %45 = tpu.matmul %42, %43, %cst_23 {dimension_numbers = #tpu.dot_dimension_numbers<[1], [1], [0], [0], [0, 0, 1, 0], [], []>} : vector<16x8xf32>, vector<16x8xf32>, vector<16x16xf32> -> vector<16x16xf32>
    %cst_24 = arith.constant dense<0xFF800000> : vector<16xf32>
    %46 = vector.multi_reduction <maximumf>, %45, %cst_24 [1] : vector<16x16xf32> to vector<16xf32>
    %47 = vector.shape_cast %46 : vector<16xf32> to vector<16x1xf32>
    %48 = vector.broadcast %47 : vector<16x1xf32> to vector<16x16xf32>
    %49 = arith.subf %45, %48 : vector<16x16xf32>
    %50 = math.exp %49 : vector<16x16xf32>
    %cst_25 = arith.constant dense<0.000000e+00> : vector<16xf32>
    %51 = vector.multi_reduction <add>, %50, %cst_25 [1] : vector<16x16xf32> to vector<16xf32>
    %52 = vector.shape_cast %51 : vector<16xf32> to vector<16x1xf32>
    %53 = tpu.reciprocal %52 {approx = true} : vector<16x1xf32> -> vector<16x1xf32>
    %54 = vector.broadcast %53 : vector<16x1xf32> to vector<16x16xf32>
    %55 = arith.mulf %50, %54 : vector<16x16xf32>
    %cst_26 = arith.constant dense<0.000000e+00> : vector<16x8xf32>
    %56 = tpu.matmul %55, %44, %cst_26 {dimension_numbers = #tpu.dot_dimension_numbers<[1], [0], [0], [1], [0, 0, 1, 1], [], []>} : vector<16x16xf32>, vector<16x8xf32>, vector<16x8xf32> -> vector<16x8xf32>
    %c0_27 = arith.constant 0 : index
    %c16_28 = arith.constant 16 : index
    %57 = vector.load %arg9[%c0_27, %c16_28] : memref<16x64xf32, #tpu.memory_space<vmem>>, vector<16x8xf32>
    tpu.vector_store %arg9[%c0_27, %c16_28], %56 {strides = array<i32>} : memref<16x64xf32, #tpu.memory_space<vmem>>, vector<16x8xf32>,
    %58 = vector.extract_strided_slice %9 {offsets = [0, 24], sizes = [16, 8], strides = [1, 1]} : vector<16x64xf32> to vector<16x8xf32>
    %c0_29 = arith.constant 0 : index
    %c24 = arith.constant 24 : index
    %59 = vector.load %arg8[%c0_29, %c24] : memref<16x128xf32, #tpu.memory_space<vmem>>, vector<16x8xf32>
    %c0_30 = arith.constant 0 : index
    %c88 = arith.constant 88 : index
    %60 = vector.load %arg8[%c0_30, %c88] : memref<16x128xf32, #tpu.memory_space<vmem>>, vector<16x8xf32>
    %cst_31 = arith.constant dense<0.000000e+00> : vector<16x16xf32>
    %61 = tpu.matmul %58, %59, %cst_31 {dimension_numbers = #tpu.dot_dimension_numbers<[1], [1], [0], [0], [0, 0, 1, 0], [], []>} : vector<16x8xf32>, vector<16x8xf32>, vector<16x16xf32> -> vector<16x16xf32>
    %cst_32 = arith.constant dense<0xFF800000> : vector<16xf32>
    %62 = vector.multi_reduction <maximumf>, %61, %cst_32 [1] : vector<16x16xf32> to vector<16xf32>
    %63 = vector.shape_cast %62 : vector<16xf32> to vector<16x1xf32>
    %64 = vector.broadcast %63 : vector<16x1xf32> to vector<16x16xf32>
    %65 = arith.subf %61, %64 : vector<16x16xf32>
    %66 = math.exp %65 : vector<16x16xf32>
    %cst_33 = arith.constant dense<0.000000e+00> : vector<16xf32>
    %67 = vector.multi_reduction <add>, %66, %cst_33 [1] : vector<16x16xf32> to vector<16xf32>
    %68 = vector.shape_cast %67 : vector<16xf32> to vector<16x1xf32>
    %69 = tpu.reciprocal %68 {approx = true} : vector<16x1xf32> -> vector<16x1xf32>
    %70 = vector.broadcast %69 : vector<16x1xf32> to vector<16x16xf32>
    %71 = arith.mulf %66, %70 : vector<16x16xf32>
    %cst_34 = arith.constant dense<0.000000e+00> : vector<16x8xf32>
    %72 = tpu.matmul %71, %60, %cst_34 {dimension_numbers = #tpu.dot_dimension_numbers<[1], [0], [0], [1], [0, 0, 1, 1], [], []>} : vector<16x16xf32>, vector<16x8xf32>, vector<16x8xf32> -> vector<16x8xf32>
    %c0_35 = arith.constant 0 : index
    %c24_36 = arith.constant 24 : index
    %73 = vector.load %arg9[%c0_35, %c24_36] : memref<16x64xf32, #tpu.memory_space<vmem>>, vector<16x8xf32>
    tpu.vector_store %arg9[%c0_35, %c24_36], %72 {strides = array<i32>} : memref<16x64xf32, #tpu.memory_space<vmem>>, vector<16x8xf32>,
    %74 = vector.extract_strided_slice %9 {offsets = [0, 32], sizes = [16, 8], strides = [1, 1]} : vector<16x64xf32> to vector<16x8xf32>
    %c0_37 = arith.constant 0 : index
    %c32 = arith.constant 32 : index
    %75 = vector.load %arg8[%c0_37, %c32] : memref<16x128xf32, #tpu.memory_space<vmem>>, vector<16x8xf32>
    %c0_38 = arith.constant 0 : index
    %c96 = arith.constant 96 : index
    %76 = vector.load %arg8[%c0_38, %c96] : memref<16x128xf32, #tpu.memory_space<vmem>>, vector<16x8xf32>
    %cst_39 = arith.constant dense<0.000000e+00> : vector<16x16xf32>
    %77 = tpu.matmul %74, %75, %cst_39 {dimension_numbers = #tpu.dot_dimension_numbers<[1], [1], [0], [0], [0, 0, 1, 0], [], []>} : vector<16x8xf32>, vector<16x8xf32>, vector<16x16xf32> -> vector<16x16xf32>
    %cst_40 = arith.constant dense<0xFF800000> : vector<16xf32>
    %78 = vector.multi_reduction <maximumf>, %77, %cst_40 [1] : vector<16x16xf32> to vector<16xf32>
    %79 = vector.shape_cast %78 : vector<16xf32> to vector<16x1xf32>
    %80 = vector.broadcast %79 : vector<16x1xf32> to vector<16x16xf32>
    %81 = arith.subf %77, %80 : vector<16x16xf32>
    %82 = math.exp %81 : vector<16x16xf32>
    %cst_41 = arith.constant dense<0.000000e+00> : vector<16xf32>
    %83 = vector.multi_reduction <add>, %82, %cst_41 [1] : vector<16x16xf32> to vector<16xf32>
    %84 = vector.shape_cast %83 : vector<16xf32> to vector<16x1xf32>
    %85 = tpu.reciprocal %84 {approx = true} : vector<16x1xf32> -> vector<16x1xf32>
    %86 = vector.broadcast %85 : vector<16x1xf32> to vector<16x16xf32>
    %87 = arith.mulf %82, %86 : vector<16x16xf32>
    %cst_42 = arith.constant dense<0.000000e+00> : vector<16x8xf32>
    %88 = tpu.matmul %87, %76, %cst_42 {dimension_numbers = #tpu.dot_dimension_numbers<[1], [0], [0], [1], [0, 0, 1, 1], [], []>} : vector<16x16xf32>, vector<16x8xf32>, vector<16x8xf32> -> vector<16x8xf32>
    %c0_43 = arith.constant 0 : index
    %c32_44 = arith.constant 32 : index
    %89 = vector.load %arg9[%c0_43, %c32_44] : memref<16x64xf32, #tpu.memory_space<vmem>>, vector<16x8xf32>
    tpu.vector_store %arg9[%c0_43, %c32_44], %88 {strides = array<i32>} : memref<16x64xf32, #tpu.memory_space<vmem>>, vector<16x8xf32>,
    %90 = vector.extract_strided_slice %9 {offsets = [0, 40], sizes = [16, 8], strides = [1, 1]} : vector<16x64xf32> to vector<16x8xf32>
    %c0_45 = arith.constant 0 : index
    %c40 = arith.constant 40 : index
    %91 = vector.load %arg8[%c0_45, %c40] : memref<16x128xf32, #tpu.memory_space<vmem>>, vector<16x8xf32>
    %c0_46 = arith.constant 0 : index
    %c104 = arith.constant 104 : index
    %92 = vector.load %arg8[%c0_46, %c104] : memref<16x128xf32, #tpu.memory_space<vmem>>, vector<16x8xf32>
    %cst_47 = arith.constant dense<0.000000e+00> : vector<16x16xf32>
    %93 = tpu.matmul %90, %91, %cst_47 {dimension_numbers = #tpu.dot_dimension_numbers<[1], [1], [0], [0], [0, 0, 1, 0], [], []>} : vector<16x8xf32>, vector<16x8xf32>, vector<16x16xf32> -> vector<16x16xf32>
    %cst_48 = arith.constant dense<0xFF800000> : vector<16xf32>
    %94 = vector.multi_reduction <maximumf>, %93, %cst_48 [1] : vector<16x16xf32> to vector<16xf32>
    %95 = vector.shape_cast %94 : vector<16xf32> to vector<16x1xf32>
    %96 = vector.broadcast %95 : vector<16x1xf32> to vector<16x16xf32>
    %97 = arith.subf %93, %96 : vector<16x16xf32>
    %98 = math.exp %97 : vector<16x16xf32>
    %cst_49 = arith.constant dense<0.000000e+00> : vector<16xf32>
    %99 = vector.multi_reduction <add>, %98, %cst_49 [1] : vector<16x16xf32> to vector<16xf32>
    %100 = vector.shape_cast %99 : vector<16xf32> to vector<16x1xf32>
    %101 = tpu.reciprocal %100 {approx = true} : vector<16x1xf32> -> vector<16x1xf32>
    %102 = vector.broadcast %101 : vector<16x1xf32> to vector<16x16xf32>
    %103 = arith.mulf %98, %102 : vector<16x16xf32>
    %cst_50 = arith.constant dense<0.000000e+00> : vector<16x8xf32>
    %104 = tpu.matmul %103, %92, %cst_50 {dimension_numbers = #tpu.dot_dimension_numbers<[1], [0], [0], [1], [0, 0, 1, 1], [], []>} : vector<16x16xf32>, vector<16x8xf32>, vector<16x8xf32> -> vector<16x8xf32>
    %c0_51 = arith.constant 0 : index
    %c40_52 = arith.constant 40 : index
    %105 = vector.load %arg9[%c0_51, %c40_52] : memref<16x64xf32, #tpu.memory_space<vmem>>, vector<16x8xf32>
    tpu.vector_store %arg9[%c0_51, %c40_52], %104 {strides = array<i32>} : memref<16x64xf32, #tpu.memory_space<vmem>>, vector<16x8xf32>,
    %106 = vector.extract_strided_slice %9 {offsets = [0, 48], sizes = [16, 8], strides = [1, 1]} : vector<16x64xf32> to vector<16x8xf32>
    %c0_53 = arith.constant 0 : index
    %c48 = arith.constant 48 : index
    %107 = vector.load %arg8[%c0_53, %c48] : memref<16x128xf32, #tpu.memory_space<vmem>>, vector<16x8xf32>
    %c0_54 = arith.constant 0 : index
    %c112 = arith.constant 112 : index
    %108 = vector.load %arg8[%c0_54, %c112] : memref<16x128xf32, #tpu.memory_space<vmem>>, vector<16x8xf32>
    %cst_55 = arith.constant dense<0.000000e+00> : vector<16x16xf32>
    %109 = tpu.matmul %106, %107, %cst_55 {dimension_numbers = #tpu.dot_dimension_numbers<[1], [1], [0], [0], [0, 0, 1, 0], [], []>} : vector<16x8xf32>, vector<16x8xf32>, vector<16x16xf32> -> vector<16x16xf32>
    %cst_56 = arith.constant dense<0xFF800000> : vector<16xf32>
    %110 = vector.multi_reduction <maximumf>, %109, %cst_56 [1] : vector<16x16xf32> to vector<16xf32>
    %111 = vector.shape_cast %110 : vector<16xf32> to vector<16x1xf32>
    %112 = vector.broadcast %111 : vector<16x1xf32> to vector<16x16xf32>
    %113 = arith.subf %109, %112 : vector<16x16xf32>
    %114 = math.exp %113 : vector<16x16xf32>
    %cst_57 = arith.constant dense<0.000000e+00> : vector<16xf32>
    %115 = vector.multi_reduction <add>, %114, %cst_57 [1] : vector<16x16xf32> to vector<16xf32>
    %116 = vector.shape_cast %115 : vector<16xf32> to vector<16x1xf32>
    %117 = tpu.reciprocal %116 {approx = true} : vector<16x1xf32> -> vector<16x1xf32>
    %118 = vector.broadcast %117 : vector<16x1xf32> to vector<16x16xf32>
    %119 = arith.mulf %114, %118 : vector<16x16xf32>
    %cst_58 = arith.constant dense<0.000000e+00> : vector<16x8xf32>
    %120 = tpu.matmul %119, %108, %cst_58 {dimension_numbers = #tpu.dot_dimension_numbers<[1], [0], [0], [1], [0, 0, 1, 1], [], []>} : vector<16x16xf32>, vector<16x8xf32>, vector<16x8xf32> -> vector<16x8xf32>
    %c0_59 = arith.constant 0 : index
    %c48_60 = arith.constant 48 : index
    %121 = vector.load %arg9[%c0_59, %c48_60] : memref<16x64xf32, #tpu.memory_space<vmem>>, vector<16x8xf32>
    tpu.vector_store %arg9[%c0_59, %c48_60], %120 {strides = array<i32>} : memref<16x64xf32, #tpu.memory_space<vmem>>, vector<16x8xf32>,
    %122 = vector.extract_strided_slice %9 {offsets = [0, 56], sizes = [16, 8], strides = [1, 1]} : vector<16x64xf32> to vector<16x8xf32>
    %c0_61 = arith.constant 0 : index
    %c56 = arith.constant 56 : index
    %123 = vector.load %arg8[%c0_61, %c56] : memref<16x128xf32, #tpu.memory_space<vmem>>, vector<16x8xf32>
    %c0_62 = arith.constant 0 : index
    %c120 = arith.constant 120 : index
    %124 = vector.load %arg8[%c0_62, %c120] : memref<16x128xf32, #tpu.memory_space<vmem>>, vector<16x8xf32>
    %cst_63 = arith.constant dense<0.000000e+00> : vector<16x16xf32>
    %125 = tpu.matmul %122, %123, %cst_63 {dimension_numbers = #tpu.dot_dimension_numbers<[1], [1], [0], [0], [0, 0, 1, 0], [], []>} : vector<16x8xf32>, vector<16x8xf32>, vector<16x16xf32> -> vector<16x16xf32>
    %cst_64 = arith.constant dense<0xFF800000> : vector<16xf32>
    %126 = vector.multi_reduction <maximumf>, %125, %cst_64 [1] : vector<16x16xf32> to vector<16xf32>
    %127 = vector.shape_cast %126 : vector<16xf32> to vector<16x1xf32>
    %128 = vector.broadcast %127 : vector<16x1xf32> to vector<16x16xf32>
    %129 = arith.subf %125, %128 : vector<16x16xf32>
    %130 = math.exp %129 : vector<16x16xf32>
    %cst_65 = arith.constant dense<0.000000e+00> : vector<16xf32>
    %131 = vector.multi_reduction <add>, %130, %cst_65 [1] : vector<16x16xf32> to vector<16xf32>
    %132 = vector.shape_cast %131 : vector<16xf32> to vector<16x1xf32>
    %133 = tpu.reciprocal %132 {approx = true} : vector<16x1xf32> -> vector<16x1xf32>
    %134 = vector.broadcast %133 : vector<16x1xf32> to vector<16x16xf32>
    %135 = arith.mulf %130, %134 : vector<16x16xf32>
    %cst_66 = arith.constant dense<0.000000e+00> : vector<16x8xf32>
    %136 = tpu.matmul %135, %124, %cst_66 {dimension_numbers = #tpu.dot_dimension_numbers<[1], [0], [0], [1], [0, 0, 1, 1], [], []>} : vector<16x16xf32>, vector<16x8xf32>, vector<16x8xf32> -> vector<16x8xf32>
    %c0_67 = arith.constant 0 : index
    %c56_68 = arith.constant 56 : index
    %137 = vector.load %arg9[%c0_67, %c56_68] : memref<16x64xf32, #tpu.memory_space<vmem>>, vector<16x8xf32>
    tpu.vector_store %arg9[%c0_67, %c56_68], %136 {strides = array<i32>} : memref<16x64xf32, #tpu.memory_space<vmem>>, vector<16x8xf32>,
    %c0_69 = arith.constant 0 : index
    %c0_70 = arith.constant 0 : index
    %138 = vector.load %arg9[%c0_69, %c0_70] : memref<16x64xf32, #tpu.memory_space<vmem>>, vector<16x64xf32>
    %c0_71 = arith.constant 0 : index
    %c0_72 = arith.constant 0 : index
    %139 = vector.load %arg5[%c0_71, %c0_72] : memref<64x64xf32, #tpu.memory_space<vmem>>, vector<64x64xf32>
    %cst_73 = arith.constant dense<0.000000e+00> : vector<16x64xf32>
    %140 = tpu.matmul %138, %139, %cst_73 {dimension_numbers = #tpu.dot_dimension_numbers<[1], [0], [0], [1], [0, 0, 1, 1], [], []>} : vector<16x64xf32>, vector<64x64xf32>, vector<16x64xf32> -> vector<16x64xf32>
    %c0_74 = arith.constant 0 : index
    %c0_75 = arith.constant 0 : index
    %141 = vector.load %arg6[%c0_74, %c0_75] : memref<1x64xf32, #tpu.memory_space<vmem>>, vector<1x64xf32>
    %142 = vector.broadcast %141 : vector<1x64xf32> to vector<16x64xf32>
    %143 = arith.addf %140, %142 : vector<16x64xf32>
    %c0_76 = arith.constant 0 : index
    %c0_77 = arith.constant 0 : index
    %c0_78 = arith.constant 0 : index
    %144 = vector.load %arg7[%c0_76, %c0_77, %c0_78] : memref<1x16x64xf32, #tpu.memory_space<vmem>>, vector<1x16x64xf32>
    %145 = vector.shape_cast %144 : vector<1x16x64xf32> to vector<16x64xf32>
    %146 = vector.shape_cast %143 : vector<16x64xf32> to vector<1x16x64xf32>
    tpu.vector_store %arg7[%c0_76, %c0_77, %c0_78], %146 {strides = array<i32>} : memref<1x16x64xf32, #tpu.memory_space<vmem>>, vector<1x16x64xf32>,
    return
  }
  func.func @transform_0(%arg0: i32, %arg1: i32) -> (i32, i32, i32) {
    %c0_i32 = arith.constant 0 : i32
    %c0_i32_0 = arith.constant 0 : i32
    %c0_i32_1 = arith.constant 0 : i32
    return %arg0, %c0_i32, %c0_i32_0 : i32, i32, i32
  }
  func.func @transform_1(%arg0: i32, %arg1: i32) -> (i32, i32) {
    %c0_i32 = arith.constant 0 : i32
    %c0_i32_0 = arith.constant 0 : i32
    %c0_i32_1 = arith.constant 0 : i32
    return %c0_i32, %c0_i32_0 : i32, i32
  }
  func.func @transform_2(%arg0: i32, %arg1: i32) -> (i32, i32) {
    %c0_i32 = arith.constant 0 : i32
    %c0_i32_0 = arith.constant 0 : i32
    %c0_i32_1 = arith.constant 0 : i32
    return %c0_i32, %c0_i32_0 : i32, i32
  }
  func.func @transform_3(%arg0: i32, %arg1: i32) -> (i32, i32) {
    %c0_i32 = arith.constant 0 : i32
    %c0_i32_0 = arith.constant 0 : i32
    %c0_i32_1 = arith.constant 0 : i32
    return %c0_i32, %c0_i32_0 : i32, i32
  }
  func.func @transform_4(%arg0: i32, %arg1: i32) -> (i32, i32) {
    %c0_i32 = arith.constant 0 : i32
    %c0_i32_0 = arith.constant 0 : i32
    %c0_i32_1 = arith.constant 0 : i32
    return %c0_i32, %c0_i32_0 : i32, i32
  }
  func.func @transform_5(%arg0: i32, %arg1: i32) -> (i32, i32, i32) {
    %c0_i32 = arith.constant 0 : i32
    %c0_i32_0 = arith.constant 0 : i32
    return %arg0, %arg1, %c0_i32 : i32, i32, i32
  }
}

</mosaic_0001>

<llo_original>
// kernel: tpu_custom_call.1
$region0: #{tpu_custom_call.1}
  #allocation0 [shape = 'u32[]', space=smem, size = 0x4, offset = 0x4, fixed_abs, tag = 'smem constant byte address 0x4 - core index']
  #allocation1 [shape = 'u32[144,128]{1,0:T(1,128)}', space=vmem, size = 0x12000, scoped, tag = 'internal scratch']
  #allocation2 [shape = 'f32[16,128]{1,0:T(8,128)}', space=vmem, size = 0x2000, scoped, tag = 'scratch operand']
  #allocation3 [shape = 'f32[16,64]{1,0:T(8,128)}', space=vmem, size = 0x2000, scoped, tag = 'scratch operand']
  %s0 = inlined_call_operand.hbm [shape: f32[2,16,64], index: 0, kind: input, shape index: {}]
  %s1 = inlined_call_operand.hbm [shape: f32[64,64], index: 1, kind: input, shape index: {}]
  %s2 = inlined_call_operand.hbm [shape: f32[64,128], index: 2, kind: input, shape index: {}]
  %s3 = inlined_call_operand.hbm [shape: f32[64,64], index: 3, kind: input, shape index: {}]
  %s4 = inlined_call_operand.vmem [shape: f32[1,64], index: 4, kind: input, shape index: {}]
  %s5 = inlined_call_operand.hbm [shape: f32[2,16,64], index: 5, kind: output, shape index: {}]
  %s6 = sld [smem:[#allocation0]]
  $region73: #{tpu_custom_call.1} parent=0
    _
  %s8 = ssub.s32 1, %s6
  %s9 = scalar_select 0, %s8, %s6
  $region1: #{tpu_custom_call.1} parent=0
    #allocation4 [shape = 'u8[16384]{0}', space=vmem, size = 0x4000, scoped, tag = 'input window, operand 0']
    #allocation5 [shape = 's32[2]{0}', space=sflag, size = 0x8, scoped, tag = 'scoped memory for tpu_custom_call.1']
    #allocation6 [shape = 's32[2]{0}', space=sflag, size = 0x8, scoped, tag = 'scoped memory for tpu_custom_call.1']
    #allocation7 [shape = 'u8[32768]{0}', space=vmem, size = 0x8000, scoped, tag = 'input window, operand 1, single buffered']
    #allocation8 [shape = 's32[1]{0}', space=sflag, size = 0x4, scoped, tag = 'scoped memory for tpu_custom_call.1']
    #allocation9 [shape = 'u8[32768]{0}', space=vmem, size = 0x8000, scoped, tag = 'input window, operand 2, single buffered']
    #allocation10 [shape = 'u8[32768]{0}', space=vmem, size = 0x8000, scoped, tag = 'input window, operand 3, single buffered']
    #allocation11 [shape = 's32[1]{0}', space=sflag, size = 0x4, scoped, tag = 'scoped memory for tpu_custom_call.1']
    #allocation12 [shape = 'u8[16384]{0}', space=vmem, size = 0x4000, scoped, tag = 'output window, operand 0']
    %10 = vsyncpa [#allocation5], 0
    %s11 = scalar_lea.sflag [#allocation5], 1
    %12 = vsyncpa %s11, 0
    %13 = vsyncpa [#allocation8], 0
    %14 = vsyncpa [#allocation11], 0
    %15 = vsyncpa [#allocation6], 0
    %s16 = scalar_lea.sflag [#allocation6], 1
    %17 = vsyncpa %s16, 0
    loop: start=0, step=1, limit=4
    $region2: #{tpu_custom_call.1} parent=1 // loop_pre_header
      _
    $region3: #{tpu_custom_call.1} parent=1 // loop_header
      %s19 = sphi 0, %s23
      %p20 = scmp.ge.s32.totalorder %s19, 4
      %s26 = sphi 0, %s38
      %s27 = sphi 0, %s34
      %s28 = sphi 0, %s26
      %s29 = sphi 0, %s27
      %s30 = sphi 0, %s28
      %s31 = sphi 0, %s29
      %s41 = sphi 0, %s43
      %s44 = sphi 0, %s41
      %s45 = sphi 0, %s44
      %s61 = sphi 0, %s45
      %s65 = sphi 0, %s65
      %s67 = sphi 0, %s65
      %s68 = sphi 0, %s67
      %s82 = sphi 0, %s68
      %s86 = sphi 0, %s86
      %s88 = sphi 0, %s86
      %s89 = sphi 0, %s88
      %s103 = sphi 0, %s89
      %s107 = sphi 0, %s107
      %s109 = sphi 0, %s107
      %s110 = sphi 0, %s109
      %s124 = sphi 0, %s110
      %s128 = sphi 0, %s128
      %s130 = sphi 0, %s128
      %s131 = sphi 0, %s130
      %s145 = sphi 0, %s131
      %s153 = sphi 0, %s155
      %s156 = sphi 0, %s153
      %s157 = sphi 0, %s156
      %s173 = sphi 0, %s157
    $region4: #{tpu_custom_call.1} parent=1 // loop_header_branch
      %22 = sbr.rel (%p20) target = $region8
    $region5: #{tpu_custom_call.1} parent=1 // loop_body
      %s24 = ssub.s32 %s19, 1
      %s25 = ssub.s32 %s19, 2
      %s32 = sadd.s32 1, %s27
      %p33 = scmp.ge.s32.totalorder %s32, 1
      %s34 = scalar_select %p33, 0, %s32
      %s35 = sadd.s32 1, %s26
      %s36 = scalar_select %p33, %s35, %s26
      %p37 = scmp.ge.s32.totalorder %s36, 2
      %s38 = scalar_select %p37, 0, %s36
      %s39 = ssub.s32 %s26, %s38
      %p40 = scmp.eq.s32.totalorder %s39, 0
      %s42 = sadd.s32 %s41, 1
      %s43 = scalar_select %p40, %s41, %s42
      %p46 = pneg %p40
      %p47 = scmp.eq.s32.totalorder %s19, 1
      %p48 = por %p46, %p47
      %p49 = scmp.ne.s32.totalorder %s41, %s44
      %p50 = scmp.eq.s32.totalorder %s19, 0
      %p51 = por %p49, %p50
      %p52 = scmp.ne.s32.totalorder %s41, %s44
      %p53 = scmp.eq.s32.totalorder %s24, 1
      %p54 = por %p52, %p53
      %p55 = scmp.ne.s32.totalorder %s44, %s45
      %p56 = scmp.eq.s32.totalorder %s24, 0
      %p57 = por %p55, %p56
      %p58 = scmp.ne.s32.totalorder %s44, %s45
      %p59 = scmp.eq.s32.totalorder %s25, 1
      %p60 = por %p58, %p59
      %p62 = scmp.ne.s32.totalorder %s45, %s61
      %p63 = scmp.eq.s32.totalorder %s25, 0
      %p64 = por %p62, %p63
      %s66 = sadd.s32 %s65, 1
      %p69 = scmp.eq.s32.totalorder %s19, 1
      %p70 = scmp.ne.s32.totalorder %s65, %s67
      %p71 = scmp.eq.s32.totalorder %s19, 0
      %p72 = por %p70, %p71
      %p73 = scmp.ne.s32.totalorder %s65, %s67
      %p74 = scmp.eq.s32.totalorder %s24, 1
      %p75 = por %p73, %p74
      %p76 = scmp.ne.s32.totalorder %s67, %s68
      %p77 = scmp.eq.s32.totalorder %s24, 0
      %p78 = por %p76, %p77
      %p79 = scmp.ne.s32.totalorder %s67, %s68
      %p80 = scmp.eq.s32.totalorder %s25, 1
      %p81 = por %p79, %p80
      %p83 = scmp.ne.s32.totalorder %s68, %s82
      %p84 = scmp.eq.s32.totalorder %s25, 0
      %p85 = por %p83, %p84
      %s87 = sadd.s32 %s86, 1
      %p90 = scmp.eq.s32.totalorder %s19, 1
      %p91 = scmp.ne.s32.totalorder %s86, %s88
      %p92 = scmp.eq.s32.totalorder %s19, 0
      %p93 = por %p91, %p92
      %p94 = scmp.ne.s32.totalorder %s86, %s88
      %p95 = scmp.eq.s32.totalorder %s24, 1
      %p96 = por %p94, %p95
      %p97 = scmp.ne.s32.totalorder %s88, %s89
      %p98 = scmp.eq.s32.totalorder %s24, 0
      %p99 = por %p97, %p98
      %p100 = scmp.ne.s32.totalorder %s88, %s89
      %p101 = scmp.eq.s32.totalorder %s25, 1
      %p102 = por %p100, %p101
      %p104 = scmp.ne.s32.totalorder %s89, %s103
      %p105 = scmp.eq.s32.totalorder %s25, 0
      %p106 = por %p104, %p105
      %s108 = sadd.s32 %s107, 1
      %p111 = scmp.eq.s32.totalorder %s19, 1
      %p112 = scmp.ne.s32.totalorder %s107, %s109
      %p113 = scmp.eq.s32.totalorder %s19, 0
      %p114 = por %p112, %p113
      %p115 = scmp.ne.s32.totalorder %s107, %s109
      %p116 = scmp.eq.s32.totalorder %s24, 1
      %p117 = por %p115, %p116
      %p118 = scmp.ne.s32.totalorder %s109, %s110
      %p119 = scmp.eq.s32.totalorder %s24, 0
      %p120 = por %p118, %p119
      %p121 = scmp.ne.s32.totalorder %s109, %s110
      %p122 = scmp.eq.s32.totalorder %s25, 1
      %p123 = por %p121, %p122
      %p125 = scmp.ne.s32.totalorder %s110, %s124
      %p126 = scmp.eq.s32.totalorder %s25, 0
      %p127 = por %p125, %p126
      %s129 = sadd.s32 %s128, 1
      %p132 = scmp.eq.s32.totalorder %s19, 1
      %p133 = scmp.ne.s32.totalorder %s128, %s130
      %p134 = scmp.eq.s32.totalorder %s19, 0
      %p135 = por %p133, %p134
      %p136 = scmp.ne.s32.totalorder %s128, %s130
      %p137 = scmp.eq.s32.totalorder %s24, 1
      %p138 = por %p136, %p137
      %p139 = scmp.ne.s32.totalorder %s130, %s131
      %p140 = scmp.eq.s32.totalorder %s24, 0
      %p141 = por %p139, %p140
      %p142 = scmp.ne.s32.totalorder %s130, %s131
      %p143 = scmp.eq.s32.totalorder %s25, 1
      %p144 = por %p142, %p143
      %p146 = scmp.ne.s32.totalorder %s131, %s145
      %p147 = scmp.eq.s32.totalorder %s25, 0
      %p148 = por %p146, %p147
      %s149 = ssub.s32 %s26, %s38
      %s150 = ssub.s32 %s27, %s34
      %s151 = sor.u32 %s149, %s150
      %p152 = scmp.eq.s32.totalorder %s151, 0
      %s154 = sadd.s32 %s153, 1
      %s155 = scalar_select %p152, %s153, %s154
      %p158 = pneg %p152
      %p159 = scmp.eq.s32.totalorder %s19, 1
      %p160 = por %p158, %p159
      %p161 = scmp.ne.s32.totalorder %s153, %s156
      %p162 = scmp.eq.s32.totalorder %s19, 0
      %p163 = por %p161, %p162
      %p164 = scmp.ne.s32.totalorder %s153, %s156
      %p165 = scmp.eq.s32.totalorder %s24, 1
      %p166 = por %p164, %p165
      %p167 = scmp.ne.s32.totalorder %s156, %s157
      %p168 = scmp.eq.s32.totalorder %s24, 0
      %p169 = por %p167, %p168
      %p170 = scmp.ne.s32.totalorder %s156, %s157
      %p171 = scmp.eq.s32.totalorder %s25, 1
      %p172 = por %p170, %p171
      %p174 = scmp.ne.s32.totalorder %s157, %s173
      %p175 = scmp.eq.s32.totalorder %s25, 0
      %p176 = por %p174, %p175
      %p177 = scmp.le.s32.totalorder 1, %s19
      %p178 = scmp.lt.s32.totalorder %s19, 3
      %p179 = pnand %p177, %p178
      %p180 = pneg %p179
      // Predicated region
      $region9: #{tpu_custom_call.1} parent=5 // pred_check
        _
      $region10: #{tpu_custom_call.1} parent=5 // pred_check_branch
        %182 = sbr.rel (%p179) target = $region12
      $region11: #{tpu_custom_call.1} parent=5 // pred_region
        %s183 = ssub.s32 %s19, 1
        // Predicated region
        $region13: #{tpu_custom_call.1} parent=11 // pred_check
          %p184 = pneg %p78
        $region14: #{tpu_custom_call.1} parent=11 // pred_check_branch
          %186 = sbr.rel (%p184) target = $region16
        $region15: #{tpu_custom_call.1} parent=11 // pred_region
          %s188 = ssub.s32 1024, 1024
          %189 = vsyncadd [#allocation8], %s188
          %s190 = sshll.u32 [#allocation7], 4
          %s191 = int_to_ptr.vmem [resolvable:$true] %s190
          %196 = dma.hbm_to_vmem [thread:$0]  %s1, 1024, %s191, [#allocation8], 128, 128, 8
        $region16: #{tpu_custom_call.1} parent=11 // pred_fallthru
          _
        // Predicated region
        $region17: #{tpu_custom_call.1} parent=11 // pred_check
          %p197 = pneg %p99
        $region18: #{tpu_custom_call.1} parent=11 // pred_check_branch
          %199 = sbr.rel (%p197) target = $region20
        $region19: #{tpu_custom_call.1} parent=11 // pred_region
          %s201 = ssub.s32 1024, 1024
          %202 = vsyncadd [#allocation8], %s201
          %s203 = sshll.u32 [#allocation9], 4
          %s204 = int_to_ptr.vmem [resolvable:$true] %s203
          %209 = dma.hbm_to_vmem [thread:$0]  %s2, 1024, %s204, [#allocation8], 128, 128, 8
        $region20: #{tpu_custom_call.1} parent=11 // pred_fallthru
          _
        // Predicated region
        $region21: #{tpu_custom_call.1} parent=11 // pred_check
          %p210 = pneg %p120
        $region22: #{tpu_custom_call.1} parent=11 // pred_check_branch
          %212 = sbr.rel (%p210) target = $region24
        $region23: #{tpu_custom_call.1} parent=11 // pred_region
          %s214 = ssub.s32 1024, 1024
          %215 = vsyncadd [#allocation11], %s214
          %s216 = sshll.u32 [#allocation10], 4
          %s217 = int_to_ptr.vmem [resolvable:$true] %s216
          %222 = dma.hbm_to_vmem [thread:$0]  %s3, 1024, %s217, [#allocation11], 128, 128, 8
        $region24: #{tpu_custom_call.1} parent=11 // pred_fallthru
          _
        // Predicated region
        $region25: #{tpu_custom_call.1} parent=11 // pred_check
          %p223 = pneg %p141
        $region26: #{tpu_custom_call.1} parent=11 // pred_check_branch
          %225 = sbr.rel (%p223) target = $region28
        $region27: #{tpu_custom_call.1} parent=11 // pred_region
          _
        $region28: #{tpu_custom_call.1} parent=11 // pred_fallthru
          _
      $region12: #{tpu_custom_call.1} parent=5 // pred_fallthru
        _
      %p226 = scmp.lt.s32.totalorder %s19, 2
      // Predicated region
      $region29: #{tpu_custom_call.1} parent=5 // pred_check
        %p227 = pneg %p226
      $region30: #{tpu_custom_call.1} parent=5 // pred_check_branch
        %229 = sbr.rel (%p227) target = $region32
      $region31: #{tpu_custom_call.1} parent=5 // pred_region
        // Predicated region
        $region33: #{tpu_custom_call.1} parent=31 // pred_check
          %p230 = pneg %p51
        $region34: #{tpu_custom_call.1} parent=31 // pred_check_branch
          %232 = sbr.rel (%p230) target = $region36
        $region35: #{tpu_custom_call.1} parent=31 // pred_region
          %s233 = sand.u32 %s41, 1
          %s234 = scalar_lea.sflag [#allocation5], %s233
          %s235 = sand.u32 %s41, 1
          %s236 = smul.addr %s235, 16
          %s237 = scalar_lea.vmem [#allocation4], %s236
          %s239 = ssub.s32 256, 256
          %240 = vsyncadd %s234, %s239
          %s241 = smul.addr %s26, 2
          %s242 = smul.addr %s241, 128
          %s243 = scalar_lea.hbm %s0, %s242
          %s244 = sshll.u32 %s237, 4
          %s245 = int_to_ptr.vmem [resolvable:$true] %s244
          %250 = dma.hbm_to_vmem [thread:$0]  %s243, 256, %s245, %s234, 128, 128, 8
        $region36: #{tpu_custom_call.1} parent=31 // pred_fallthru
          _
      $region32: #{tpu_custom_call.1} parent=5 // pred_fallthru
        _
      %p251 = scmp.le.s32.totalorder 1, %s19
      %p252 = scmp.lt.s32.totalorder %s19, 3
      %p253 = pnand %p251, %p252
      %p254 = pneg %p253
      // Predicated region
      $region37: #{tpu_custom_call.1} parent=5 // pred_check
        _
      $region38: #{tpu_custom_call.1} parent=5 // pred_check_branch
        %256 = sbr.rel (%p253) target = $region40
      $region39: #{tpu_custom_call.1} parent=5 // pred_region
        %s257 = ssub.s32 %s19, 1
        %s258 = sand.u32 %s44, 1
        %s259 = scalar_lea.sflag [#allocation5], %s258
        %s260 = sand.u32 %s44, 1
        %s261 = smul.addr %s260, 16
        %s262 = scalar_lea.vmem [#allocation4], %s261
        // Predicated region
        $region41: #{tpu_custom_call.1} parent=39 // pred_check
          %p263 = pneg %p57
        $region42: #{tpu_custom_call.1} parent=39 // pred_check_branch
          %265 = sbr.rel (%p263) target = $region44
        $region43: #{tpu_custom_call.1} parent=39 // pred_region
          %266 = dma.done %s259, 256
        $region44: #{tpu_custom_call.1} parent=39 // pred_fallthru
          _
        // Predicated region
        $region45: #{tpu_custom_call.1} parent=39 // pred_check
          %p267 = pneg %p78
        $region46: #{tpu_custom_call.1} parent=39 // pred_check_branch
          %269 = sbr.rel (%p267) target = $region48
        $region47: #{tpu_custom_call.1} parent=39 // pred_region
          %270 = dma.done [#allocation8], 1024
        $region48: #{tpu_custom_call.1} parent=39 // pred_fallthru
          _
        // Predicated region
        $region49: #{tpu_custom_call.1} parent=39 // pred_check
          %p271 = pneg %p99
        $region50: #{tpu_custom_call.1} parent=39 // pred_check_branch
          %273 = sbr.rel (%p271) target = $region52
        $region51: #{tpu_custom_call.1} parent=39 // pred_region
          %274 = dma.done [#allocation8], 1024
        $region52: #{tpu_custom_call.1} parent=39 // pred_fallthru
          _
        // Predicated region
        $region53: #{tpu_custom_call.1} parent=39 // pred_check
          %p275 = pneg %p120
        $region54: #{tpu_custom_call.1} parent=39 // pred_check_branch
          %277 = sbr.rel (%p275) target = $region56
        $region55: #{tpu_custom_call.1} parent=39 // pred_region
          %278 = dma.done [#allocation11], 1024
        $region56: #{tpu_custom_call.1} parent=39 // pred_fallthru
          _
        %s279 = sand.u32 %s44, 1
        %s280 = scalar_lea.sflag [#allocation5], %s279
        %s281 = sand.u32 %s44, 1
        %s282 = smul.addr %s281, 16
        %s283 = scalar_lea.vmem [#allocation4], %s282
        %p284 = pneg %p57
        %p285 = pneg %p54
        %p286 = pneg %p78
        %p287 = pneg %p75
        %p288 = pneg %p99
        %p289 = pneg %p96
        %p290 = pneg %p120
        %p291 = pneg %p117
        %p292 = pneg %p141
        %p293 = pneg %p138
        %p294 = pneg %p169
        %p295 = pneg %p166
        %s296 = sand.u32 %s156, 1
        %s297 = scalar_lea.sflag [#allocation6], %s296
        %s298 = sand.u32 %s156, 1
        %s299 = smul.addr %s298, 16
        %s300 = scalar_lea.vmem [#allocation12], %s299
        %s301 = smul.u32 2, %s29
        %p302 = scmp.eq.s32.totalorder %s29, 0
        // Predicated region
        $region57: #{tpu_custom_call.1} parent=39 // pred_check
          %p303 = pneg %p302
        $region58: #{tpu_custom_call.1} parent=39 // pred_check_branch
          %305 = sbr.rel (%p303) target = $region60
        $region59: #{tpu_custom_call.1} parent=39 // pred_region
          %v306 = vld [vmem:[%s262] sm:$0xff]
          %v307 = vld [vmem:[%s262 + $0x8] sm:$0xff]
          %v308 = vld [vmem:[#allocation9] sm:$0xff]
          %v309 = vld [vmem:[#allocation9 + $0x8] sm:$0xff]
          %v310 = vld [vmem:[#allocation9 + $0x10] sm:$0xff]
          %v311 = vld [vmem:[#allocation9 + $0x18] sm:$0xff]
          %v312 = vld [vmem:[#allocation9 + $0x20] sm:$0xff]
          %v313 = vld [vmem:[#allocation9 + $0x28] sm:$0xff]
          %v314 = vld [vmem:[#allocation9 + $0x30] sm:$0xff]
          %v315 = vld [vmem:[#allocation9 + $0x38] sm:$0xff]
          %vm316 = vcmask 523264
          %v318 = vsel %vm316, %v306, 0
          %v321 = vsel %vm316, %v307, 0
          %323 = vmatprep.subr.mxu0 0.0
          %324 = vmatpush1.msra.mxu0 %v308
          %325 = vmatprep.subr.mxu0 0.0
          %326 = vmatpush1.msra.mxu0 %v309
          %327 = vmatprep.subr.mxu0 0.0
          %328 = vmatpush1.msra.mxu0 %v310
          %329 = vmatprep.subr.mxu0 0.0
          %330 = vmatpush1.msra.mxu0 %v311
          %331 = vmatprep.subr.mxu0 0.0
          %332 = vmatpush1.msra.mxu0 %v312
          %333 = vmatprep.subr.mxu0 0.0
          %334 = vmatpush1.msra.mxu0 %v313
          %335 = vmatprep.subr.mxu0 0.0
          %336 = vmatpush1.msra.mxu0 %v314
          %337 = vmatprep.subr.mxu0 0.0
          %338 = vmatpush1.msra.mxu0 %v315
          %339 = vmatprep.subr.mxu0 0.0
          %340 = vmatpush1.msra.mxu0 0.0
          %341 = vmatprep.subr.mxu0 0.0
          %342 = vmatpush1.msra.mxu0 0.0
          %343 = vmatprep.subr.mxu0 0.0
          %344 = vmatpush1.msra.mxu0 0.0
          %345 = vmatprep.subr.mxu0 0.0
          %346 = vmatpush1.msra.mxu0 0.0
          %347 = vmatprep.subr.mxu0 0.0
          %348 = vmatpush1.msra.mxu0 0.0
          %349 = vmatprep.subr.mxu0 0.0
          %350 = vmatpush1.msra.mxu0 0.0
          %351 = vmatprep.subr.mxu0 0.0
          %352 = vmatpush1.msra.mxu0 0.0
          %353 = vmatprep.subr.mxu0 0.0
          %354 = vmatpush1.msra.mxu0 0.0
          %355 = vmatprep.subr.mxu0 0.0
          %356 = vmatpush1.msra.mxu0 0.0
          %357 = vmatprep.subr.mxu0 0.0
          %358 = vmatpush1.msra.mxu0 0.0
          %359 = vmatprep.subr.mxu0 0.0
          %360 = vmatpush1.msra.mxu0 0.0
          %361 = vmatprep.subr.mxu0 0.0
          %362 = vmatpush1.msra.mxu0 0.0
          %363 = vmatprep.subr.mxu0 0.0
          %364 = vmatpush1.msra.mxu0 0.0
          %365 = vmatprep.subr.mxu0 0.0
          %366 = vmatpush1.msra.mxu0 0.0
          %367 = vmatprep.subr.mxu0 0.0
          %368 = vmatpush1.msra.mxu0 0.0
          %369 = vmatprep.subr.mxu0 0.0
          %370 = vmatpush1.msra.mxu0 0.0
          %371 = vmatprep.subr.mxu0 0.0
          %372 = vmatpush1.msra.mxu0 0.0
          %373 = vmatprep.subr.mxu0 0.0
          %374 = vmatpush1.msra.mxu0 0.0
          %375 = vmatprep.subr.mxu0 0.0
          %376 = vmatpush1.msra.mxu0 0.0
          %377 = vmatprep.subr.mxu0 0.0
          %378 = vmatpush1.msra.mxu0 0.0
          %379 = vmatprep.subr.mxu0 0.0
          %380 = vmatpush1.msra.mxu0 0.0
          %381 = vmatprep.subr.mxu0 0.0
          %382 = vmatpush1.msra.mxu0 0.0
          %383 = vmatprep.subr.mxu0 0.0
          %384 = vmatpush1.msra.mxu0 0.0
          %385 = vmatprep.subr.mxu0 0.0
          %386 = vmatpush1.msra.mxu0 0.0
          %387 = vmatprep.mubr.f32.mxu0 0.0
          %388 = vmatmul.mubr.f32.gmra.mrb[0].mxu0 %v318
          %v389 = vpop.f32.mrb[0].mxu0
          %v390 = vadd.f32 0.0, %v389
          %v391 = vpop.f32.mrb[0].mxu0
          %392 = vmatprep.mubr.f32.mxu0 0.0
          %393 = vmatmul.mubr.f32.gmra.mrb[0].mxu0 %v321
          %v394 = vpop.f32.mrb[0].mxu0
          %v395 = vadd.f32 0.0, %v394
          %v396 = vpop.f32.mrb[0].mxu0
          %397 = vdwg.mxu0
          %398 = vst [vmem:[#allocation2] sm:$0xff] %v390
          %399 = vst [vmem:[#allocation2 + $0x8] sm:$0xff] %v395
        $region60: #{tpu_custom_call.1} parent=39 // pred_fallthru
          _
        %s400 = smul.u32 %s29, 16
        %s401 = scalar_lea.vmem %s262, %s400 [#allocation4]
        %v402 = vld [vmem:[%s401] sm:$0xff]
        %v403 = vld [vmem:[%s401 + $0x8] sm:$0xff]
        %v404 = vld [vmem:[#allocation7] sm:$0xff]
        %v405 = vld [vmem:[#allocation7 + $0x8] sm:$0xff]
        %v406 = vld [vmem:[#allocation7 + $0x10] sm:$0xff]
        %v407 = vld [vmem:[#allocation7 + $0x18] sm:$0xff]
        %v408 = vld [vmem:[#allocation7 + $0x20] sm:$0xff]
        %v409 = vld [vmem:[#allocation7 + $0x28] sm:$0xff]
        %v410 = vld [vmem:[#allocation7 + $0x30] sm:$0xff]
        %v411 = vld [vmem:[#allocation7 + $0x38] sm:$0xff]
        %vm412 = vcmask 523264
        %v414 = vsel %vm412, %v402, 0
        %v417 = vsel %vm412, %v403, 0
        %419 = vmatprep.subr.mxu0 0.0
        %420 = vmatpush1.msra.mxu0 %v404
        %421 = vmatprep.subr.mxu0 0.0
        %422 = vmatpush1.msra.mxu0 %v405
        %423 = vmatprep.subr.mxu0 0.0
        %424 = vmatpush1.msra.mxu0 %v406
        %425 = vmatprep.subr.mxu0 0.0
        %426 = vmatpush1.msra.mxu0 %v407
        %427 = vmatprep.subr.mxu0 0.0
        %428 = vmatpush1.msra.mxu0 %v408
        %429 = vmatprep.subr.mxu0 0.0
        %430 = vmatpush1.msra.mxu0 %v409
        %431 = vmatprep.subr.mxu0 0.0
        %432 = vmatpush1.msra.mxu0 %v410
        %433 = vmatprep.subr.mxu0 0.0
        %434 = vmatpush1.msra.mxu0 %v411
        %435 = vmatprep.subr.mxu0 0.0
        %436 = vmatpush1.msra.mxu0 0.0
        %437 = vmatprep.subr.mxu0 0.0
        %438 = vmatpush1.msra.mxu0 0.0
        %439 = vmatprep.subr.mxu0 0.0
        %440 = vmatpush1.msra.mxu0 0.0
        %441 = vmatprep.subr.mxu0 0.0
        %442 = vmatpush1.msra.mxu0 0.0
        %443 = vmatprep.subr.mxu0 0.0
        %444 = vmatpush1.msra.mxu0 0.0
        %445 = vmatprep.subr.mxu0 0.0
        %446 = vmatpush1.msra.mxu0 0.0
        %447 = vmatprep.subr.mxu0 0.0
        %448 = vmatpush1.msra.mxu0 0.0
        %449 = vmatprep.subr.mxu0 0.0
        %450 = vmatpush1.msra.mxu0 0.0
        %451 = vmatprep.subr.mxu0 0.0
        %452 = vmatpush1.msra.mxu0 0.0
        %453 = vmatprep.subr.mxu0 0.0
        %454 = vmatpush1.msra.mxu0 0.0
        %455 = vmatprep.subr.mxu0 0.0
        %456 = vmatpush1.msra.mxu0 0.0
        %457 = vmatprep.subr.mxu0 0.0
        %458 = vmatpush1.msra.mxu0 0.0
        %459 = vmatprep.subr.mxu0 0.0
        %460 = vmatpush1.msra.mxu0 0.0
        %461 = vmatprep.subr.mxu0 0.0
        %462 = vmatpush1.msra.mxu0 0.0
        %463 = vmatprep.subr.mxu0 0.0
        %464 = vmatpush1.msra.mxu0 0.0
        %465 = vmatprep.subr.mxu0 0.0
        %466 = vmatpush1.msra.mxu0 0.0
        %467 = vmatprep.subr.mxu0 0.0
        %468 = vmatpush1.msra.mxu0 0.0
        %469 = vmatprep.subr.mxu0 0.0
        %470 = vmatpush1.msra.mxu0 0.0
        %471 = vmatprep.subr.mxu0 0.0
        %472 = vmatpush1.msra.mxu0 0.0
        %473 = vmatprep.subr.mxu0 0.0
        %474 = vmatpush1.msra.mxu0 0.0
        %475 = vmatprep.subr.mxu0 0.0
        %476 = vmatpush1.msra.mxu0 0.0
        %477 = vmatprep.subr.mxu0 0.0
        %478 = vmatpush1.msra.mxu0 0.0
        %479 = vmatprep.subr.mxu0 0.0
        %480 = vmatpush1.msra.mxu0 0.0
        %481 = vmatprep.subr.mxu0 0.0
        %482 = vmatpush1.msra.mxu0 0.0
        %483 = vmatprep.mubr.f32.mxu0 0.0
        %484 = vmatmul.mubr.f32.gmra.mrb[0].mxu0 %v414
        %v485 = vpop.f32.mrb[0].mxu0
        %v486 = vadd.f32 0.0, %v485
        %v487 = vpop.f32.mrb[0].mxu0
        %488 = vmatprep.mubr.f32.mxu0 0.0
        %489 = vmatmul.mubr.f32.gmra.mrb[0].mxu0 %v417
        %v490 = vpop.f32.mrb[0].mxu0
        %v491 = vadd.f32 0.0, %v490
        %v492 = vpop.f32.mrb[0].mxu0
        %493 = vdwg.mxu0
        %v494 = vld [vmem:[#allocation2] sm:$0xff]
        %v495 = vld [vmem:[#allocation2 + $0x8] sm:$0xff]
        %vm496 = vcmask 64512
        %v498 = vsel %vm496, %v486, 0
        %v501 = vsel %vm496, %v491, 0
        %v504 = vsel %vm496, %v494, 0
        %v507 = vsel %vm496, %v495, 0
        %509 = vmatprep.subr.mxu0 0.0
        %510 = vmatpush1.xpose.msra.mxu0 %v504
        %511 = vmatprep.subr.mxu0 0.0
        %512 = vmatpush1.xpose.msra.mxu0 %v507
        %513 = vmatprep.subr.mxu0 0.0
        %514 = vmatpush1.xpose.msra.mxu0 0.0
        %515 = vmatprep.subr.mxu0 0.0
        %516 = vmatpush1.xpose.msra.mxu0 0.0
        %517 = vmatprep.subr.mxu0 0.0
        %518 = vmatpush1.xpose.msra.mxu0 0.0
        %519 = vmatprep.subr.mxu0 0.0
        %520 = vmatpush1.xpose.msra.mxu0 0.0
        %521 = vmatprep.subr.mxu0 0.0
        %522 = vmatpush1.xpose.msra.mxu0 0.0
        %523 = vmatprep.subr.mxu0 0.0
        %524 = vmatpush1.xpose.msra.mxu0 0.0
        %525 = vmatprep.subr.mxu0 0.0
        %526 = vmatpush1.xpose.msra.mxu0 0.0
        %527 = vmatprep.subr.mxu0 0.0
        %528 = vmatpush1.xpose.msra.mxu0 0.0
        %529 = vmatprep.subr.mxu0 0.0
        %530 = vmatpush1.xpose.msra.mxu0 0.0
        %531 = vmatprep.subr.mxu0 0.0
        %532 = vmatpush1.xpose.msra.mxu0 0.0
        %533 = vmatprep.subr.mxu0 0.0
        %534 = vmatpush1.xpose.msra.mxu0 0.0
        %535 = vmatprep.subr.mxu0 0.0
        %536 = vmatpush1.xpose.msra.mxu0 0.0
        %537 = vmatprep.subr.mxu0 0.0
        %538 = vmatpush1.xpose.msra.mxu0 0.0
        %539 = vmatprep.subr.mxu0 0.0
        %540 = vmatpush1.xpose.msra.mxu0 0.0
        %541 = vmatprep.subr.mxu0 0.0
        %542 = vmatpush1.xpose.msra.mxu0 0.0
        %543 = vmatprep.subr.mxu0 0.0
        %544 = vmatpush1.xpose.msra.mxu0 0.0
        %545 = vmatprep.subr.mxu0 0.0
        %546 = vmatpush1.xpose.msra.mxu0 0.0
        %547 = vmatprep.subr.mxu0 0.0
        %548 = vmatpush1.xpose.msra.mxu0 0.0
        %549 = vmatprep.subr.mxu0 0.0
        %550 = vmatpush1.xpose.msra.mxu0 0.0
        %551 = vmatprep.subr.mxu0 0.0
        %552 = vmatpush1.xpose.msra.mxu0 0.0
        %553 = vmatprep.subr.mxu0 0.0
        %554 = vmatpush1.xpose.msra.mxu0 0.0
        %555 = vmatprep.subr.mxu0 0.0
        %556 = vmatpush1.xpose.msra.mxu0 0.0
        %557 = vmatprep.subr.mxu0 0.0
        %558 = vmatpush1.xpose.msra.mxu0 0.0
        %559 = vmatprep.subr.mxu0 0.0
        %560 = vmatpush1.xpose.msra.mxu0 0.0
        %561 = vmatprep.subr.mxu0 0.0
        %562 = vmatpush1.xpose.msra.mxu0 0.0
        %563 = vmatprep.subr.mxu0 0.0
        %564 = vmatpush1.xpose.msra.mxu0 0.0
        %565 = vmatprep.subr.mxu0 0.0
        %566 = vmatpush1.xpose.msra.mxu0 0.0
        %567 = vmatprep.subr.mxu0 0.0
        %568 = vmatpush1.xpose.msra.mxu0 0.0
        %569 = vmatprep.subr.mxu0 0.0
        %570 = vmatpush1.xpose.msra.mxu0 0.0
        %571 = vmatprep.subr.mxu0 0.0
        %572 = vmatpush1.xpose.msra.mxu0 0.0
        %573 = vmatprep.mubr.f32.mxu0 0.0
        %574 = vmatmul.mubr.f32.gmra.mrb[0].mxu0 %v498
        %v575 = vpop.f32.mrb[0].mxu0
        %v576 = vadd.f32 0.0, %v575
        %v577 = vpop.f32.mrb[0].mxu0
        %578 = vmatprep.mubr.f32.mxu0 0.0
        %579 = vmatmul.mubr.f32.gmra.mrb[0].mxu0 %v501
        %v580 = vpop.f32.mrb[0].mxu0
        %v581 = vadd.f32 0.0, %v580
        %v582 = vpop.f32.mrb[0].mxu0
        %583 = vdwg.mxu0
        %vm584 = vcmask 130048
        %v585 = vsel %vm584, %v576, -inf
        %586 = vmax.xlane.f32.xlu0 %v585
        %v587 = vpop.xlane.xlu0 %586
        %v588 = vsel %vm584, %v581, -inf
        %589 = vmax.xlane.f32.xlu0 %v588
        %v590 = vpop.xlane.xlu0 %589
        %v591 = vsub.f32 %v576, %v587
        %v592 = vsub.f32 %v581, %v590
        %v593 = vmul.f32 %v591, 1.442695
        %v594 = vpow.pop %v593
        %v595 = vmul.f32 %v592, 1.442695
        %v596 = vpow.pop %v595
        %v597 = vsel %vm584, %v594, 0.0
        %598 = vadd.xlane.f32.xlu0 %v597
        %v599 = vpop.xlane.xlu0 %598
        %v600 = vsel %vm584, %v596, 0.0
        %601 = vadd.xlane.f32.xlu0 %v600
        %v602 = vpop.xlane.xlu0 %601
        %v603 = vrcp.pop %v599
        %v604 = vrcp.pop %v602
        %v605 = vmul.f32 %v594, %v603
        %v606 = vmul.f32 %v596, %v604
        %607 = vrot.lane.b32.xlu0 %v494, 64
        %v608 = vpop.permute.xlu0 %607
        %609 = vrot.lane.b32.xlu0 %v495, 64
        %v610 = vpop.permute.xlu0 %609
        %v614 = vsel %vm584, %v605, 0
        %v617 = vsel %vm584, %v606, 0
        %619 = vmatprep.subr.mxu0 0.0
        %620 = vmatpush1.msra.mxu0 %v608
        %621 = vmatprep.subr.mxu0 0.0
        %622 = vmatpush1.msra.mxu0 %v610
        %623 = vmatprep.subr.mxu0 0.0
        %624 = vmatpush1.msra.mxu0 0.0
        %625 = vmatprep.subr.mxu0 0.0
        %626 = vmatpush1.msra.mxu0 0.0
        %627 = vmatprep.subr.mxu0 0.0
        %628 = vmatpush1.msra.mxu0 0.0
        %629 = vmatprep.subr.mxu0 0.0
        %630 = vmatpush1.msra.mxu0 0.0
        %631 = vmatprep.subr.mxu0 0.0
        %632 = vmatpush1.msra.mxu0 0.0
        %633 = vmatprep.subr.mxu0 0.0
        %634 = vmatpush1.msra.mxu0 0.0
        %635 = vmatprep.subr.mxu0 0.0
        %636 = vmatpush1.msra.mxu0 0.0
        %637 = vmatprep.subr.mxu0 0.0
        %638 = vmatpush1.msra.mxu0 0.0
        %639 = vmatprep.subr.mxu0 0.0
        %640 = vmatpush1.msra.mxu0 0.0
        %641 = vmatprep.subr.mxu0 0.0
        %642 = vmatpush1.msra.mxu0 0.0
        %643 = vmatprep.subr.mxu0 0.0
        %644 = vmatpush1.msra.mxu0 0.0
        %645 = vmatprep.subr.mxu0 0.0
        %646 = vmatpush1.msra.mxu0 0.0
        %647 = vmatprep.subr.mxu0 0.0
        %648 = vmatpush1.msra.mxu0 0.0
        %649 = vmatprep.subr.mxu0 0.0
        %650 = vmatpush1.msra.mxu0 0.0
        %651 = vmatprep.subr.mxu0 0.0
        %652 = vmatpush1.msra.mxu0 0.0
        %653 = vmatprep.subr.mxu0 0.0
        %654 = vmatpush1.msra.mxu0 0.0
        %655 = vmatprep.subr.mxu0 0.0
        %656 = vmatpush1.msra.mxu0 0.0
        %657 = vmatprep.subr.mxu0 0.0
        %658 = vmatpush1.msra.mxu0 0.0
        %659 = vmatprep.subr.mxu0 0.0
        %660 = vmatpush1.msra.mxu0 0.0
        %661 = vmatprep.subr.mxu0 0.0
        %662 = vmatpush1.msra.mxu0 0.0
        %663 = vmatprep.subr.mxu0 0.0
        %664 = vmatpush1.msra.mxu0 0.0
        %665 = vmatprep.subr.mxu0 0.0
        %666 = vmatpush1.msra.mxu0 0.0
        %667 = vmatprep.subr.mxu0 0.0
        %668 = vmatpush1.msra.mxu0 0.0
        %669 = vmatprep.subr.mxu0 0.0
        %670 = vmatpush1.msra.mxu0 0.0
        %671 = vmatprep.subr.mxu0 0.0
        %672 = vmatpush1.msra.mxu0 0.0
        %673 = vmatprep.subr.mxu0 0.0
        %674 = vmatpush1.msra.mxu0 0.0
        %675 = vmatprep.subr.mxu0 0.0
        %676 = vmatpush1.msra.mxu0 0.0
        %677 = vmatprep.subr.mxu0 0.0
        %678 = vmatpush1.msra.mxu0 0.0
        %679 = vmatprep.subr.mxu0 0.0
        %680 = vmatpush1.msra.mxu0 0.0
        %681 = vmatprep.subr.mxu0 0.0
        %682 = vmatpush1.msra.mxu0 0.0
        %683 = vmatprep.mubr.f32.mxu0 0.0
        %684 = vmatmul.mubr.f32.gmra.mrb[0].mxu0 %v614
        %v685 = vpop.f32.mrb[0].mxu0
        %v686 = vadd.f32 0.0, %v685
        %v687 = vpop.f32.mrb[0].mxu0
        %688 = vmatprep.mubr.f32.mxu0 0.0
        %689 = vmatmul.mubr.f32.gmra.mrb[0].mxu0 %v617
        %v690 = vpop.f32.mrb[0].mxu0
        %v691 = vadd.f32 0.0, %v690
        %v692 = vpop.f32.mrb[0].mxu0
        %693 = vdwg.mxu0
        %694 = vst.msk [vmem:[#allocation3] sm:$0xff] %vm496, %v686
        %695 = vst.msk [vmem:[#allocation3 + $0x8] sm:$0xff] %vm496, %v691
        %v696 = vld [vmem:[#allocation2] sm:$0xff]
        %v697 = vld [vmem:[#allocation2 + $0x8] sm:$0xff]
        %698 = vrot.lane.b32.xlu0 %v486, 120
        %v699 = vpop.permute.xlu0 %698
        %700 = vrot.lane.b32.xlu0 %v491, 120
        %v701 = vpop.permute.xlu0 %700
        %704 = vrot.lane.b32.xlu0 %v696, 120
        %v705 = vpop.permute.xlu0 %704
        %706 = vrot.lane.b32.xlu0 %v697, 120
        %v707 = vpop.permute.xlu0 %706
        %v708 = vsel %vm496, %v699, 0
        %v710 = vsel %vm496, %v701, 0
        %v712 = vsel %vm496, %v705, 0
        %v714 = vsel %vm496, %v707, 0
        %716 = vmatprep.subr.mxu0 0.0
        %717 = vmatpush1.xpose.msra.mxu0 %v712
        %718 = vmatprep.subr.mxu0 0.0
        %719 = vmatpush1.xpose.msra.mxu0 %v714
        %720 = vmatprep.subr.mxu0 0.0
        %721 = vmatpush1.xpose.msra.mxu0 0.0
        %722 = vmatprep.subr.mxu0 0.0
        %723 = vmatpush1.xpose.msra.mxu0 0.0
        %724 = vmatprep.subr.mxu0 0.0
        %725 = vmatpush1.xpose.msra.mxu0 0.0
        %726 = vmatprep.subr.mxu0 0.0
        %727 = vmatpush1.xpose.msra.mxu0 0.0
        %728 = vmatprep.subr.mxu0 0.0
        %729 = vmatpush1.xpose.msra.mxu0 0.0
        %730 = vmatprep.subr.mxu0 0.0
        %731 = vmatpush1.xpose.msra.mxu0 0.0
        %732 = vmatprep.subr.mxu0 0.0
        %733 = vmatpush1.xpose.msra.mxu0 0.0
        %734 = vmatprep.subr.mxu0 0.0
        %735 = vmatpush1.xpose.msra.mxu0 0.0
        %736 = vmatprep.subr.mxu0 0.0
        %737 = vmatpush1.xpose.msra.mxu0 0.0
        %738 = vmatprep.subr.mxu0 0.0
        %739 = vmatpush1.xpose.msra.mxu0 0.0
        %740 = vmatprep.subr.mxu0 0.0
        %741 = vmatpush1.xpose.msra.mxu0 0.0
        %742 = vmatprep.subr.mxu0 0.0
        %743 = vmatpush1.xpose.msra.mxu0 0.0
        %744 = vmatprep.subr.mxu0 0.0
        %745 = vmatpush1.xpose.msra.mxu0 0.0
        %746 = vmatprep.subr.mxu0 0.0
        %747 = vmatpush1.xpose.msra.mxu0 0.0
        %748 = vmatprep.subr.mxu0 0.0
        %749 = vmatpush1.xpose.msra.mxu0 0.0
        %750 = vmatprep.subr.mxu0 0.0
        %751 = vmatpush1.xpose.msra.mxu0 0.0
        %752 = vmatprep.subr.mxu0 0.0
        %753 = vmatpush1.xpose.msra.mxu0 0.0
        %754 = vmatprep.subr.mxu0 0.0
        %755 = vmatpush1.xpose.msra.mxu0 0.0
        %756 = vmatprep.subr.mxu0 0.0
        %757 = vmatpush1.xpose.msra.mxu0 0.0
        %758 = vmatprep.subr.mxu0 0.0
        %759 = vmatpush1.xpose.msra.mxu0 0.0
        %760 = vmatprep.subr.mxu0 0.0
        %761 = vmatpush1.xpose.msra.mxu0 0.0
        %762 = vmatprep.subr.mxu0 0.0
        %763 = vmatpush1.xpose.msra.mxu0 0.0
        %764 = vmatprep.subr.mxu0 0.0
        %765 = vmatpush1.xpose.msra.mxu0 0.0
        %766 = vmatprep.subr.mxu0 0.0
        %767 = vmatpush1.xpose.msra.mxu0 0.0
        %768 = vmatprep.subr.mxu0 0.0
        %769 = vmatpush1.xpose.msra.mxu0 0.0
        %770 = vmatprep.subr.mxu0 0.0
        %771 = vmatpush1.xpose.msra.mxu0 0.0
        %772 = vmatprep.subr.mxu0 0.0
        %773 = vmatpush1.xpose.msra.mxu0 0.0
        %774 = vmatprep.subr.mxu0 0.0
        %775 = vmatpush1.xpose.msra.mxu0 0.0
        %776 = vmatprep.subr.mxu0 0.0
        %777 = vmatpush1.xpose.msra.mxu0 0.0
        %778 = vmatprep.subr.mxu0 0.0
        %779 = vmatpush1.xpose.msra.mxu0 0.0
        %780 = vmatprep.mubr.f32.mxu0 0.0
        %781 = vmatmul.mubr.f32.gmra.mrb[0].mxu0 %v708
        %v782 = vpop.f32.mrb[0].mxu0
        %v783 = vadd.f32 0.0, %v782
        %v784 = vpop.f32.mrb[0].mxu0
        %785 = vmatprep.mubr.f32.mxu0 0.0
        %786 = vmatmul.mubr.f32.gmra.mrb[0].mxu0 %v710
        %v787 = vpop.f32.mrb[0].mxu0
        %v788 = vadd.f32 0.0, %v787
        %v789 = vpop.f32.mrb[0].mxu0
        %790 = vdwg.mxu0
        %v791 = vsel %vm584, %v783, -inf
        %792 = vmax.xlane.f32.xlu0 %v791
        %v793 = vpop.xlane.xlu0 %792
        %v794 = vsel %vm584, %v788, -inf
        %795 = vmax.xlane.f32.xlu0 %v794
        %v796 = vpop.xlane.xlu0 %795
        %v797 = vsub.f32 %v783, %v793
        %v798 = vsub.f32 %v788, %v796
        %v799 = vmul.f32 %v797, 1.442695
        %v800 = vpow.pop %v799
        %v801 = vmul.f32 %v798, 1.442695
        %v802 = vpow.pop %v801
        %v803 = vsel %vm584, %v800, 0.0
        %804 = vadd.xlane.f32.xlu0 %v803
        %v805 = vpop.xlane.xlu0 %804
        %v806 = vsel %vm584, %v802, 0.0
        %807 = vadd.xlane.f32.xlu0 %v806
        %v808 = vpop.xlane.xlu0 %807
        %v809 = vrcp.pop %v805
        %v810 = vrcp.pop %v808
        %v811 = vmul.f32 %v800, %v809
        %v812 = vmul.f32 %v802, %v810
        %813 = vrot.lane.b32.xlu0 %v696, 56
        %v814 = vpop.permute.xlu0 %813
        %815 = vrot.lane.b32.xlu0 %v697, 56
        %v816 = vpop.permute.xlu0 %815
        %v820 = vsel %vm584, %v811, 0
        %v823 = vsel %vm584, %v812, 0
        %825 = vmatprep.subr.mxu0 0.0
        %826 = vmatpush1.msra.mxu0 %v814
        %827 = vmatprep.subr.mxu0 0.0
        %828 = vmatpush1.msra.mxu0 %v816
        %829 = vmatprep.subr.mxu0 0.0
        %830 = vmatpush1.msra.mxu0 0.0
        %831 = vmatprep.subr.mxu0 0.0
        %832 = vmatpush1.msra.mxu0 0.0
        %833 = vmatprep.subr.mxu0 0.0
        %834 = vmatpush1.msra.mxu0 0.0
        %835 = vmatprep.subr.mxu0 0.0
        %836 = vmatpush1.msra.mxu0 0.0
        %837 = vmatprep.subr.mxu0 0.0
        %838 = vmatpush1.msra.mxu0 0.0
        %839 = vmatprep.subr.mxu0 0.0
        %840 = vmatpush1.msra.mxu0 0.0
        %841 = vmatprep.subr.mxu0 0.0
        %842 = vmatpush1.msra.mxu0 0.0
        %843 = vmatprep.subr.mxu0 0.0
        %844 = vmatpush1.msra.mxu0 0.0
        %845 = vmatprep.subr.mxu0 0.0
        %846 = vmatpush1.msra.mxu0 0.0
        %847 = vmatprep.subr.mxu0 0.0
        %848 = vmatpush1.msra.mxu0 0.0
        %849 = vmatprep.subr.mxu0 0.0
        %850 = vmatpush1.msra.mxu0 0.0
        %851 = vmatprep.subr.mxu0 0.0
        %852 = vmatpush1.msra.mxu0 0.0
        %853 = vmatprep.subr.mxu0 0.0
        %854 = vmatpush1.msra.mxu0 0.0
        %855 = vmatprep.subr.mxu0 0.0
        %856 = vmatpush1.msra.mxu0 0.0
        %857 = vmatprep.subr.mxu0 0.0
        %858 = vmatpush1.msra.mxu0 0.0
        %859 = vmatprep.subr.mxu0 0.0
        %860 = vmatpush1.msra.mxu0 0.0
        %861 = vmatprep.subr.mxu0 0.0
        %862 = vmatpush1.msra.mxu0 0.0
        %863 = vmatprep.subr.mxu0 0.0
        %864 = vmatpush1.msra.mxu0 0.0
        %865 = vmatprep.subr.mxu0 0.0
        %866 = vmatpush1.msra.mxu0 0.0
        %867 = vmatprep.subr.mxu0 0.0
        %868 = vmatpush1.msra.mxu0 0.0
        %869 = vmatprep.subr.mxu0 0.0
        %870 = vmatpush1.msra.mxu0 0.0
        %871 = vmatprep.subr.mxu0 0.0
        %872 = vmatpush1.msra.mxu0 0.0
        %873 = vmatprep.subr.mxu0 0.0
        %874 = vmatpush1.msra.mxu0 0.0
        %875 = vmatprep.subr.mxu0 0.0
        %876 = vmatpush1.msra.mxu0 0.0
        %877 = vmatprep.subr.mxu0 0.0
        %878 = vmatpush1.msra.mxu0 0.0
        %879 = vmatprep.subr.mxu0 0.0
        %880 = vmatpush1.msra.mxu0 0.0
        %881 = vmatprep.subr.mxu0 0.0
        %882 = vmatpush1.msra.mxu0 0.0
        %883 = vmatprep.subr.mxu0 0.0
        %884 = vmatpush1.msra.mxu0 0.0
        %885 = vmatprep.subr.mxu0 0.0
        %886 = vmatpush1.msra.mxu0 0.0
        %887 = vmatprep.subr.mxu0 0.0
        %888 = vmatpush1.msra.mxu0 0.0
        %889 = vmatprep.mubr.f32.mxu0 0.0
        %890 = vmatmul.mubr.f32.gmra.mrb[0].mxu0 %v820
        %v891 = vpop.f32.mrb[0].mxu0
        %v892 = vadd.f32 0.0, %v891
        %v893 = vpop.f32.mrb[0].mxu0
        %894 = vmatprep.mubr.f32.mxu0 0.0
        %895 = vmatmul.mubr.f32.gmra.mrb[0].mxu0 %v823
        %v896 = vpop.f32.mrb[0].mxu0
        %v897 = vadd.f32 0.0, %v896
        %v898 = vpop.f32.mrb[0].mxu0
        %899 = vdwg.mxu0
        %902 = vrot.lane.b32.xlu0 %v892, 8
        %v903 = vpop.permute.xlu0 %902
        %904 = vrot.lane.b32.xlu0 %v897, 8
        %v905 = vpop.permute.xlu0 %904
        %vm908 = vcmask 130112
        %909 = vst.msk [vmem:[#allocation3] sm:$0xff] %vm908, %v903
        %910 = vst.msk [vmem:[#allocation3 + $0x8] sm:$0xff] %vm908, %v905
        %v911 = vld [vmem:[#allocation2] sm:$0xff]
        %v912 = vld [vmem:[#allocation2 + $0x8] sm:$0xff]
        %913 = vrot.lane.b32.xlu0 %v486, 112
        %v914 = vpop.permute.xlu0 %913
        %915 = vrot.lane.b32.xlu0 %v491, 112
        %v916 = vpop.permute.xlu0 %915
        %919 = vrot.lane.b32.xlu0 %v911, 112
        %v920 = vpop.permute.xlu0 %919
        %921 = vrot.lane.b32.xlu0 %v912, 112
        %v922 = vpop.permute.xlu0 %921
        %v923 = vsel %vm496, %v914, 0
        %v925 = vsel %vm496, %v916, 0
        %v927 = vsel %vm496, %v920, 0
        %v929 = vsel %vm496, %v922, 0
        %931 = vmatprep.subr.mxu0 0.0
        %932 = vmatpush1.xpose.msra.mxu0 %v927
        %933 = vmatprep.subr.mxu0 0.0
        %934 = vmatpush1.xpose.msra.mxu0 %v929
        %935 = vmatprep.subr.mxu0 0.0
        %936 = vmatpush1.xpose.msra.mxu0 0.0
        %937 = vmatprep.subr.mxu0 0.0
        %938 = vmatpush1.xpose.msra.mxu0 0.0
        %939 = vmatprep.subr.mxu0 0.0
        %940 = vmatpush1.xpose.msra.mxu0 0.0
        %941 = vmatprep.subr.mxu0 0.0
        %942 = vmatpush1.xpose.msra.mxu0 0.0
        %943 = vmatprep.subr.mxu0 0.0
        %944 = vmatpush1.xpose.msra.mxu0 0.0
        %945 = vmatprep.subr.mxu0 0.0
        %946 = vmatpush1.xpose.msra.mxu0 0.0
        %947 = vmatprep.subr.mxu0 0.0
        %948 = vmatpush1.xpose.msra.mxu0 0.0
        %949 = vmatprep.subr.mxu0 0.0
        %950 = vmatpush1.xpose.msra.mxu0 0.0
        %951 = vmatprep.subr.mxu0 0.0
        %952 = vmatpush1.xpose.msra.mxu0 0.0
        %953 = vmatprep.subr.mxu0 0.0
        %954 = vmatpush1.xpose.msra.mxu0 0.0
        %955 = vmatprep.subr.mxu0 0.0
        %956 = vmatpush1.xpose.msra.mxu0 0.0
        %957 = vmatprep.subr.mxu0 0.0
        %958 = vmatpush1.xpose.msra.mxu0 0.0
        %959 = vmatprep.subr.mxu0 0.0
        %960 = vmatpush1.xpose.msra.mxu0 0.0
        %961 = vmatprep.subr.mxu0 0.0
        %962 = vmatpush1.xpose.msra.mxu0 0.0
        %963 = vmatprep.subr.mxu0 0.0
        %964 = vmatpush1.xpose.msra.mxu0 0.0
        %965 = vmatprep.subr.mxu0 0.0
        %966 = vmatpush1.xpose.msra.mxu0 0.0
        %967 = vmatprep.subr.mxu0 0.0
        %968 = vmatpush1.xpose.msra.mxu0 0.0
        %969 = vmatprep.subr.mxu0 0.0
        %970 = vmatpush1.xpose.msra.mxu0 0.0
        %971 = vmatprep.subr.mxu0 0.0
        %972 = vmatpush1.xpose.msra.mxu0 0.0
        %973 = vmatprep.subr.mxu0 0.0
        %974 = vmatpush1.xpose.msra.mxu0 0.0
        %975 = vmatprep.subr.mxu0 0.0
        %976 = vmatpush1.xpose.msra.mxu0 0.0
        %977 = vmatprep.subr.mxu0 0.0
        %978 = vmatpush1.xpose.msra.mxu0 0.0
        %979 = vmatprep.subr.mxu0 0.0
        %980 = vmatpush1.xpose.msra.mxu0 0.0
        %981 = vmatprep.subr.mxu0 0.0
        %982 = vmatpush1.xpose.msra.mxu0 0.0
        %983 = vmatprep.subr.mxu0 0.0
        %984 = vmatpush1.xpose.msra.mxu0 0.0
        %985 = vmatprep.subr.mxu0 0.0
        %986 = vmatpush1.xpose.msra.mxu0 0.0
        %987 = vmatprep.subr.mxu0 0.0
        %988 = vmatpush1.xpose.msra.mxu0 0.0
        %989 = vmatprep.subr.mxu0 0.0
        %990 = vmatpush1.xpose.msra.mxu0 0.0
        %991 = vmatprep.subr.mxu0 0.0
        %992 = vmatpush1.xpose.msra.mxu0 0.0
        %993 = vmatprep.subr.mxu0 0.0
        %994 = vmatpush1.xpose.msra.mxu0 0.0
        %995 = vmatprep.mubr.f32.mxu0 0.0
        %996 = vmatmul.mubr.f32.gmra.mrb[0].mxu0 %v923
        %v997 = vpop.f32.mrb[0].mxu0
        %v998 = vadd.f32 0.0, %v997
        %v999 = vpop.f32.mrb[0].mxu0
        %1000 = vmatprep.mubr.f32.mxu0 0.0
        %1001 = vmatmul.mubr.f32.gmra.mrb[0].mxu0 %v925
        %v1002 = vpop.f32.mrb[0].mxu0
        %v1003 = vadd.f32 0.0, %v1002
        %v1004 = vpop.f32.mrb[0].mxu0
        %1005 = vdwg.mxu0
        %v1006 = vsel %vm584, %v998, -inf
        %1007 = vmax.xlane.f32.xlu0 %v1006
        %v1008 = vpop.xlane.xlu0 %1007
        %v1009 = vsel %vm584, %v1003, -inf
        %1010 = vmax.xlane.f32.xlu0 %v1009
        %v1011 = vpop.xlane.xlu0 %1010
        %v1012 = vsub.f32 %v998, %v1008
        %v1013 = vsub.f32 %v1003, %v1011
        %v1014 = vmul.f32 %v1012, 1.442695
        %v1015 = vpow.pop %v1014
        %v1016 = vmul.f32 %v1013, 1.442695
        %v1017 = vpow.pop %v1016
        %v1018 = vsel %vm584, %v1015, 0.0
        %1019 = vadd.xlane.f32.xlu0 %v1018
        %v1020 = vpop.xlane.xlu0 %1019
        %v1021 = vsel %vm584, %v1017, 0.0
        %1022 = vadd.xlane.f32.xlu0 %v1021
        %v1023 = vpop.xlane.xlu0 %1022
        %v1024 = vrcp.pop %v1020
        %v1025 = vrcp.pop %v1023
        %v1026 = vmul.f32 %v1015, %v1024
        %v1027 = vmul.f32 %v1017, %v1025
        %1028 = vrot.lane.b32.xlu0 %v911, 48
        %v1029 = vpop.permute.xlu0 %1028
        %1030 = vrot.lane.b32.xlu0 %v912, 48
        %v1031 = vpop.permute.xlu0 %1030
        %v1035 = vsel %vm584, %v1026, 0
        %v1038 = vsel %vm584, %v1027, 0
        %1040 = vmatprep.subr.mxu0 0.0
        %1041 = vmatpush1.msra.mxu0 %v1029
        %1042 = vmatprep.subr.mxu0 0.0
        %1043 = vmatpush1.msra.mxu0 %v1031
        %1044 = vmatprep.subr.mxu0 0.0
        %1045 = vmatpush1.msra.mxu0 0.0
        %1046 = vmatprep.subr.mxu0 0.0
        %1047 = vmatpush1.msra.mxu0 0.0
        %1048 = vmatprep.subr.mxu0 0.0
        %1049 = vmatpush1.msra.mxu0 0.0
        %1050 = vmatprep.subr.mxu0 0.0
        %1051 = vmatpush1.msra.mxu0 0.0
        %1052 = vmatprep.subr.mxu0 0.0
        %1053 = vmatpush1.msra.mxu0 0.0
        %1054 = vmatprep.subr.mxu0 0.0
        %1055 = vmatpush1.msra.mxu0 0.0
        %1056 = vmatprep.subr.mxu0 0.0
        %1057 = vmatpush1.msra.mxu0 0.0
        %1058 = vmatprep.subr.mxu0 0.0
        %1059 = vmatpush1.msra.mxu0 0.0
        %1060 = vmatprep.subr.mxu0 0.0
        %1061 = vmatpush1.msra.mxu0 0.0
        %1062 = vmatprep.subr.mxu0 0.0
        %1063 = vmatpush1.msra.mxu0 0.0
        %1064 = vmatprep.subr.mxu0 0.0
        %1065 = vmatpush1.msra.mxu0 0.0
        %1066 = vmatprep.subr.mxu0 0.0
        %1067 = vmatpush1.msra.mxu0 0.0
        %1068 = vmatprep.subr.mxu0 0.0
        %1069 = vmatpush1.msra.mxu0 0.0
        %1070 = vmatprep.subr.mxu0 0.0
        %1071 = vmatpush1.msra.mxu0 0.0
        %1072 = vmatprep.subr.mxu0 0.0
        %1073 = vmatpush1.msra.mxu0 0.0
        %1074 = vmatprep.subr.mxu0 0.0
        %1075 = vmatpush1.msra.mxu0 0.0
        %1076 = vmatprep.subr.mxu0 0.0
        %1077 = vmatpush1.msra.mxu0 0.0
        %1078 = vmatprep.subr.mxu0 0.0
        %1079 = vmatpush1.msra.mxu0 0.0
        %1080 = vmatprep.subr.mxu0 0.0
        %1081 = vmatpush1.msra.mxu0 0.0
        %1082 = vmatprep.subr.mxu0 0.0
        %1083 = vmatpush1.msra.mxu0 0.0
        %1084 = vmatprep.subr.mxu0 0.0
        %1085 = vmatpush1.msra.mxu0 0.0
        %1086 = vmatprep.subr.mxu0 0.0
        %1087 = vmatpush1.msra.mxu0 0.0
        %1088 = vmatprep.subr.mxu0 0.0
        %1089 = vmatpush1.msra.mxu0 0.0
        %1090 = vmatprep.subr.mxu0 0.0
        %1091 = vmatpush1.msra.mxu0 0.0
        %1092 = vmatprep.subr.mxu0 0.0
        %1093 = vmatpush1.msra.mxu0 0.0
        %1094 = vmatprep.subr.mxu0 0.0
        %1095 = vmatpush1.msra.mxu0 0.0
        %1096 = vmatprep.subr.mxu0 0.0
        %1097 = vmatpush1.msra.mxu0 0.0
        %1098 = vmatprep.subr.mxu0 0.0
        %1099 = vmatpush1.msra.mxu0 0.0
        %1100 = vmatprep.subr.mxu0 0.0
        %1101 = vmatpush1.msra.mxu0 0.0
        %1102 = vmatprep.subr.mxu0 0.0
        %1103 = vmatpush1.msra.mxu0 0.0
        %1104 = vmatprep.mubr.f32.mxu0 0.0
        %1105 = vmatmul.mubr.f32.gmra.mrb[0].mxu0 %v1035
        %v1106 = vpop.f32.mrb[0].mxu0
        %v1107 = vadd.f32 0.0, %v1106
        %v1108 = vpop.f32.mrb[0].mxu0
        %1109 = vmatprep.mubr.f32.mxu0 0.0
        %1110 = vmatmul.mubr.f32.gmra.mrb[0].mxu0 %v1038
        %v1111 = vpop.f32.mrb[0].mxu0
        %v1112 = vadd.f32 0.0, %v1111
        %v1113 = vpop.f32.mrb[0].mxu0
        %1114 = vdwg.mxu0
        %1117 = vrot.lane.b32.xlu0 %v1107, 16
        %v1118 = vpop.permute.xlu0 %1117
        %1119 = vrot.lane.b32.xlu0 %v1112, 16
        %v1120 = vpop.permute.xlu0 %1119
        %vm1123 = vcmask 195712
        %1124 = vst.msk [vmem:[#allocation3] sm:$0xff] %vm1123, %v1118
        %1125 = vst.msk [vmem:[#allocation3 + $0x8] sm:$0xff] %vm1123, %v1120
        %v1126 = vld [vmem:[#allocation2] sm:$0xff]
        %v1127 = vld [vmem:[#allocation2 + $0x8] sm:$0xff]
        %1128 = vrot.lane.b32.xlu0 %v486, 104
        %v1129 = vpop.permute.xlu0 %1128
        %1130 = vrot.lane.b32.xlu0 %v491, 104
        %v1131 = vpop.permute.xlu0 %1130
        %1134 = vrot.lane.b32.xlu0 %v1126, 104
        %v1135 = vpop.permute.xlu0 %1134
        %1136 = vrot.lane.b32.xlu0 %v1127, 104
        %v1137 = vpop.permute.xlu0 %1136
        %v1138 = vsel %vm496, %v1129, 0
        %v1140 = vsel %vm496, %v1131, 0
        %v1142 = vsel %vm496, %v1135, 0
        %v1144 = vsel %vm496, %v1137, 0
        %1146 = vmatprep.subr.mxu0 0.0
        %1147 = vmatpush1.xpose.msra.mxu0 %v1142
        %1148 = vmatprep.subr.mxu0 0.0
        %1149 = vmatpush1.xpose.msra.mxu0 %v1144
        %1150 = vmatprep.subr.mxu0 0.0
        %1151 = vmatpush1.xpose.msra.mxu0 0.0
        %1152 = vmatprep.subr.mxu0 0.0
        %1153 = vmatpush1.xpose.msra.mxu0 0.0
        %1154 = vmatprep.subr.mxu0 0.0
        %1155 = vmatpush1.xpose.msra.mxu0 0.0
        %1156 = vmatprep.subr.mxu0 0.0
        %1157 = vmatpush1.xpose.msra.mxu0 0.0
        %1158 = vmatprep.subr.mxu0 0.0
        %1159 = vmatpush1.xpose.msra.mxu0 0.0
        %1160 = vmatprep.subr.mxu0 0.0
        %1161 = vmatpush1.xpose.msra.mxu0 0.0
        %1162 = vmatprep.subr.mxu0 0.0
        %1163 = vmatpush1.xpose.msra.mxu0 0.0
        %1164 = vmatprep.subr.mxu0 0.0
        %1165 = vmatpush1.xpose.msra.mxu0 0.0
        %1166 = vmatprep.subr.mxu0 0.0
        %1167 = vmatpush1.xpose.msra.mxu0 0.0
        %1168 = vmatprep.subr.mxu0 0.0
        %1169 = vmatpush1.xpose.msra.mxu0 0.0
        %1170 = vmatprep.subr.mxu0 0.0
        %1171 = vmatpush1.xpose.msra.mxu0 0.0
        %1172 = vmatprep.subr.mxu0 0.0
        %1173 = vmatpush1.xpose.msra.mxu0 0.0
        %1174 = vmatprep.subr.mxu0 0.0
        %1175 = vmatpush1.xpose.msra.mxu0 0.0
        %1176 = vmatprep.subr.mxu0 0.0
        %1177 = vmatpush1.xpose.msra.mxu0 0.0
        %1178 = vmatprep.subr.mxu0 0.0
        %1179 = vmatpush1.xpose.msra.mxu0 0.0
        %1180 = vmatprep.subr.mxu0 0.0
        %1181 = vmatpush1.xpose.msra.mxu0 0.0
        %1182 = vmatprep.subr.mxu0 0.0
        %1183 = vmatpush1.xpose.msra.mxu0 0.0
        %1184 = vmatprep.subr.mxu0 0.0
        %1185 = vmatpush1.xpose.msra.mxu0 0.0
        %1186 = vmatprep.subr.mxu0 0.0
        %1187 = vmatpush1.xpose.msra.mxu0 0.0
        %1188 = vmatprep.subr.mxu0 0.0
        %1189 = vmatpush1.xpose.msra.mxu0 0.0
        %1190 = vmatprep.subr.mxu0 0.0
        %1191 = vmatpush1.xpose.msra.mxu0 0.0
        %1192 = vmatprep.subr.mxu0 0.0
        %1193 = vmatpush1.xpose.msra.mxu0 0.0
        %1194 = vmatprep.subr.mxu0 0.0
        %1195 = vmatpush1.xpose.msra.mxu0 0.0
        %1196 = vmatprep.subr.mxu0 0.0
        %1197 = vmatpush1.xpose.msra.mxu0 0.0
        %1198 = vmatprep.subr.mxu0 0.0
        %1199 = vmatpush1.xpose.msra.mxu0 0.0
        %1200 = vmatprep.subr.mxu0 0.0
        %1201 = vmatpush1.xpose.msra.mxu0 0.0
        %1202 = vmatprep.subr.mxu0 0.0
        %1203 = vmatpush1.xpose.msra.mxu0 0.0
        %1204 = vmatprep.subr.mxu0 0.0
        %1205 = vmatpush1.xpose.msra.mxu0 0.0
        %1206 = vmatprep.subr.mxu0 0.0
        %1207 = vmatpush1.xpose.msra.mxu0 0.0
        %1208 = vmatprep.subr.mxu0 0.0
        %1209 = vmatpush1.xpose.msra.mxu0 0.0
        %1210 = vmatprep.mubr.f32.mxu0 0.0
        %1211 = vmatmul.mubr.f32.gmra.mrb[0].mxu0 %v1138
        %v1212 = vpop.f32.mrb[0].mxu0
        %v1213 = vadd.f32 0.0, %v1212
        %v1214 = vpop.f32.mrb[0].mxu0
        %1215 = vmatprep.mubr.f32.mxu0 0.0
        %1216 = vmatmul.mubr.f32.gmra.mrb[0].mxu0 %v1140
        %v1217 = vpop.f32.mrb[0].mxu0
        %v1218 = vadd.f32 0.0, %v1217
        %v1219 = vpop.f32.mrb[0].mxu0
        %1220 = vdwg.mxu0
        %v1221 = vsel %vm584, %v1213, -inf
        %1222 = vmax.xlane.f32.xlu0 %v1221
        %v1223 = vpop.xlane.xlu0 %1222
        %v1224 = vsel %vm584, %v1218, -inf
        %1225 = vmax.xlane.f32.xlu0 %v1224
        %v1226 = vpop.xlane.xlu0 %1225
        %v1227 = vsub.f32 %v1213, %v1223
        %v1228 = vsub.f32 %v1218, %v1226
        %v1229 = vmul.f32 %v1227, 1.442695
        %v1230 = vpow.pop %v1229
        %v1231 = vmul.f32 %v1228, 1.442695
        %v1232 = vpow.pop %v1231
        %v1233 = vsel %vm584, %v1230, 0.0
        %1234 = vadd.xlane.f32.xlu0 %v1233
        %v1235 = vpop.xlane.xlu0 %1234
        %v1236 = vsel %vm584, %v1232, 0.0
        %1237 = vadd.xlane.f32.xlu0 %v1236
        %v1238 = vpop.xlane.xlu0 %1237
        %v1239 = vrcp.pop %v1235
        %v1240 = vrcp.pop %v1238
        %v1241 = vmul.f32 %v1230, %v1239
        %v1242 = vmul.f32 %v1232, %v1240
        %1243 = vrot.lane.b32.xlu0 %v1126, 40
        %v1244 = vpop.permute.xlu0 %1243
        %1245 = vrot.lane.b32.xlu0 %v1127, 40
        %v1246 = vpop.permute.xlu0 %1245
        %v1250 = vsel %vm584, %v1241, 0
        %v1253 = vsel %vm584, %v1242, 0
        %1255 = vmatprep.subr.mxu0 0.0
        %1256 = vmatpush1.msra.mxu0 %v1244
        %1257 = vmatprep.subr.mxu0 0.0
        %1258 = vmatpush1.msra.mxu0 %v1246
        %1259 = vmatprep.subr.mxu0 0.0
        %1260 = vmatpush1.msra.mxu0 0.0
        %1261 = vmatprep.subr.mxu0 0.0
        %1262 = vmatpush1.msra.mxu0 0.0
        %1263 = vmatprep.subr.mxu0 0.0
        %1264 = vmatpush1.msra.mxu0 0.0
        %1265 = vmatprep.subr.mxu0 0.0
        %1266 = vmatpush1.msra.mxu0 0.0
        %1267 = vmatprep.subr.mxu0 0.0
        %1268 = vmatpush1.msra.mxu0 0.0
        %1269 = vmatprep.subr.mxu0 0.0
        %1270 = vmatpush1.msra.mxu0 0.0
        %1271 = vmatprep.subr.mxu0 0.0
        %1272 = vmatpush1.msra.mxu0 0.0
        %1273 = vmatprep.subr.mxu0 0.0
        %1274 = vmatpush1.msra.mxu0 0.0
        %1275 = vmatprep.subr.mxu0 0.0
        %1276 = vmatpush1.msra.mxu0 0.0
        %1277 = vmatprep.subr.mxu0 0.0
        %1278 = vmatpush1.msra.mxu0 0.0
        %1279 = vmatprep.subr.mxu0 0.0
        %1280 = vmatpush1.msra.mxu0 0.0
        %1281 = vmatprep.subr.mxu0 0.0
        %1282 = vmatpush1.msra.mxu0 0.0
        %1283 = vmatprep.subr.mxu0 0.0
        %1284 = vmatpush1.msra.mxu0 0.0
        %1285 = vmatprep.subr.mxu0 0.0
        %1286 = vmatpush1.msra.mxu0 0.0
        %1287 = vmatprep.subr.mxu0 0.0
        %1288 = vmatpush1.msra.mxu0 0.0
        %1289 = vmatprep.subr.mxu0 0.0
        %1290 = vmatpush1.msra.mxu0 0.0
        %1291 = vmatprep.subr.mxu0 0.0
        %1292 = vmatpush1.msra.mxu0 0.0
        %1293 = vmatprep.subr.mxu0 0.0
        %1294 = vmatpush1.msra.mxu0 0.0
        %1295 = vmatprep.subr.mxu0 0.0
        %1296 = vmatpush1.msra.mxu0 0.0
        %1297 = vmatprep.subr.mxu0 0.0
        %1298 = vmatpush1.msra.mxu0 0.0
        %1299 = vmatprep.subr.mxu0 0.0
        %1300 = vmatpush1.msra.mxu0 0.0
        %1301 = vmatprep.subr.mxu0 0.0
        %1302 = vmatpush1.msra.mxu0 0.0
        %1303 = vmatprep.subr.mxu0 0.0
        %1304 = vmatpush1.msra.mxu0 0.0
        %1305 = vmatprep.subr.mxu0 0.0
        %1306 = vmatpush1.msra.mxu0 0.0
        %1307 = vmatprep.subr.mxu0 0.0
        %1308 = vmatpush1.msra.mxu0 0.0
        %1309 = vmatprep.subr.mxu0 0.0
        %1310 = vmatpush1.msra.mxu0 0.0
        %1311 = vmatprep.subr.mxu0 0.0
        %1312 = vmatpush1.msra.mxu0 0.0
        %1313 = vmatprep.subr.mxu0 0.0
        %1314 = vmatpush1.msra.mxu0 0.0
        %1315 = vmatprep.subr.mxu0 0.0
        %1316 = vmatpush1.msra.mxu0 0.0
        %1317 = vmatprep.subr.mxu0 0.0
        %1318 = vmatpush1.msra.mxu0 0.0
        %1319 = vmatprep.mubr.f32.mxu0 0.0
        %1320 = vmatmul.mubr.f32.gmra.mrb[0].mxu0 %v1250
        %v1321 = vpop.f32.mrb[0].mxu0
        %v1322 = vadd.f32 0.0, %v1321
        %v1323 = vpop.f32.mrb[0].mxu0
        %1324 = vmatprep.mubr.f32.mxu0 0.0
        %1325 = vmatmul.mubr.f32.gmra.mrb[0].mxu0 %v1253
        %v1326 = vpop.f32.mrb[0].mxu0
        %v1327 = vadd.f32 0.0, %v1326
        %v1328 = vpop.f32.mrb[0].mxu0
        %1329 = vdwg.mxu0
        %1332 = vrot.lane.b32.xlu0 %v1322, 24
        %v1333 = vpop.permute.xlu0 %1332
        %1334 = vrot.lane.b32.xlu0 %v1327, 24
        %v1335 = vpop.permute.xlu0 %1334
        %vm1338 = vcmask 261312
        %1339 = vst.msk [vmem:[#allocation3] sm:$0xff] %vm1338, %v1333
        %1340 = vst.msk [vmem:[#allocation3 + $0x8] sm:$0xff] %vm1338, %v1335
        %v1341 = vld [vmem:[#allocation2] sm:$0xff]
        %v1342 = vld [vmem:[#allocation2 + $0x8] sm:$0xff]
        %1343 = vrot.lane.b32.xlu0 %v486, 96
        %v1344 = vpop.permute.xlu0 %1343
        %1345 = vrot.lane.b32.xlu0 %v491, 96
        %v1346 = vpop.permute.xlu0 %1345
        %1349 = vrot.lane.b32.xlu0 %v1341, 96
        %v1350 = vpop.permute.xlu0 %1349
        %1351 = vrot.lane.b32.xlu0 %v1342, 96
        %v1352 = vpop.permute.xlu0 %1351
        %v1353 = vsel %vm496, %v1344, 0
        %v1355 = vsel %vm496, %v1346, 0
        %v1357 = vsel %vm496, %v1350, 0
        %v1359 = vsel %vm496, %v1352, 0
        %1361 = vmatprep.subr.mxu0 0.0
        %1362 = vmatpush1.xpose.msra.mxu0 %v1357
        %1363 = vmatprep.subr.mxu0 0.0
        %1364 = vmatpush1.xpose.msra.mxu0 %v1359
        %1365 = vmatprep.subr.mxu0 0.0
        %1366 = vmatpush1.xpose.msra.mxu0 0.0
        %1367 = vmatprep.subr.mxu0 0.0
        %1368 = vmatpush1.xpose.msra.mxu0 0.0
        %1369 = vmatprep.subr.mxu0 0.0
        %1370 = vmatpush1.xpose.msra.mxu0 0.0
        %1371 = vmatprep.subr.mxu0 0.0
        %1372 = vmatpush1.xpose.msra.mxu0 0.0
        %1373 = vmatprep.subr.mxu0 0.0
        %1374 = vmatpush1.xpose.msra.mxu0 0.0
        %1375 = vmatprep.subr.mxu0 0.0
        %1376 = vmatpush1.xpose.msra.mxu0 0.0
        %1377 = vmatprep.subr.mxu0 0.0
        %1378 = vmatpush1.xpose.msra.mxu0 0.0
        %1379 = vmatprep.subr.mxu0 0.0
        %1380 = vmatpush1.xpose.msra.mxu0 0.0
        %1381 = vmatprep.subr.mxu0 0.0
        %1382 = vmatpush1.xpose.msra.mxu0 0.0
        %1383 = vmatprep.subr.mxu0 0.0
        %1384 = vmatpush1.xpose.msra.mxu0 0.0
        %1385 = vmatprep.subr.mxu0 0.0
        %1386 = vmatpush1.xpose.msra.mxu0 0.0
        %1387 = vmatprep.subr.mxu0 0.0
        %1388 = vmatpush1.xpose.msra.mxu0 0.0
        %1389 = vmatprep.subr.mxu0 0.0
        %1390 = vmatpush1.xpose.msra.mxu0 0.0
        %1391 = vmatprep.subr.mxu0 0.0
        %1392 = vmatpush1.xpose.msra.mxu0 0.0
        %1393 = vmatprep.subr.mxu0 0.0
        %1394 = vmatpush1.xpose.msra.mxu0 0.0
        %1395 = vmatprep.subr.mxu0 0.0
        %1396 = vmatpush1.xpose.msra.mxu0 0.0
        %1397 = vmatprep.subr.mxu0 0.0
        %1398 = vmatpush1.xpose.msra.mxu0 0.0
        %1399 = vmatprep.subr.mxu0 0.0
        %1400 = vmatpush1.xpose.msra.mxu0 0.0
        %1401 = vmatprep.subr.mxu0 0.0
        %1402 = vmatpush1.xpose.msra.mxu0 0.0
        %1403 = vmatprep.subr.mxu0 0.0
        %1404 = vmatpush1.xpose.msra.mxu0 0.0
        %1405 = vmatprep.subr.mxu0 0.0
        %1406 = vmatpush1.xpose.msra.mxu0 0.0
        %1407 = vmatprep.subr.mxu0 0.0
        %1408 = vmatpush1.xpose.msra.mxu0 0.0
        %1409 = vmatprep.subr.mxu0 0.0
        %1410 = vmatpush1.xpose.msra.mxu0 0.0
        %1411 = vmatprep.subr.mxu0 0.0
        %1412 = vmatpush1.xpose.msra.mxu0 0.0
        %1413 = vmatprep.subr.mxu0 0.0
        %1414 = vmatpush1.xpose.msra.mxu0 0.0
        %1415 = vmatprep.subr.mxu0 0.0
        %1416 = vmatpush1.xpose.msra.mxu0 0.0
        %1417 = vmatprep.subr.mxu0 0.0
        %1418 = vmatpush1.xpose.msra.mxu0 0.0
        %1419 = vmatprep.subr.mxu0 0.0
        %1420 = vmatpush1.xpose.msra.mxu0 0.0
        %1421 = vmatprep.subr.mxu0 0.0
        %1422 = vmatpush1.xpose.msra.mxu0 0.0
        %1423 = vmatprep.subr.mxu0 0.0
        %1424 = vmatpush1.xpose.msra.mxu0 0.0
        %1425 = vmatprep.mubr.f32.mxu0 0.0
        %1426 = vmatmul.mubr.f32.gmra.mrb[0].mxu0 %v1353
        %v1427 = vpop.f32.mrb[0].mxu0
        %v1428 = vadd.f32 0.0, %v1427
        %v1429 = vpop.f32.mrb[0].mxu0
        %1430 = vmatprep.mubr.f32.mxu0 0.0
        %1431 = vmatmul.mubr.f32.gmra.mrb[0].mxu0 %v1355
        %v1432 = vpop.f32.mrb[0].mxu0
        %v1433 = vadd.f32 0.0, %v1432
        %v1434 = vpop.f32.mrb[0].mxu0
        %1435 = vdwg.mxu0
        %v1436 = vsel %vm584, %v1428, -inf
        %1437 = vmax.xlane.f32.xlu0 %v1436
        %v1438 = vpop.xlane.xlu0 %1437
        %v1439 = vsel %vm584, %v1433, -inf
        %1440 = vmax.xlane.f32.xlu0 %v1439
        %v1441 = vpop.xlane.xlu0 %1440
        %v1442 = vsub.f32 %v1428, %v1438
        %v1443 = vsub.f32 %v1433, %v1441
        %v1444 = vmul.f32 %v1442, 1.442695
        %v1445 = vpow.pop %v1444
        %v1446 = vmul.f32 %v1443, 1.442695
        %v1447 = vpow.pop %v1446
        %v1448 = vsel %vm584, %v1445, 0.0
        %1449 = vadd.xlane.f32.xlu0 %v1448
        %v1450 = vpop.xlane.xlu0 %1449
        %v1451 = vsel %vm584, %v1447, 0.0
        %1452 = vadd.xlane.f32.xlu0 %v1451
        %v1453 = vpop.xlane.xlu0 %1452
        %v1454 = vrcp.pop %v1450
        %v1455 = vrcp.pop %v1453
        %v1456 = vmul.f32 %v1445, %v1454
        %v1457 = vmul.f32 %v1447, %v1455
        %1458 = vrot.lane.b32.xlu0 %v1341, 32
        %v1459 = vpop.permute.xlu0 %1458
        %1460 = vrot.lane.b32.xlu0 %v1342, 32
        %v1461 = vpop.permute.xlu0 %1460
        %v1465 = vsel %vm584, %v1456, 0
        %v1468 = vsel %vm584, %v1457, 0
        %1470 = vmatprep.subr.mxu0 0.0
        %1471 = vmatpush1.msra.mxu0 %v1459
        %1472 = vmatprep.subr.mxu0 0.0
        %1473 = vmatpush1.msra.mxu0 %v1461
        %1474 = vmatprep.subr.mxu0 0.0
        %1475 = vmatpush1.msra.mxu0 0.0
        %1476 = vmatprep.subr.mxu0 0.0
        %1477 = vmatpush1.msra.mxu0 0.0
        %1478 = vmatprep.subr.mxu0 0.0
        %1479 = vmatpush1.msra.mxu0 0.0
        %1480 = vmatprep.subr.mxu0 0.0
        %1481 = vmatpush1.msra.mxu0 0.0
        %1482 = vmatprep.subr.mxu0 0.0
        %1483 = vmatpush1.msra.mxu0 0.0
        %1484 = vmatprep.subr.mxu0 0.0
        %1485 = vmatpush1.msra.mxu0 0.0
        %1486 = vmatprep.subr.mxu0 0.0
        %1487 = vmatpush1.msra.mxu0 0.0
        %1488 = vmatprep.subr.mxu0 0.0
        %1489 = vmatpush1.msra.mxu0 0.0
        %1490 = vmatprep.subr.mxu0 0.0
        %1491 = vmatpush1.msra.mxu0 0.0
        %1492 = vmatprep.subr.mxu0 0.0
        %1493 = vmatpush1.msra.mxu0 0.0
        %1494 = vmatprep.subr.mxu0 0.0
        %1495 = vmatpush1.msra.mxu0 0.0
        %1496 = vmatprep.subr.mxu0 0.0
        %1497 = vmatpush1.msra.mxu0 0.0
        %1498 = vmatprep.subr.mxu0 0.0
        %1499 = vmatpush1.msra.mxu0 0.0
        %1500 = vmatprep.subr.mxu0 0.0
        %1501 = vmatpush1.msra.mxu0 0.0
        %1502 = vmatprep.subr.mxu0 0.0
        %1503 = vmatpush1.msra.mxu0 0.0
        %1504 = vmatprep.subr.mxu0 0.0
        %1505 = vmatpush1.msra.mxu0 0.0
        %1506 = vmatprep.subr.mxu0 0.0
        %1507 = vmatpush1.msra.mxu0 0.0
        %1508 = vmatprep.subr.mxu0 0.0
        %1509 = vmatpush1.msra.mxu0 0.0
        %1510 = vmatprep.subr.mxu0 0.0
        %1511 = vmatpush1.msra.mxu0 0.0
        %1512 = vmatprep.subr.mxu0 0.0
        %1513 = vmatpush1.msra.mxu0 0.0
        %1514 = vmatprep.subr.mxu0 0.0
        %1515 = vmatpush1.msra.mxu0 0.0
        %1516 = vmatprep.subr.mxu0 0.0
        %1517 = vmatpush1.msra.mxu0 0.0
        %1518 = vmatprep.subr.mxu0 0.0
        %1519 = vmatpush1.msra.mxu0 0.0
        %1520 = vmatprep.subr.mxu0 0.0
        %1521 = vmatpush1.msra.mxu0 0.0
        %1522 = vmatprep.subr.mxu0 0.0
        %1523 = vmatpush1.msra.mxu0 0.0
        %1524 = vmatprep.subr.mxu0 0.0
        %1525 = vmatpush1.msra.mxu0 0.0
        %1526 = vmatprep.subr.mxu0 0.0
        %1527 = vmatpush1.msra.mxu0 0.0
        %1528 = vmatprep.subr.mxu0 0.0
        %1529 = vmatpush1.msra.mxu0 0.0
        %1530 = vmatprep.subr.mxu0 0.0
        %1531 = vmatpush1.msra.mxu0 0.0
        %1532 = vmatprep.subr.mxu0 0.0
        %1533 = vmatpush1.msra.mxu0 0.0
        %1534 = vmatprep.mubr.f32.mxu0 0.0
        %1535 = vmatmul.mubr.f32.gmra.mrb[0].mxu0 %v1465
        %v1536 = vpop.f32.mrb[0].mxu0
        %v1537 = vadd.f32 0.0, %v1536
        %v1538 = vpop.f32.mrb[0].mxu0
        %1539 = vmatprep.mubr.f32.mxu0 0.0
        %1540 = vmatmul.mubr.f32.gmra.mrb[0].mxu0 %v1468
        %v1541 = vpop.f32.mrb[0].mxu0
        %v1542 = vadd.f32 0.0, %v1541
        %v1543 = vpop.f32.mrb[0].mxu0
        %1544 = vdwg.mxu0
        %1547 = vrot.lane.b32.xlu0 %v1537, 32
        %v1548 = vpop.permute.xlu0 %1547
        %1549 = vrot.lane.b32.xlu0 %v1542, 32
        %v1550 = vpop.permute.xlu0 %1549
        %vm1553 = vcmask 326912
        %1554 = vst.msk [vmem:[#allocation3] sm:$0xff] %vm1553, %v1548
        %1555 = vst.msk [vmem:[#allocation3 + $0x8] sm:$0xff] %vm1553, %v1550
        %v1556 = vld [vmem:[#allocation2] sm:$0xff]
        %v1557 = vld [vmem:[#allocation2 + $0x8] sm:$0xff]
        %1558 = vrot.lane.b32.xlu0 %v486, 88
        %v1559 = vpop.permute.xlu0 %1558
        %1560 = vrot.lane.b32.xlu0 %v491, 88
        %v1561 = vpop.permute.xlu0 %1560
        %1564 = vrot.lane.b32.xlu0 %v1556, 88
        %v1565 = vpop.permute.xlu0 %1564
        %1566 = vrot.lane.b32.xlu0 %v1557, 88
        %v1567 = vpop.permute.xlu0 %1566
        %v1568 = vsel %vm496, %v1559, 0
        %v1570 = vsel %vm496, %v1561, 0
        %v1572 = vsel %vm496, %v1565, 0
        %v1574 = vsel %vm496, %v1567, 0
        %1576 = vmatprep.subr.mxu0 0.0
        %1577 = vmatpush1.xpose.msra.mxu0 %v1572
        %1578 = vmatprep.subr.mxu0 0.0
        %1579 = vmatpush1.xpose.msra.mxu0 %v1574
        %1580 = vmatprep.subr.mxu0 0.0
        %1581 = vmatpush1.xpose.msra.mxu0 0.0
        %1582 = vmatprep.subr.mxu0 0.0
        %1583 = vmatpush1.xpose.msra.mxu0 0.0
        %1584 = vmatprep.subr.mxu0 0.0
        %1585 = vmatpush1.xpose.msra.mxu0 0.0
        %1586 = vmatprep.subr.mxu0 0.0
        %1587 = vmatpush1.xpose.msra.mxu0 0.0
        %1588 = vmatprep.subr.mxu0 0.0
        %1589 = vmatpush1.xpose.msra.mxu0 0.0
        %1590 = vmatprep.subr.mxu0 0.0
        %1591 = vmatpush1.xpose.msra.mxu0 0.0
        %1592 = vmatprep.subr.mxu0 0.0
        %1593 = vmatpush1.xpose.msra.mxu0 0.0
        %1594 = vmatprep.subr.mxu0 0.0
        %1595 = vmatpush1.xpose.msra.mxu0 0.0
        %1596 = vmatprep.subr.mxu0 0.0
        %1597 = vmatpush1.xpose.msra.mxu0 0.0
        %1598 = vmatprep.subr.mxu0 0.0
        %1599 = vmatpush1.xpose.msra.mxu0 0.0
        %1600 = vmatprep.subr.mxu0 0.0
        %1601 = vmatpush1.xpose.msra.mxu0 0.0
        %1602 = vmatprep.subr.mxu0 0.0
        %1603 = vmatpush1.xpose.msra.mxu0 0.0
        %1604 = vmatprep.subr.mxu0 0.0
        %1605 = vmatpush1.xpose.msra.mxu0 0.0
        %1606 = vmatprep.subr.mxu0 0.0
        %1607 = vmatpush1.xpose.msra.mxu0 0.0
        %1608 = vmatprep.subr.mxu0 0.0
        %1609 = vmatpush1.xpose.msra.mxu0 0.0
        %1610 = vmatprep.subr.mxu0 0.0
        %1611 = vmatpush1.xpose.msra.mxu0 0.0
        %1612 = vmatprep.subr.mxu0 0.0
        %1613 = vmatpush1.xpose.msra.mxu0 0.0
        %1614 = vmatprep.subr.mxu0 0.0
        %1615 = vmatpush1.xpose.msra.mxu0 0.0
        %1616 = vmatprep.subr.mxu0 0.0
        %1617 = vmatpush1.xpose.msra.mxu0 0.0
        %1618 = vmatprep.subr.mxu0 0.0
        %1619 = vmatpush1.xpose.msra.mxu0 0.0
        %1620 = vmatprep.subr.mxu0 0.0
        %1621 = vmatpush1.xpose.msra.mxu0 0.0
        %1622 = vmatprep.subr.mxu0 0.0
        %1623 = vmatpush1.xpose.msra.mxu0 0.0
        %1624 = vmatprep.subr.mxu0 0.0
        %1625 = vmatpush1.xpose.msra.mxu0 0.0
        %1626 = vmatprep.subr.mxu0 0.0
        %1627 = vmatpush1.xpose.msra.mxu0 0.0
        %1628 = vmatprep.subr.mxu0 0.0
        %1629 = vmatpush1.xpose.msra.mxu0 0.0
        %1630 = vmatprep.subr.mxu0 0.0
        %1631 = vmatpush1.xpose.msra.mxu0 0.0
        %1632 = vmatprep.subr.mxu0 0.0
        %1633 = vmatpush1.xpose.msra.mxu0 0.0
        %1634 = vmatprep.subr.mxu0 0.0
        %1635 = vmatpush1.xpose.msra.mxu0 0.0
        %1636 = vmatprep.subr.mxu0 0.0
        %1637 = vmatpush1.xpose.msra.mxu0 0.0
        %1638 = vmatprep.subr.mxu0 0.0
        %1639 = vmatpush1.xpose.msra.mxu0 0.0
        %1640 = vmatprep.mubr.f32.mxu0 0.0
        %1641 = vmatmul.mubr.f32.gmra.mrb[0].mxu0 %v1568
        %v1642 = vpop.f32.mrb[0].mxu0
        %v1643 = vadd.f32 0.0, %v1642
        %v1644 = vpop.f32.mrb[0].mxu0
        %1645 = vmatprep.mubr.f32.mxu0 0.0
        %1646 = vmatmul.mubr.f32.gmra.mrb[0].mxu0 %v1570
        %v1647 = vpop.f32.mrb[0].mxu0
        %v1648 = vadd.f32 0.0, %v1647
        %v1649 = vpop.f32.mrb[0].mxu0
        %1650 = vdwg.mxu0
        %v1651 = vsel %vm584, %v1643, -inf
        %1652 = vmax.xlane.f32.xlu0 %v1651
        %v1653 = vpop.xlane.xlu0 %1652
        %v1654 = vsel %vm584, %v1648, -inf
        %1655 = vmax.xlane.f32.xlu0 %v1654
        %v1656 = vpop.xlane.xlu0 %1655
        %v1657 = vsub.f32 %v1643, %v1653
        %v1658 = vsub.f32 %v1648, %v1656
        %v1659 = vmul.f32 %v1657, 1.442695
        %v1660 = vpow.pop %v1659
        %v1661 = vmul.f32 %v1658, 1.442695
        %v1662 = vpow.pop %v1661
        %v1663 = vsel %vm584, %v1660, 0.0
        %1664 = vadd.xlane.f32.xlu0 %v1663
        %v1665 = vpop.xlane.xlu0 %1664
        %v1666 = vsel %vm584, %v1662, 0.0
        %1667 = vadd.xlane.f32.xlu0 %v1666
        %v1668 = vpop.xlane.xlu0 %1667
        %v1669 = vrcp.pop %v1665
        %v1670 = vrcp.pop %v1668
        %v1671 = vmul.f32 %v1660, %v1669
        %v1672 = vmul.f32 %v1662, %v1670
        %1673 = vrot.lane.b32.xlu0 %v1556, 24
        %v1674 = vpop.permute.xlu0 %1673
        %1675 = vrot.lane.b32.xlu0 %v1557, 24
        %v1676 = vpop.permute.xlu0 %1675
        %v1680 = vsel %vm584, %v1671, 0
        %v1683 = vsel %vm584, %v1672, 0
        %1685 = vmatprep.subr.mxu0 0.0
        %1686 = vmatpush1.msra.mxu0 %v1674
        %1687 = vmatprep.subr.mxu0 0.0
        %1688 = vmatpush1.msra.mxu0 %v1676
        %1689 = vmatprep.subr.mxu0 0.0
        %1690 = vmatpush1.msra.mxu0 0.0
        %1691 = vmatprep.subr.mxu0 0.0
        %1692 = vmatpush1.msra.mxu0 0.0
        %1693 = vmatprep.subr.mxu0 0.0
        %1694 = vmatpush1.msra.mxu0 0.0
        %1695 = vmatprep.subr.mxu0 0.0
        %1696 = vmatpush1.msra.mxu0 0.0
        %1697 = vmatprep.subr.mxu0 0.0
        %1698 = vmatpush1.msra.mxu0 0.0
        %1699 = vmatprep.subr.mxu0 0.0
        %1700 = vmatpush1.msra.mxu0 0.0
        %1701 = vmatprep.subr.mxu0 0.0
        %1702 = vmatpush1.msra.mxu0 0.0
        %1703 = vmatprep.subr.mxu0 0.0
        %1704 = vmatpush1.msra.mxu0 0.0
        %1705 = vmatprep.subr.mxu0 0.0
        %1706 = vmatpush1.msra.mxu0 0.0
        %1707 = vmatprep.subr.mxu0 0.0
        %1708 = vmatpush1.msra.mxu0 0.0
        %1709 = vmatprep.subr.mxu0 0.0
        %1710 = vmatpush1.msra.mxu0 0.0
        %1711 = vmatprep.subr.mxu0 0.0
        %1712 = vmatpush1.msra.mxu0 0.0
        %1713 = vmatprep.subr.mxu0 0.0
        %1714 = vmatpush1.msra.mxu0 0.0
        %1715 = vmatprep.subr.mxu0 0.0
        %1716 = vmatpush1.msra.mxu0 0.0
        %1717 = vmatprep.subr.mxu0 0.0
        %1718 = vmatpush1.msra.mxu0 0.0
        %1719 = vmatprep.subr.mxu0 0.0
        %1720 = vmatpush1.msra.mxu0 0.0
        %1721 = vmatprep.subr.mxu0 0.0
        %1722 = vmatpush1.msra.mxu0 0.0
        %1723 = vmatprep.subr.mxu0 0.0
        %1724 = vmatpush1.msra.mxu0 0.0
        %1725 = vmatprep.subr.mxu0 0.0
        %1726 = vmatpush1.msra.mxu0 0.0
        %1727 = vmatprep.subr.mxu0 0.0
        %1728 = vmatpush1.msra.mxu0 0.0
        %1729 = vmatprep.subr.mxu0 0.0
        %1730 = vmatpush1.msra.mxu0 0.0
        %1731 = vmatprep.subr.mxu0 0.0
        %1732 = vmatpush1.msra.mxu0 0.0
        %1733 = vmatprep.subr.mxu0 0.0
        %1734 = vmatpush1.msra.mxu0 0.0
        %1735 = vmatprep.subr.mxu0 0.0
        %1736 = vmatpush1.msra.mxu0 0.0
        %1737 = vmatprep.subr.mxu0 0.0
        %1738 = vmatpush1.msra.mxu0 0.0
        %1739 = vmatprep.subr.mxu0 0.0
        %1740 = vmatpush1.msra.mxu0 0.0
        %1741 = vmatprep.subr.mxu0 0.0
        %1742 = vmatpush1.msra.mxu0 0.0
        %1743 = vmatprep.subr.mxu0 0.0
        %1744 = vmatpush1.msra.mxu0 0.0
        %1745 = vmatprep.subr.mxu0 0.0
        %1746 = vmatpush1.msra.mxu0 0.0
        %1747 = vmatprep.subr.mxu0 0.0
        %1748 = vmatpush1.msra.mxu0 0.0
        %1749 = vmatprep.mubr.f32.mxu0 0.0
        %1750 = vmatmul.mubr.f32.gmra.mrb[0].mxu0 %v1680
        %v1751 = vpop.f32.mrb[0].mxu0
        %v1752 = vadd.f32 0.0, %v1751
        %v1753 = vpop.f32.mrb[0].mxu0
        %1754 = vmatprep.mubr.f32.mxu0 0.0
        %1755 = vmatmul.mubr.f32.gmra.mrb[0].mxu0 %v1683
        %v1756 = vpop.f32.mrb[0].mxu0
        %v1757 = vadd.f32 0.0, %v1756
        %v1758 = vpop.f32.mrb[0].mxu0
        %1759 = vdwg.mxu0
        %1762 = vrot.lane.b32.xlu0 %v1752, 40
        %v1763 = vpop.permute.xlu0 %1762
        %1764 = vrot.lane.b32.xlu0 %v1757, 40
        %v1765 = vpop.permute.xlu0 %1764
        %vm1768 = vcmask 392512
        %1769 = vst.msk [vmem:[#allocation3] sm:$0xff] %vm1768, %v1763
        %1770 = vst.msk [vmem:[#allocation3 + $0x8] sm:$0xff] %vm1768, %v1765
        %v1771 = vld [vmem:[#allocation2] sm:$0xff]
        %v1772 = vld [vmem:[#allocation2 + $0x8] sm:$0xff]
        %1773 = vrot.lane.b32.xlu0 %v486, 80
        %v1774 = vpop.permute.xlu0 %1773
        %1775 = vrot.lane.b32.xlu0 %v491, 80
        %v1776 = vpop.permute.xlu0 %1775
        %1779 = vrot.lane.b32.xlu0 %v1771, 80
        %v1780 = vpop.permute.xlu0 %1779
        %1781 = vrot.lane.b32.xlu0 %v1772, 80
        %v1782 = vpop.permute.xlu0 %1781
        %v1783 = vsel %vm496, %v1774, 0
        %v1785 = vsel %vm496, %v1776, 0
        %v1787 = vsel %vm496, %v1780, 0
        %v1789 = vsel %vm496, %v1782, 0
        %1791 = vmatprep.subr.mxu0 0.0
        %1792 = vmatpush1.xpose.msra.mxu0 %v1787
        %1793 = vmatprep.subr.mxu0 0.0
        %1794 = vmatpush1.xpose.msra.mxu0 %v1789
        %1795 = vmatprep.subr.mxu0 0.0
        %1796 = vmatpush1.xpose.msra.mxu0 0.0
        %1797 = vmatprep.subr.mxu0 0.0
        %1798 = vmatpush1.xpose.msra.mxu0 0.0
        %1799 = vmatprep.subr.mxu0 0.0
        %1800 = vmatpush1.xpose.msra.mxu0 0.0
        %1801 = vmatprep.subr.mxu0 0.0
        %1802 = vmatpush1.xpose.msra.mxu0 0.0
        %1803 = vmatprep.subr.mxu0 0.0
        %1804 = vmatpush1.xpose.msra.mxu0 0.0
        %1805 = vmatprep.subr.mxu0 0.0
        %1806 = vmatpush1.xpose.msra.mxu0 0.0
        %1807 = vmatprep.subr.mxu0 0.0
        %1808 = vmatpush1.xpose.msra.mxu0 0.0
        %1809 = vmatprep.subr.mxu0 0.0
        %1810 = vmatpush1.xpose.msra.mxu0 0.0
        %1811 = vmatprep.subr.mxu0 0.0
        %1812 = vmatpush1.xpose.msra.mxu0 0.0
        %1813 = vmatprep.subr.mxu0 0.0
        %1814 = vmatpush1.xpose.msra.mxu0 0.0
        %1815 = vmatprep.subr.mxu0 0.0
        %1816 = vmatpush1.xpose.msra.mxu0 0.0
        %1817 = vmatprep.subr.mxu0 0.0
        %1818 = vmatpush1.xpose.msra.mxu0 0.0
        %1819 = vmatprep.subr.mxu0 0.0
        %1820 = vmatpush1.xpose.msra.mxu0 0.0
        %1821 = vmatprep.subr.mxu0 0.0
        %1822 = vmatpush1.xpose.msra.mxu0 0.0
        %1823 = vmatprep.subr.mxu0 0.0
        %1824 = vmatpush1.xpose.msra.mxu0 0.0
        %1825 = vmatprep.subr.mxu0 0.0
        %1826 = vmatpush1.xpose.msra.mxu0 0.0
        %1827 = vmatprep.subr.mxu0 0.0
        %1828 = vmatpush1.xpose.msra.mxu0 0.0
        %1829 = vmatprep.subr.mxu0 0.0
        %1830 = vmatpush1.xpose.msra.mxu0 0.0
        %1831 = vmatprep.subr.mxu0 0.0
        %1832 = vmatpush1.xpose.msra.mxu0 0.0
        %1833 = vmatprep.subr.mxu0 0.0
        %1834 = vmatpush1.xpose.msra.mxu0 0.0
        %1835 = vmatprep.subr.mxu0 0.0
        %1836 = vmatpush1.xpose.msra.mxu0 0.0
        %1837 = vmatprep.subr.mxu0 0.0
        %1838 = vmatpush1.xpose.msra.mxu0 0.0
        %1839 = vmatprep.subr.mxu0 0.0
        %1840 = vmatpush1.xpose.msra.mxu0 0.0
        %1841 = vmatprep.subr.mxu0 0.0
        %1842 = vmatpush1.xpose.msra.mxu0 0.0
        %1843 = vmatprep.subr.mxu0 0.0
        %1844 = vmatpush1.xpose.msra.mxu0 0.0
        %1845 = vmatprep.subr.mxu0 0.0
        %1846 = vmatpush1.xpose.msra.mxu0 0.0
        %1847 = vmatprep.subr.mxu0 0.0
        %1848 = vmatpush1.xpose.msra.mxu0 0.0
        %1849 = vmatprep.subr.mxu0 0.0
        %1850 = vmatpush1.xpose.msra.mxu0 0.0
        %1851 = vmatprep.subr.mxu0 0.0
        %1852 = vmatpush1.xpose.msra.mxu0 0.0
        %1853 = vmatprep.subr.mxu0 0.0
        %1854 = vmatpush1.xpose.msra.mxu0 0.0
        %1855 = vmatprep.mubr.f32.mxu0 0.0
        %1856 = vmatmul.mubr.f32.gmra.mrb[0].mxu0 %v1783
        %v1857 = vpop.f32.mrb[0].mxu0
        %v1858 = vadd.f32 0.0, %v1857
        %v1859 = vpop.f32.mrb[0].mxu0
        %1860 = vmatprep.mubr.f32.mxu0 0.0
        %1861 = vmatmul.mubr.f32.gmra.mrb[0].mxu0 %v1785
        %v1862 = vpop.f32.mrb[0].mxu0
        %v1863 = vadd.f32 0.0, %v1862
        %v1864 = vpop.f32.mrb[0].mxu0
        %1865 = vdwg.mxu0
        %v1866 = vsel %vm584, %v1858, -inf
        %1867 = vmax.xlane.f32.xlu0 %v1866
        %v1868 = vpop.xlane.xlu0 %1867
        %v1869 = vsel %vm584, %v1863, -inf
        %1870 = vmax.xlane.f32.xlu0 %v1869
        %v1871 = vpop.xlane.xlu0 %1870
        %v1872 = vsub.f32 %v1858, %v1868
        %v1873 = vsub.f32 %v1863, %v1871
        %v1874 = vmul.f32 %v1872, 1.442695
        %v1875 = vpow.pop %v1874
        %v1876 = vmul.f32 %v1873, 1.442695
        %v1877 = vpow.pop %v1876
        %v1878 = vsel %vm584, %v1875, 0.0
        %1879 = vadd.xlane.f32.xlu0 %v1878
        %v1880 = vpop.xlane.xlu0 %1879
        %v1881 = vsel %vm584, %v1877, 0.0
        %1882 = vadd.xlane.f32.xlu0 %v1881
        %v1883 = vpop.xlane.xlu0 %1882
        %v1884 = vrcp.pop %v1880
        %v1885 = vrcp.pop %v1883
        %v1886 = vmul.f32 %v1875, %v1884
        %v1887 = vmul.f32 %v1877, %v1885
        %1888 = vrot.lane.b32.xlu0 %v1771, 16
        %v1889 = vpop.permute.xlu0 %1888
        %1890 = vrot.lane.b32.xlu0 %v1772, 16
        %v1891 = vpop.permute.xlu0 %1890
        %v1895 = vsel %vm584, %v1886, 0
        %v1898 = vsel %vm584, %v1887, 0
        %1900 = vmatprep.subr.mxu0 0.0
        %1901 = vmatpush1.msra.mxu0 %v1889
        %1902 = vmatprep.subr.mxu0 0.0
        %1903 = vmatpush1.msra.mxu0 %v1891
        %1904 = vmatprep.subr.mxu0 0.0
        %1905 = vmatpush1.msra.mxu0 0.0
        %1906 = vmatprep.subr.mxu0 0.0
        %1907 = vmatpush1.msra.mxu0 0.0
        %1908 = vmatprep.subr.mxu0 0.0
        %1909 = vmatpush1.msra.mxu0 0.0
        %1910 = vmatprep.subr.mxu0 0.0
        %1911 = vmatpush1.msra.mxu0 0.0
        %1912 = vmatprep.subr.mxu0 0.0
        %1913 = vmatpush1.msra.mxu0 0.0
        %1914 = vmatprep.subr.mxu0 0.0
        %1915 = vmatpush1.msra.mxu0 0.0
        %1916 = vmatprep.subr.mxu0 0.0
        %1917 = vmatpush1.msra.mxu0 0.0
        %1918 = vmatprep.subr.mxu0 0.0
        %1919 = vmatpush1.msra.mxu0 0.0
        %1920 = vmatprep.subr.mxu0 0.0
        %1921 = vmatpush1.msra.mxu0 0.0
        %1922 = vmatprep.subr.mxu0 0.0
        %1923 = vmatpush1.msra.mxu0 0.0
        %1924 = vmatprep.subr.mxu0 0.0
        %1925 = vmatpush1.msra.mxu0 0.0
        %1926 = vmatprep.subr.mxu0 0.0
        %1927 = vmatpush1.msra.mxu0 0.0
        %1928 = vmatprep.subr.mxu0 0.0
        %1929 = vmatpush1.msra.mxu0 0.0
        %1930 = vmatprep.subr.mxu0 0.0
        %1931 = vmatpush1.msra.mxu0 0.0
        %1932 = vmatprep.subr.mxu0 0.0
        %1933 = vmatpush1.msra.mxu0 0.0
        %1934 = vmatprep.subr.mxu0 0.0
        %1935 = vmatpush1.msra.mxu0 0.0
        %1936 = vmatprep.subr.mxu0 0.0
        %1937 = vmatpush1.msra.mxu0 0.0
        %1938 = vmatprep.subr.mxu0 0.0
        %1939 = vmatpush1.msra.mxu0 0.0
        %1940 = vmatprep.subr.mxu0 0.0
        %1941 = vmatpush1.msra.mxu0 0.0
        %1942 = vmatprep.subr.mxu0 0.0
        %1943 = vmatpush1.msra.mxu0 0.0
        %1944 = vmatprep.subr.mxu0 0.0
        %1945 = vmatpush1.msra.mxu0 0.0
        %1946 = vmatprep.subr.mxu0 0.0
        %1947 = vmatpush1.msra.mxu0 0.0
        %1948 = vmatprep.subr.mxu0 0.0
        %1949 = vmatpush1.msra.mxu0 0.0
        %1950 = vmatprep.subr.mxu0 0.0
        %1951 = vmatpush1.msra.mxu0 0.0
        %1952 = vmatprep.subr.mxu0 0.0
        %1953 = vmatpush1.msra.mxu0 0.0
        %1954 = vmatprep.subr.mxu0 0.0
        %1955 = vmatpush1.msra.mxu0 0.0
        %1956 = vmatprep.subr.mxu0 0.0
        %1957 = vmatpush1.msra.mxu0 0.0
        %1958 = vmatprep.subr.mxu0 0.0
        %1959 = vmatpush1.msra.mxu0 0.0
        %1960 = vmatprep.subr.mxu0 0.0
        %1961 = vmatpush1.msra.mxu0 0.0
        %1962 = vmatprep.subr.mxu0 0.0
        %1963 = vmatpush1.msra.mxu0 0.0
        %1964 = vmatprep.mubr.f32.mxu0 0.0
        %1965 = vmatmul.mubr.f32.gmra.mrb[0].mxu0 %v1895
        %v1966 = vpop.f32.mrb[0].mxu0
        %v1967 = vadd.f32 0.0, %v1966
        %v1968 = vpop.f32.mrb[0].mxu0
        %1969 = vmatprep.mubr.f32.mxu0 0.0
        %1970 = vmatmul.mubr.f32.gmra.mrb[0].mxu0 %v1898
        %v1971 = vpop.f32.mrb[0].mxu0
        %v1972 = vadd.f32 0.0, %v1971
        %v1973 = vpop.f32.mrb[0].mxu0
        %1974 = vdwg.mxu0
        %1977 = vrot.lane.b32.xlu0 %v1967, 48
        %v1978 = vpop.permute.xlu0 %1977
        %1979 = vrot.lane.b32.xlu0 %v1972, 48
        %v1980 = vpop.permute.xlu0 %1979
        %vm1983 = vcmask 458112
        %1984 = vst.msk [vmem:[#allocation3] sm:$0xff] %vm1983, %v1978
        %1985 = vst.msk [vmem:[#allocation3 + $0x8] sm:$0xff] %vm1983, %v1980
        %v1986 = vld [vmem:[#allocation2] sm:$0xff]
        %v1987 = vld [vmem:[#allocation2 + $0x8] sm:$0xff]
        %1988 = vrot.lane.b32.xlu0 %v486, 72
        %v1989 = vpop.permute.xlu0 %1988
        %1990 = vrot.lane.b32.xlu0 %v491, 72
        %v1991 = vpop.permute.xlu0 %1990
        %1994 = vrot.lane.b32.xlu0 %v1986, 72
        %v1995 = vpop.permute.xlu0 %1994
        %1996 = vrot.lane.b32.xlu0 %v1987, 72
        %v1997 = vpop.permute.xlu0 %1996
        %v1998 = vsel %vm496, %v1989, 0
        %v2000 = vsel %vm496, %v1991, 0
        %v2002 = vsel %vm496, %v1995, 0
        %v2004 = vsel %vm496, %v1997, 0
        %2006 = vmatprep.subr.mxu0 0.0
        %2007 = vmatpush1.xpose.msra.mxu0 %v2002
        %2008 = vmatprep.subr.mxu0 0.0
        %2009 = vmatpush1.xpose.msra.mxu0 %v2004
        %2010 = vmatprep.subr.mxu0 0.0
        %2011 = vmatpush1.xpose.msra.mxu0 0.0
        %2012 = vmatprep.subr.mxu0 0.0
        %2013 = vmatpush1.xpose.msra.mxu0 0.0
        %2014 = vmatprep.subr.mxu0 0.0
        %2015 = vmatpush1.xpose.msra.mxu0 0.0
        %2016 = vmatprep.subr.mxu0 0.0
        %2017 = vmatpush1.xpose.msra.mxu0 0.0
        %2018 = vmatprep.subr.mxu0 0.0
        %2019 = vmatpush1.xpose.msra.mxu0 0.0
        %2020 = vmatprep.subr.mxu0 0.0
        %2021 = vmatpush1.xpose.msra.mxu0 0.0
        %2022 = vmatprep.subr.mxu0 0.0
        %2023 = vmatpush1.xpose.msra.mxu0 0.0
        %2024 = vmatprep.subr.mxu0 0.0
        %2025 = vmatpush1.xpose.msra.mxu0 0.0
        %2026 = vmatprep.subr.mxu0 0.0
        %2027 = vmatpush1.xpose.msra.mxu0 0.0
        %2028 = vmatprep.subr.mxu0 0.0
        %2029 = vmatpush1.xpose.msra.mxu0 0.0
        %2030 = vmatprep.subr.mxu0 0.0
        %2031 = vmatpush1.xpose.msra.mxu0 0.0
        %2032 = vmatprep.subr.mxu0 0.0
        %2033 = vmatpush1.xpose.msra.mxu0 0.0
        %2034 = vmatprep.subr.mxu0 0.0
        %2035 = vmatpush1.xpose.msra.mxu0 0.0
        %2036 = vmatprep.subr.mxu0 0.0
        %2037 = vmatpush1.xpose.msra.mxu0 0.0
        %2038 = vmatprep.subr.mxu0 0.0
        %2039 = vmatpush1.xpose.msra.mxu0 0.0
        %2040 = vmatprep.subr.mxu0 0.0
        %2041 = vmatpush1.xpose.msra.mxu0 0.0
        %2042 = vmatprep.subr.mxu0 0.0
        %2043 = vmatpush1.xpose.msra.mxu0 0.0
        %2044 = vmatprep.subr.mxu0 0.0
        %2045 = vmatpush1.xpose.msra.mxu0 0.0
        %2046 = vmatprep.subr.mxu0 0.0
        %2047 = vmatpush1.xpose.msra.mxu0 0.0
        %2048 = vmatprep.subr.mxu0 0.0
        %2049 = vmatpush1.xpose.msra.mxu0 0.0
        %2050 = vmatprep.subr.mxu0 0.0
        %2051 = vmatpush1.xpose.msra.mxu0 0.0
        %2052 = vmatprep.subr.mxu0 0.0
        %2053 = vmatpush1.xpose.msra.mxu0 0.0
        %2054 = vmatprep.subr.mxu0 0.0
        %2055 = vmatpush1.xpose.msra.mxu0 0.0
        %2056 = vmatprep.subr.mxu0 0.0
        %2057 = vmatpush1.xpose.msra.mxu0 0.0
        %2058 = vmatprep.subr.mxu0 0.0
        %2059 = vmatpush1.xpose.msra.mxu0 0.0
        %2060 = vmatprep.subr.mxu0 0.0
        %2061 = vmatpush1.xpose.msra.mxu0 0.0
        %2062 = vmatprep.subr.mxu0 0.0
        %2063 = vmatpush1.xpose.msra.mxu0 0.0
        %2064 = vmatprep.subr.mxu0 0.0
        %2065 = vmatpush1.xpose.msra.mxu0 0.0
        %2066 = vmatprep.subr.mxu0 0.0
        %2067 = vmatpush1.xpose.msra.mxu0 0.0
        %2068 = vmatprep.subr.mxu0 0.0
        %2069 = vmatpush1.xpose.msra.mxu0 0.0
        %2070 = vmatprep.mubr.f32.mxu0 0.0
        %2071 = vmatmul.mubr.f32.gmra.mrb[0].mxu0 %v1998
        %v2072 = vpop.f32.mrb[0].mxu0
        %v2073 = vadd.f32 0.0, %v2072
        %v2074 = vpop.f32.mrb[0].mxu0
        %2075 = vmatprep.mubr.f32.mxu0 0.0
        %2076 = vmatmul.mubr.f32.gmra.mrb[0].mxu0 %v2000
        %v2077 = vpop.f32.mrb[0].mxu0
        %v2078 = vadd.f32 0.0, %v2077
        %v2079 = vpop.f32.mrb[0].mxu0
        %2080 = vdwg.mxu0
        %v2081 = vsel %vm584, %v2073, -inf
        %2082 = vmax.xlane.f32.xlu0 %v2081
        %v2083 = vpop.xlane.xlu0 %2082
        %v2084 = vsel %vm584, %v2078, -inf
        %2085 = vmax.xlane.f32.xlu0 %v2084
        %v2086 = vpop.xlane.xlu0 %2085
        %v2087 = vsub.f32 %v2073, %v2083
        %v2088 = vsub.f32 %v2078, %v2086
        %v2089 = vmul.f32 %v2087, 1.442695
        %v2090 = vpow.pop %v2089
        %v2091 = vmul.f32 %v2088, 1.442695
        %v2092 = vpow.pop %v2091
        %v2093 = vsel %vm584, %v2090, 0.0
        %2094 = vadd.xlane.f32.xlu0 %v2093
        %v2095 = vpop.xlane.xlu0 %2094
        %v2096 = vsel %vm584, %v2092, 0.0
        %2097 = vadd.xlane.f32.xlu0 %v2096
        %v2098 = vpop.xlane.xlu0 %2097
        %v2099 = vrcp.pop %v2095
        %v2100 = vrcp.pop %v2098
        %v2101 = vmul.f32 %v2090, %v2099
        %v2102 = vmul.f32 %v2092, %v2100
        %2103 = vrot.lane.b32.xlu0 %v1986, 8
        %v2104 = vpop.permute.xlu0 %2103
        %2105 = vrot.lane.b32.xlu0 %v1987, 8
        %v2106 = vpop.permute.xlu0 %2105
        %v2110 = vsel %vm584, %v2101, 0
        %v2113 = vsel %vm584, %v2102, 0
        %2115 = vmatprep.subr.mxu0 0.0
        %2116 = vmatpush1.msra.mxu0 %v2104
        %2117 = vmatprep.subr.mxu0 0.0
        %2118 = vmatpush1.msra.mxu0 %v2106
        %2119 = vmatprep.subr.mxu0 0.0
        %2120 = vmatpush1.msra.mxu0 0.0
        %2121 = vmatprep.subr.mxu0 0.0
        %2122 = vmatpush1.msra.mxu0 0.0
        %2123 = vmatprep.subr.mxu0 0.0
        %2124 = vmatpush1.msra.mxu0 0.0
        %2125 = vmatprep.subr.mxu0 0.0
        %2126 = vmatpush1.msra.mxu0 0.0
        %2127 = vmatprep.subr.mxu0 0.0
        %2128 = vmatpush1.msra.mxu0 0.0
        %2129 = vmatprep.subr.mxu0 0.0
        %2130 = vmatpush1.msra.mxu0 0.0
        %2131 = vmatprep.subr.mxu0 0.0
        %2132 = vmatpush1.msra.mxu0 0.0
        %2133 = vmatprep.subr.mxu0 0.0
        %2134 = vmatpush1.msra.mxu0 0.0
        %2135 = vmatprep.subr.mxu0 0.0
        %2136 = vmatpush1.msra.mxu0 0.0
        %2137 = vmatprep.subr.mxu0 0.0
        %2138 = vmatpush1.msra.mxu0 0.0
        %2139 = vmatprep.subr.mxu0 0.0
        %2140 = vmatpush1.msra.mxu0 0.0
        %2141 = vmatprep.subr.mxu0 0.0
        %2142 = vmatpush1.msra.mxu0 0.0
        %2143 = vmatprep.subr.mxu0 0.0
        %2144 = vmatpush1.msra.mxu0 0.0
        %2145 = vmatprep.subr.mxu0 0.0
        %2146 = vmatpush1.msra.mxu0 0.0
        %2147 = vmatprep.subr.mxu0 0.0
        %2148 = vmatpush1.msra.mxu0 0.0
        %2149 = vmatprep.subr.mxu0 0.0
        %2150 = vmatpush1.msra.mxu0 0.0
        %2151 = vmatprep.subr.mxu0 0.0
        %2152 = vmatpush1.msra.mxu0 0.0
        %2153 = vmatprep.subr.mxu0 0.0
        %2154 = vmatpush1.msra.mxu0 0.0
        %2155 = vmatprep.subr.mxu0 0.0
        %2156 = vmatpush1.msra.mxu0 0.0
        %2157 = vmatprep.subr.mxu0 0.0
        %2158 = vmatpush1.msra.mxu0 0.0
        %2159 = vmatprep.subr.mxu0 0.0
        %2160 = vmatpush1.msra.mxu0 0.0
        %2161 = vmatprep.subr.mxu0 0.0
        %2162 = vmatpush1.msra.mxu0 0.0
        %2163 = vmatprep.subr.mxu0 0.0
        %2164 = vmatpush1.msra.mxu0 0.0
        %2165 = vmatprep.subr.mxu0 0.0
        %2166 = vmatpush1.msra.mxu0 0.0
        %2167 = vmatprep.subr.mxu0 0.0
        %2168 = vmatpush1.msra.mxu0 0.0
        %2169 = vmatprep.subr.mxu0 0.0
        %2170 = vmatpush1.msra.mxu0 0.0
        %2171 = vmatprep.subr.mxu0 0.0
        %2172 = vmatpush1.msra.mxu0 0.0
        %2173 = vmatprep.subr.mxu0 0.0
        %2174 = vmatpush1.msra.mxu0 0.0
        %2175 = vmatprep.subr.mxu0 0.0
        %2176 = vmatpush1.msra.mxu0 0.0
        %2177 = vmatprep.subr.mxu0 0.0
        %2178 = vmatpush1.msra.mxu0 0.0
        %2179 = vmatprep.mubr.f32.mxu0 0.0
        %2180 = vmatmul.mubr.f32.gmra.mrb[0].mxu0 %v2110
        %v2181 = vpop.f32.mrb[0].mxu0
        %v2182 = vadd.f32 0.0, %v2181
        %v2183 = vpop.f32.mrb[0].mxu0
        %2184 = vmatprep.mubr.f32.mxu0 0.0
        %2185 = vmatmul.mubr.f32.gmra.mrb[0].mxu0 %v2113
        %v2186 = vpop.f32.mrb[0].mxu0
        %v2187 = vadd.f32 0.0, %v2186
        %v2188 = vpop.f32.mrb[0].mxu0
        %2189 = vdwg.mxu0
        %2192 = vrot.lane.b32.xlu0 %v2182, 56
        %v2193 = vpop.permute.xlu0 %2192
        %2194 = vrot.lane.b32.xlu0 %v2187, 56
        %v2195 = vpop.permute.xlu0 %2194
        %vm2198 = vcmask 523712
        %2199 = vst.msk [vmem:[#allocation3] sm:$0xff] %vm2198, %v2193
        %2200 = vst.msk [vmem:[#allocation3 + $0x8] sm:$0xff] %vm2198, %v2195
        %v2201 = vld [vmem:[#allocation3] sm:$0xff]
        %v2202 = vld [vmem:[#allocation3 + $0x8] sm:$0xff]
        %v2203 = vld [vmem:[#allocation10] sm:$0xff]
        %v2204 = vld [vmem:[#allocation10 + $0x8] sm:$0xff]
        %v2205 = vld [vmem:[#allocation10 + $0x10] sm:$0xff]
        %v2206 = vld [vmem:[#allocation10 + $0x18] sm:$0xff]
        %v2207 = vld [vmem:[#allocation10 + $0x20] sm:$0xff]
        %v2208 = vld [vmem:[#allocation10 + $0x28] sm:$0xff]
        %v2209 = vld [vmem:[#allocation10 + $0x30] sm:$0xff]
        %v2210 = vld [vmem:[#allocation10 + $0x38] sm:$0xff]
        %v2211 = vld [vmem:[%s4] sm:$0x1]
        %v2213 = vlaneseq
        %v2214 = vshrl.u32 %v2213, 7
        %v2215 = vsub.s32 0, %v2214
        %v2216 = vrot.slane %v2211, %v2215
        %v2219 = vsel %vm412, %v2201, 0
        %v2222 = vsel %vm412, %v2202, 0
        %2224 = vmatprep.subr.mxu0 0.0
        %2225 = vmatpush1.msra.mxu0 %v2203
        %2226 = vmatprep.subr.mxu0 0.0
        %2227 = vmatpush1.msra.mxu0 %v2204
        %2228 = vmatprep.subr.mxu0 0.0
        %2229 = vmatpush1.msra.mxu0 %v2205
        %2230 = vmatprep.subr.mxu0 0.0
        %2231 = vmatpush1.msra.mxu0 %v2206
        %2232 = vmatprep.subr.mxu0 0.0
        %2233 = vmatpush1.msra.mxu0 %v2207
        %2234 = vmatprep.subr.mxu0 0.0
        %2235 = vmatpush1.msra.mxu0 %v2208
        %2236 = vmatprep.subr.mxu0 0.0
        %2237 = vmatpush1.msra.mxu0 %v2209
        %2238 = vmatprep.subr.mxu0 0.0
        %2239 = vmatpush1.msra.mxu0 %v2210
        %2240 = vmatprep.subr.mxu0 0.0
        %2241 = vmatpush1.msra.mxu0 0.0
        %2242 = vmatprep.subr.mxu0 0.0
        %2243 = vmatpush1.msra.mxu0 0.0
        %2244 = vmatprep.subr.mxu0 0.0
        %2245 = vmatpush1.msra.mxu0 0.0
        %2246 = vmatprep.subr.mxu0 0.0
        %2247 = vmatpush1.msra.mxu0 0.0
        %2248 = vmatprep.subr.mxu0 0.0
        %2249 = vmatpush1.msra.mxu0 0.0
        %2250 = vmatprep.subr.mxu0 0.0
        %2251 = vmatpush1.msra.mxu0 0.0
        %2252 = vmatprep.subr.mxu0 0.0
        %2253 = vmatpush1.msra.mxu0 0.0
        %2254 = vmatprep.subr.mxu0 0.0
        %2255 = vmatpush1.msra.mxu0 0.0
        %2256 = vmatprep.subr.mxu0 0.0
        %2257 = vmatpush1.msra.mxu0 0.0
        %2258 = vmatprep.subr.mxu0 0.0
        %2259 = vmatpush1.msra.mxu0 0.0
        %2260 = vmatprep.subr.mxu0 0.0
        %2261 = vmatpush1.msra.mxu0 0.0
        %2262 = vmatprep.subr.mxu0 0.0
        %2263 = vmatpush1.msra.mxu0 0.0
        %2264 = vmatprep.subr.mxu0 0.0
        %2265 = vmatpush1.msra.mxu0 0.0
        %2266 = vmatprep.subr.mxu0 0.0
        %2267 = vmatpush1.msra.mxu0 0.0
        %2268 = vmatprep.subr.mxu0 0.0
        %2269 = vmatpush1.msra.mxu0 0.0
        %2270 = vmatprep.subr.mxu0 0.0
        %2271 = vmatpush1.msra.mxu0 0.0
        %2272 = vmatprep.subr.mxu0 0.0
        %2273 = vmatpush1.msra.mxu0 0.0
        %2274 = vmatprep.subr.mxu0 0.0
        %2275 = vmatpush1.msra.mxu0 0.0
        %2276 = vmatprep.subr.mxu0 0.0
        %2277 = vmatpush1.msra.mxu0 0.0
        %2278 = vmatprep.subr.mxu0 0.0
        %2279 = vmatpush1.msra.mxu0 0.0
        %2280 = vmatprep.subr.mxu0 0.0
        %2281 = vmatpush1.msra.mxu0 0.0
        %2282 = vmatprep.subr.mxu0 0.0
        %2283 = vmatpush1.msra.mxu0 0.0
        %2284 = vmatprep.subr.mxu0 0.0
        %2285 = vmatpush1.msra.mxu0 0.0
        %2286 = vmatprep.subr.mxu0 0.0
        %2287 = vmatpush1.msra.mxu0 0.0
        %2288 = vmatprep.mubr.f32.mxu0 0.0
        %2289 = vmatmul.mubr.f32.gmra.mrb[0].mxu0 %v2219
        %v2290 = vpop.f32.mrb[0].mxu0
        %v2291 = vadd.f32 %v2216, %v2290
        %v2292 = vpop.f32.mrb[0].mxu0
        %2293 = vmatprep.mubr.f32.mxu0 0.0
        %2294 = vmatmul.mubr.f32.gmra.mrb[0].mxu0 %v2222
        %v2295 = vpop.f32.mrb[0].mxu0
        %v2296 = vadd.f32 %v2216, %v2295
        %v2297 = vpop.f32.mrb[0].mxu0
        %2298 = vdwg.mxu0
        %2299 = vst.msk [vmem:[%s300] sm:$0xff] %vm412, %v2291
        %2300 = vst.msk [vmem:[%s300 + $0x8] sm:$0xff] %vm412, %v2296
        %s2301 = sand.u32 %s156, 1
        %s2302 = scalar_lea.sflag [#allocation6], %s2301
        %s2303 = sand.u32 %s156, 1
        %s2304 = smul.addr %s2303, 16
        %s2305 = scalar_lea.vmem [#allocation12], %s2304
        // Predicated region
        $region61: #{tpu_custom_call.1} parent=39 // pred_check
          %p2306 = pneg %p166
        $region62: #{tpu_custom_call.1} parent=39 // pred_check_branch
          %2308 = sbr.rel (%p2306) target = $region64
        $region63: #{tpu_custom_call.1} parent=39 // pred_region
          %s2309 = smul.u32 2, %s29
          %s2311 = ssub.s32 256, 256
          %2312 = vsyncadd %s2302, %s2311
          %s2313 = smul.addr %s28, 2
          %s2314 = sadd.s32 %s2309, %s2313
          %s2315 = smul.addr %s2314, 128
          %s2316 = scalar_lea.hbm %s5, %s2315
          %s2317 = sshll.u32 %s2305, 4
          %s2318 = int_to_ptr.vmem [resolvable:$true] %s2317
          %2323 = dma.vmem_to_hbm [thread:$0]  %s2318, 256, %s2316, %s2302, 128, 128, 8
        $region64: #{tpu_custom_call.1} parent=39 // pred_fallthru
          _
      $region40: #{tpu_custom_call.1} parent=5 // pred_fallthru
        _
      %p2324 = scmp.le.s32.totalorder 2, %s19
      // Predicated region
      $region65: #{tpu_custom_call.1} parent=5 // pred_check
        %p2325 = pneg %p2324
      $region66: #{tpu_custom_call.1} parent=5 // pred_check_branch
        %2327 = sbr.rel (%p2325) target = $region68
      $region67: #{tpu_custom_call.1} parent=5 // pred_region
        %s2328 = ssub.s32 %s19, 2
        // Predicated region
        $region69: #{tpu_custom_call.1} parent=67 // pred_check
          %p2329 = pneg %p172
        $region70: #{tpu_custom_call.1} parent=67 // pred_check_branch
          %2331 = sbr.rel (%p2329) target = $region72
        $region71: #{tpu_custom_call.1} parent=67 // pred_region
          %s2332 = sand.u32 %s157, 1
          %s2333 = scalar_lea.sflag [#allocation6], %s2332
          %s2334 = sand.u32 %s157, 1
          %s2335 = smul.addr %s2334, 16
          %s2336 = scalar_lea.vmem [#allocation12], %s2335
          %2337 = dma.done %s2333, 256
        $region72: #{tpu_custom_call.1} parent=67 // pred_fallthru
          _
      $region68: #{tpu_custom_call.1} parent=5 // pred_fallthru
        _
    $region6: #{tpu_custom_call.1} parent=1 // loop_footer
      %s23 = sadd.s32 1, %s19
    $region7: #{tpu_custom_call.1} parent=1 // loop_footer_branch
      %18 = sbr.rel target = $region3
    $region8: #{tpu_custom_call.1} parent=1 // loop_exit
      _
    %2338 = vsyncpa [#allocation5], 1
    %s2339 = scalar_lea.sflag [#allocation5], 1
    %2340 = vsyncpa %s2339, 1
    %2341 = vsyncpa [#allocation8], 1
    %2342 = vsyncpa [#allocation11], 1
    %2343 = vsyncpa [#allocation6], 1
    %s2344 = scalar_lea.sflag [#allocation6], 1
    %2345 = vsyncpa %s2344, 1

// kernel: tpu_custom_call.1
$region0: #{tpu_custom_call.1}
  #allocation0 [shape = 'u32[]', space=smem, size = 0x4, offset = 0x4, fixed_abs, tag = 'smem constant byte address 0x4 - core index']
  #allocation1 [shape = 'u32[144,128]{1,0:T(1,128)}', space=vmem, size = 0x12000, scoped, tag = 'internal scratch']
  #allocation2 [shape = 'f32[16,128]{1,0:T(8,128)}', space=vmem, size = 0x2000, scoped, tag = 'scratch operand']
  #allocation3 [shape = 'f32[16,64]{1,0:T(8,128)}', space=vmem, size = 0x2000, scoped, tag = 'scratch operand']
  %s0 = inlined_call_operand.hbm [shape: f32[2,16,64], index: 0, kind: input, shape index: {}]
  %s1 = inlined_call_operand.hbm [shape: f32[64,64], index: 1, kind: input, shape index: {}]
  %s2 = inlined_call_operand.hbm [shape: f32[64,128], index: 2, kind: input, shape index: {}]
  %s3 = inlined_call_operand.hbm [shape: f32[64,64], index: 3, kind: input, shape index: {}]
  %s4 = inlined_call_operand.vmem [shape: f32[1,64], index: 4, kind: input, shape index: {}]
  %s5 = inlined_call_operand.hbm [shape: f32[2,16,64], index: 5, kind: output, shape index: {}]
  %s6 = sld [smem:[#allocation0]]
  $region73: #{tpu_custom_call.1} parent=0
    _
  %s8 = ssub.s32 1, %s6
  %s9 = scalar_select 0, %s8, %s6
  $region1: #{tpu_custom_call.1} parent=0
    #allocation4 [shape = 'u8[16384]{0}', space=vmem, size = 0x4000, scoped, tag = 'input window, operand 0']
    #allocation5 [shape = 's32[2]{0}', space=sflag, size = 0x8, scoped, tag = 'scoped memory for tpu_custom_call.1']
    #allocation6 [shape = 's32[2]{0}', space=sflag, size = 0x8, scoped, tag = 'scoped memory for tpu_custom_call.1']
    #allocation7 [shape = 'u8[32768]{0}', space=vmem, size = 0x8000, scoped, tag = 'input window, operand 1, single buffered']
    #allocation8 [shape = 's32[1]{0}', space=sflag, size = 0x4, scoped, tag = 'scoped memory for tpu_custom_call.1']
    #allocation9 [shape = 'u8[32768]{0}', space=vmem, size = 0x8000, scoped, tag = 'input window, operand 2, single buffered']
    #allocation10 [shape = 'u8[32768]{0}', space=vmem, size = 0x8000, scoped, tag = 'input window, operand 3, single buffered']
    #allocation11 [shape = 's32[1]{0}', space=sflag, size = 0x4, scoped, tag = 'scoped memory for tpu_custom_call.1']
    #allocation12 [shape = 'u8[16384]{0}', space=vmem, size = 0x4000, scoped, tag = 'output window, operand 0']
    %10 = vsyncpa [#allocation5], 0
    %s11 = scalar_lea.sflag [#allocation5], 1
    %12 = vsyncpa %s11, 0
    %13 = vsyncpa [#allocation8], 0
    %14 = vsyncpa [#allocation11], 0
    %15 = vsyncpa [#allocation6], 0
    %s16 = scalar_lea.sflag [#allocation6], 1
    %17 = vsyncpa %s16, 0
    loop: start=0, step=1, limit=4
    $region2: #{tpu_custom_call.1} parent=1 // loop_pre_header
      _
    $region3: #{tpu_custom_call.1} parent=1 // loop_header
      %s19 = sphi 0, %s23
      %p20 = scmp.ge.s32.totalorder %s19, 4
      %s26 = sphi 0, %s38
      %s27 = sphi 0, %s34
      %s28 = sphi 0, %s26
      %s29 = sphi 0, %s27
      %s30 = sphi 0, %s28
      %s31 = sphi 0, %s29
      %s41 = sphi 0, %s43
      %s44 = sphi 0, %s41
      %s45 = sphi 0, %s44
      %s61 = sphi 0, %s45
      %s65 = sphi 0, %s65
      %s67 = sphi 0, %s65
      %s68 = sphi 0, %s67
      %s82 = sphi 0, %s68
      %s86 = sphi 0, %s86
      %s88 = sphi 0, %s86
      %s89 = sphi 0, %s88
      %s103 = sphi 0, %s89
      %s107 = sphi 0, %s107
      %s109 = sphi 0, %s107
      %s110 = sphi 0, %s109
      %s124 = sphi 0, %s110
      %s128 = sphi 0, %s128
      %s130 = sphi 0, %s128
      %s131 = sphi 0, %s130
      %s145 = sphi 0, %s131
      %s153 = sphi 0, %s155
      %s156 = sphi 0, %s153
      %s157 = sphi 0, %s156
      %s173 = sphi 0, %s157
    $region4: #{tpu_custom_call.1} parent=1 // loop_header_branch
      %22 = sbr.rel (%p20) target = $region8
    $region5: #{tpu_custom_call.1} parent=1 // loop_body
      %s24 = ssub.s32 %s19, 1
      %s25 = ssub.s32 %s19, 2
      %s32 = sadd.s32 1, %s27
      %p33 = scmp.ge.s32.totalorder %s32, 1
      %s34 = scalar_select %p33, 0, %s32
      %s35 = sadd.s32 1, %s26
      %s36 = scalar_select %p33, %s35, %s26
      %p37 = scmp.ge.s32.totalorder %s36, 2
      %s38 = scalar_select %p37, 0, %s36
      %s39 = ssub.s32 %s26, %s38
      %p40 = scmp.eq.s32.totalorder %s39, 0
      %s42 = sadd.s32 %s41, 1
      %s43 = scalar_select %p40, %s41, %s42
      %p46 = pneg %p40
      %p47 = scmp.eq.s32.totalorder %s19, 1
      %p48 = por %p46, %p47
      %p49 = scmp.ne.s32.totalorder %s41, %s44
      %p50 = scmp.eq.s32.totalorder %s19, 0
      %p51 = por %p49, %p50
      %p52 = scmp.ne.s32.totalorder %s41, %s44
      %p53 = scmp.eq.s32.totalorder %s24, 1
      %p54 = por %p52, %p53
      %p55 = scmp.ne.s32.totalorder %s44, %s45
      %p56 = scmp.eq.s32.totalorder %s24, 0
      %p57 = por %p55, %p56
      %p58 = scmp.ne.s32.totalorder %s44, %s45
      %p59 = scmp.eq.s32.totalorder %s25, 1
      %p60 = por %p58, %p59
      %p62 = scmp.ne.s32.totalorder %s45, %s61
      %p63 = scmp.eq.s32.totalorder %s25, 0
      %p64 = por %p62, %p63
      %s66 = sadd.s32 %s65, 1
      %p69 = scmp.eq.s32.totalorder %s19, 1
      %p70 = scmp.ne.s32.totalorder %s65, %s67
      %p71 = scmp.eq.s32.totalorder %s19, 0
      %p72 = por %p70, %p71
      %p73 = scmp.ne.s32.totalorder %s65, %s67
      %p74 = scmp.eq.s32.totalorder %s24, 1
      %p75 = por %p73, %p74
      %p76 = scmp.ne.s32.totalorder %s67, %s68
      %p77 = scmp.eq.s32.totalorder %s24, 0
      %p78 = por %p76, %p77
      %p79 = scmp.ne.s32.totalorder %s67, %s68
      %p80 = scmp.eq.s32.totalorder %s25, 1
      %p81 = por %p79, %p80
      %p83 = scmp.ne.s32.totalorder %s68, %s82
      %p84 = scmp.eq.s32.totalorder %s25, 0
      %p85 = por %p83, %p84
      %s87 = sadd.s32 %s86, 1
      %p90 = scmp.eq.s32.totalorder %s19, 1
      %p91 = scmp.ne.s32.totalorder %s86, %s88
      %p92 = scmp.eq.s32.totalorder %s19, 0
      %p93 = por %p91, %p92
      %p94 = scmp.ne.s32.totalorder %s86, %s88
      %p95 = scmp.eq.s32.totalorder %s24, 1
      %p96 = por %p94, %p95
      %p97 = scmp.ne.s32.totalorder %s88, %s89
      %p98 = scmp.eq.s32.totalorder %s24, 0
      %p99 = por %p97, %p98
      %p100 = scmp.ne.s32.totalorder %s88, %s89
      %p101 = scmp.eq.s32.totalorder %s25, 1
      %p102 = por %p100, %p101
      %p104 = scmp.ne.s32.totalorder %s89, %s103
      %p105 = scmp.eq.s32.totalorder %s25, 0
      %p106 = por %p104, %p105
      %s108 = sadd.s32 %s107, 1
      %p111 = scmp.eq.s32.totalorder %s19, 1
      %p112 = scmp.ne.s32.totalorder %s107, %s109
      %p113 = scmp.eq.s32.totalorder %s19, 0
      %p114 = por %p112, %p113
      %p115 = scmp.ne.s32.totalorder %s107, %s109
      %p116 = scmp.eq.s32.totalorder %s24, 1
      %p117 = por %p115, %p116
      %p118 = scmp.ne.s32.totalorder %s109, %s110
      %p119 = scmp.eq.s32.totalorder %s24, 0
      %p120 = por %p118, %p119
      %p121 = scmp.ne.s32.totalorder %s109, %s110
      %p122 = scmp.eq.s32.totalorder %s25, 1
      %p123 = por %p121, %p122
      %p125 = scmp.ne.s32.totalorder %s110, %s124
      %p126 = scmp.eq.s32.totalorder %s25, 0
      %p127 = por %p125, %p126
      %s129 = sadd.s32 %s128, 1
      %p132 = scmp.eq.s32.totalorder %s19, 1
      %p133 = scmp.ne.s32.totalorder %s128, %s130
      %p134 = scmp.eq.s32.totalorder %s19, 0
      %p135 = por %p133, %p134
      %p136 = scmp.ne.s32.totalorder %s128, %s130
      %p137 = scmp.eq.s32.totalorder %s24, 1
      %p138 = por %p136, %p137
      %p139 = scmp.ne.s32.totalorder %s130, %s131
      %p140 = scmp.eq.s32.totalorder %s24, 0
      %p141 = por %p139, %p140
      %p142 = scmp.ne.s32.totalorder %s130, %s131
      %p143 = scmp.eq.s32.totalorder %s25, 1
      %p144 = por %p142, %p143
      %p146 = scmp.ne.s32.totalorder %s131, %s145
      %p147 = scmp.eq.s32.totalorder %s25, 0
      %p148 = por %p146, %p147
      %s149 = ssub.s32 %s26, %s38
      %s150 = ssub.s32 %s27, %s34
      %s151 = sor.u32 %s149, %s150
      %p152 = scmp.eq.s32.totalorder %s151, 0
      %s154 = sadd.s32 %s153, 1
      %s155 = scalar_select %p152, %s153, %s154
      %p158 = pneg %p152
      %p159 = scmp.eq.s32.totalorder %s19, 1
      %p160 = por %p158, %p159
      %p161 = scmp.ne.s32.totalorder %s153, %s156
      %p162 = scmp.eq.s32.totalorder %s19, 0
      %p163 = por %p161, %p162
      %p164 = scmp.ne.s32.totalorder %s153, %s156
      %p165 = scmp.eq.s32.totalorder %s24, 1
      %p166 = por %p164, %p165
      %p167 = scmp.ne.s32.totalorder %s156, %s157
      %p168 = scmp.eq.s32.totalorder %s24, 0
      %p169 = por %p167, %p168
      %p170 = scmp.ne.s32.totalorder %s156, %s157
      %p171 = scmp.eq.s32.totalorder %s25, 1
      %p172 = por %p170, %p171
      %p174 = scmp.ne.s32.totalorder %s157, %s173
      %p175 = scmp.eq.s32.totalorder %s25, 0
      %p176 = por %p174, %p175
      %p177 = scmp.le.s32.totalorder 1, %s19
      %p178 = scmp.lt.s32.totalorder %s19, 3
      %p179 = pnand %p177, %p178
      %p180 = pneg %p179
      // Predicated region
      $region9: #{tpu_custom_call.1} parent=5 // pred_check
        _
      $region10: #{tpu_custom_call.1} parent=5 // pred_check_branch
        %182 = sbr.rel (%p179) target = $region12
      $region11: #{tpu_custom_call.1} parent=5 // pred_region
        %s183 = ssub.s32 %s19, 1
        // Predicated region
        $region13: #{tpu_custom_call.1} parent=11 // pred_check
          %p184 = pneg %p78
        $region14: #{tpu_custom_call.1} parent=11 // pred_check_branch
          %186 = sbr.rel (%p184) target = $region16
        $region15: #{tpu_custom_call.1} parent=11 // pred_region
          %s188 = ssub.s32 1024, 1024
          %189 = vsyncadd [#allocation8], %s188
          %s190 = sshll.u32 [#allocation7], 4
          %s191 = int_to_ptr.vmem [resolvable:$true] %s190
          %196 = dma.hbm_to_vmem [thread:$0]  %s1, 1024, %s191, [#allocation8], 128, 128, 8
        $region16: #{tpu_custom_call.1} parent=11 // pred_fallthru
          _
        // Predicated region
        $region17: #{tpu_custom_call.1} parent=11 // pred_check
          %p197 = pneg %p99
        $region18: #{tpu_custom_call.1} parent=11 // pred_check_branch
          %199 = sbr.rel (%p197) target = $region20
        $region19: #{tpu_custom_call.1} parent=11 // pred_region
          %s201 = ssub.s32 1024, 1024
          %202 = vsyncadd [#allocation8], %s201
          %s203 = sshll.u32 [#allocation9], 4
          %s204 = int_to_ptr.vmem [resolvable:$true] %s203
          %209 = dma.hbm_to_vmem [thread:$0]  %s2, 1024, %s204, [#allocation8], 128, 128, 8
        $region20: #{tpu_custom_call.1} parent=11 // pred_fallthru
          _
        // Predicated region
        $region21: #{tpu_custom_call.1} parent=11 // pred_check
          %p210 = pneg %p120
        $region22: #{tpu_custom_call.1} parent=11 // pred_check_branch
          %212 = sbr.rel (%p210) target = $region24
        $region23: #{tpu_custom_call.1} parent=11 // pred_region
          %s214 = ssub.s32 1024, 1024
          %215 = vsyncadd [#allocation11], %s214
          %s216 = sshll.u32 [#allocation10], 4
          %s217 = int_to_ptr.vmem [resolvable:$true] %s216
          %222 = dma.hbm_to_vmem [thread:$0]  %s3, 1024, %s217, [#allocation11], 128, 128, 8
        $region24: #{tpu_custom_call.1} parent=11 // pred_fallthru
          _
        // Predicated region
        $region25: #{tpu_custom_call.1} parent=11 // pred_check
          %p223 = pneg %p141
        $region26: #{tpu_custom_call.1} parent=11 // pred_check_branch
          %225 = sbr.rel (%p223) target = $region28
        $region27: #{tpu_custom_call.1} parent=11 // pred_region
          _
        $region28: #{tpu_custom_call.1} parent=11 // pred_fallthru
          _
      $region12: #{tpu_custom_call.1} parent=5 // pred_fallthru
        _
      %p226 = scmp.lt.s32.totalorder %s19, 2
      // Predicated region
      $region29: #{tpu_custom_call.1} parent=5 // pred_check
        %p227 = pneg %p226
      $region30: #{tpu_custom_call.1} parent=5 // pred_check_branch
        %229 = sbr.rel (%p227) target = $region32
      $region31: #{tpu_custom_call.1} parent=5 // pred_region
        // Predicated region
        $region33: #{tpu_custom_call.1} parent=31 // pred_check
          %p230 = pneg %p51
        $region34: #{tpu_custom_call.1} parent=31 // pred_check_branch
          %232 = sbr.rel (%p230) target = $region36
        $region35: #{tpu_custom_call.1} parent=31 // pred_region
          %s233 = sand.u32 %s41, 1
          %s234 = scalar_lea.sflag [#allocation5], %s233
          %s235 = sand.u32 %s41, 1
          %s236 = smul.addr %s235, 16
          %s237 = scalar_lea.vmem [#allocation4], %s236
          %s239 = ssub.s32 256, 256
          %240 = vsyncadd %s234, %s239
          %s241 = smul.addr %s26, 2
          %s242 = smul.addr %s241, 128
          %s243 = scalar_lea.hbm %s0, %s242
          %s244 = sshll.u32 %s237, 4
          %s245 = int_to_ptr.vmem [resolvable:$true] %s244
          %250 = dma.hbm_to_vmem [thread:$0]  %s243, 256, %s245, %s234, 128, 128, 8
        $region36: #{tpu_custom_call.1} parent=31 // pred_fallthru
          _
      $region32: #{tpu_custom_call.1} parent=5 // pred_fallthru
        _
      %p251 = scmp.le.s32.totalorder 1, %s19
      %p252 = scmp.lt.s32.totalorder %s19, 3
      %p253 = pnand %p251, %p252
      %p254 = pneg %p253
      // Predicated region
      $region37: #{tpu_custom_call.1} parent=5 // pred_check
        _
      $region38: #{tpu_custom_call.1} parent=5 // pred_check_branch
        %256 = sbr.rel (%p253) target = $region40
      $region39: #{tpu_custom_call.1} parent=5 // pred_region
        %s257 = ssub.s32 %s19, 1
        %s258 = sand.u32 %s44, 1
        %s259 = scalar_lea.sflag [#allocation5], %s258
        %s260 = sand.u32 %s44, 1
        %s261 = smul.addr %s260, 16
        %s262 = scalar_lea.vmem [#allocation4], %s261
        // Predicated region
        $region41: #{tpu_custom_call.1} parent=39 // pred_check
          %p263 = pneg %p57
        $region42: #{tpu_custom_call.1} parent=39 // pred_check_branch
          %265 = sbr.rel (%p263) target = $region44
        $region43: #{tpu_custom_call.1} parent=39 // pred_region
          %266 = dma.done %s259, 256
        $region44: #{tpu_custom_call.1} parent=39 // pred_fallthru
          _
        // Predicated region
        $region45: #{tpu_custom_call.1} parent=39 // pred_check
          %p267 = pneg %p78
        $region46: #{tpu_custom_call.1} parent=39 // pred_check_branch
          %269 = sbr.rel (%p267) target = $region48
        $region47: #{tpu_custom_call.1} parent=39 // pred_region
          %270 = dma.done [#allocation8], 1024
        $region48: #{tpu_custom_call.1} parent=39 // pred_fallthru
          _
        // Predicated region
        $region49: #{tpu_custom_call.1} parent=39 // pred_check
          %p271 = pneg %p99
        $region50: #{tpu_custom_call.1} parent=39 // pred_check_branch
          %273 = sbr.rel (%p271) target = $region52
        $region51: #{tpu_custom_call.1} parent=39 // pred_region
          %274 = dma.done [#allocation8], 1024
        $region52: #{tpu_custom_call.1} parent=39 // pred_fallthru
          _
        // Predicated region
        $region53: #{tpu_custom_call.1} parent=39 // pred_check
          %p275 = pneg %p120
        $region54: #{tpu_custom_call.1} parent=39 // pred_check_branch
          %277 = sbr.rel (%p275) target = $region56
        $region55: #{tpu_custom_call.1} parent=39 // pred_region
          %278 = dma.done [#allocation11], 1024
        $region56: #{tpu_custom_call.1} parent=39 // pred_fallthru
          _
        %s279 = sand.u32 %s44, 1
        %s280 = scalar_lea.sflag [#allocation5], %s279
        %s281 = sand.u32 %s44, 1
        %s282 = smul.addr %s281, 16
        %s283 = scalar_lea.vmem [#allocation4], %s282
        %p284 = pneg %p57
        %p285 = pneg %p54
        %p286 = pneg %p78
        %p287 = pneg %p75
        %p288 = pneg %p99
        %p289 = pneg %p96
        %p290 = pneg %p120
        %p291 = pneg %p117
        %p292 = pneg %p141
        %p293 = pneg %p138
        %p294 = pneg %p169
        %p295 = pneg %p166
        %s296 = sand.u32 %s156, 1
        %s297 = scalar_lea.sflag [#allocation6], %s296
        %s298 = sand.u32 %s156, 1
        %s299 = smul.addr %s298, 16
        %s300 = scalar_lea.vmem [#allocation12], %s299
        %s301 = smul.u32 2, %s29
        %p302 = scmp.eq.s32.totalorder %s29, 0
        // Predicated region
        $region57: #{tpu_custom_call.1} parent=39 // pred_check
          %p303 = pneg %p302
        $region58: #{tpu_custom_call.1} parent=39 // pred_check_branch
          %305 = sbr.rel (%p303) target = $region60
        $region59: #{tpu_custom_call.1} parent=39 // pred_region
          %v306 = vld [vmem:[%s262] sm:$0xff]
          %v307 = vld [vmem:[%s262 + $0x8] sm:$0xff]
          %v308 = vld [vmem:[#allocation9] sm:$0xff]
          %v309 = vld [vmem:[#allocation9 + $0x8] sm:$0xff]
          %v310 = vld [vmem:[#allocation9 + $0x10] sm:$0xff]
          %v311 = vld [vmem:[#allocation9 + $0x18] sm:$0xff]
          %v312 = vld [vmem:[#allocation9 + $0x20] sm:$0xff]
          %v313 = vld [vmem:[#allocation9 + $0x28] sm:$0xff]
          %v314 = vld [vmem:[#allocation9 + $0x30] sm:$0xff]
          %v315 = vld [vmem:[#allocation9 + $0x38] sm:$0xff]
          %vm316 = vcmask 523264
          %v318 = vsel %vm316, %v306, 0
          %v321 = vsel %vm316, %v307, 0
          %323 = vmatprep.subr.mxu0 0.0
          %324 = vmatpush1.msra.mxu0 %v308
          %325 = vmatprep.subr.mxu0 0.0
          %326 = vmatpush1.msra.mxu0 %v309
          %327 = vmatprep.subr.mxu0 0.0
          %328 = vmatpush1.msra.mxu0 %v310
          %329 = vmatprep.subr.mxu0 0.0
          %330 = vmatpush1.msra.mxu0 %v311
          %331 = vmatprep.subr.mxu0 0.0
          %332 = vmatpush1.msra.mxu0 %v312
          %333 = vmatprep.subr.mxu0 0.0
          %334 = vmatpush1.msra.mxu0 %v313
          %335 = vmatprep.subr.mxu0 0.0
          %336 = vmatpush1.msra.mxu0 %v314
          %337 = vmatprep.subr.mxu0 0.0
          %338 = vmatpush1.msra.mxu0 %v315
          %339 = vmatprep.subr.mxu0 0.0
          %340 = vmatpush1.msra.mxu0 0.0
          %341 = vmatprep.subr.mxu0 0.0
          %342 = vmatpush1.msra.mxu0 0.0
          %343 = vmatprep.subr.mxu0 0.0
          %344 = vmatpush1.msra.mxu0 0.0
          %345 = vmatprep.subr.mxu0 0.0
          %346 = vmatpush1.msra.mxu0 0.0
          %347 = vmatprep.subr.mxu0 0.0
          %348 = vmatpush1.msra.mxu0 0.0
          %349 = vmatprep.subr.mxu0 0.0
          %350 = vmatpush1.msra.mxu0 0.0
          %351 = vmatprep.subr.mxu0 0.0
          %352 = vmatpush1.msra.mxu0 0.0
          %353 = vmatprep.subr.mxu0 0.0
          %354 = vmatpush1.msra.mxu0 0.0
          %355 = vmatprep.subr.mxu0 0.0
          %356 = vmatpush1.msra.mxu0 0.0
          %357 = vmatprep.subr.mxu0 0.0
          %358 = vmatpush1.msra.mxu0 0.0
          %359 = vmatprep.subr.mxu0 0.0
          %360 = vmatpush1.msra.mxu0 0.0
          %361 = vmatprep.subr.mxu0 0.0
          %362 = vmatpush1.msra.mxu0 0.0
          %363 = vmatprep.subr.mxu0 0.0
          %364 = vmatpush1.msra.mxu0 0.0
          %365 = vmatprep.subr.mxu0 0.0
          %366 = vmatpush1.msra.mxu0 0.0
          %367 = vmatprep.subr.mxu0 0.0
          %368 = vmatpush1.msra.mxu0 0.0
          %369 = vmatprep.subr.mxu0 0.0
          %370 = vmatpush1.msra.mxu0 0.0
          %371 = vmatprep.subr.mxu0 0.0
          %372 = vmatpush1.msra.mxu0 0.0
          %373 = vmatprep.subr.mxu0 0.0
          %374 = vmatpush1.msra.mxu0 0.0
          %375 = vmatprep.subr.mxu0 0.0
          %376 = vmatpush1.msra.mxu0 0.0
          %377 = vmatprep.subr.mxu0 0.0
          %378 = vmatpush1.msra.mxu0 0.0
          %379 = vmatprep.subr.mxu0 0.0
          %380 = vmatpush1.msra.mxu0 0.0
          %381 = vmatprep.subr.mxu0 0.0
          %382 = vmatpush1.msra.mxu0 0.0
          %383 = vmatprep.subr.mxu0 0.0
          %384 = vmatpush1.msra.mxu0 0.0
          %385 = vmatprep.subr.mxu0 0.0
          %386 = vmatpush1.msra.mxu0 0.0
          %387 = vmatprep.mubr.f32.mxu0 0.0
          %388 = vmatmul.mubr.f32.gmra.mrb[0].mxu0 %v318
          %v389 = vpop.f32.mrb[0].mxu0
          %v390 = vadd.f32 0.0, %v389
          %v391 = vpop.f32.mrb[0].mxu0
          %392 = vmatprep.mubr.f32.mxu0 0.0
          %393 = vmatmul.mubr.f32.gmra.mrb[0].mxu0 %v321
          %v394 = vpop.f32.mrb[0].mxu0
          %v395 = vadd.f32 0.0, %v394
          %v396 = vpop.f32.mrb[0].mxu0
          %397 = vdwg.mxu0
          %398 = vst [vmem:[#allocation2] sm:$0xff] %v390
          %399 = vst [vmem:[#allocation2 + $0x8] sm:$0xff] %v395
        $region60: #{tpu_custom_call.1} parent=39 // pred_fallthru
          _
        %s400 = smul.u32 %s29, 16
        %s401 = scalar_lea.vmem %s262, %s400 [#allocation4]
        %v402 = vld [vmem:[%s401] sm:$0xff]
        %v403 = vld [vmem:[%s401 + $0x8] sm:$0xff]
        %v404 = vld [vmem:[#allocation7] sm:$0xff]
        %v405 = vld [vmem:[#allocation7 + $0x8] sm:$0xff]
        %v406 = vld [vmem:[#allocation7 + $0x10] sm:$0xff]
        %v407 = vld [vmem:[#allocation7 + $0x18] sm:$0xff]
        %v408 = vld [vmem:[#allocation7 + $0x20] sm:$0xff]
        %v409 = vld [vmem:[#allocation7 + $0x28] sm:$0xff]
        %v410 = vld [vmem:[#allocation7 + $0x30] sm:$0xff]
        %v411 = vld [vmem:[#allocation7 + $0x38] sm:$0xff]
        %vm412 = vcmask 523264
        %v414 = vsel %vm412, %v402, 0
        %v417 = vsel %vm412, %v403, 0
        %419 = vmatprep.subr.mxu0 0.0
        %420 = vmatpush1.msra.mxu0 %v404
        %421 = vmatprep.subr.mxu0 0.0
        %422 = vmatpush1.msra.mxu0 %v405
        %423 = vmatprep.subr.mxu0 0.0
        %424 = vmatpush1.msra.mxu0 %v406
        %425 = vmatprep.subr.mxu0 0.0
        %426 = vmatpush1.msra.mxu0 %v407
        %427 = vmatprep.subr.mxu0 0.0
        %428 = vmatpush1.msra.mxu0 %v408
        %429 = vmatprep.subr.mxu0 0.0
        %430 = vmatpush1.msra.mxu0 %v409
        %431 = vmatprep.subr.mxu0 0.0
        %432 = vmatpush1.msra.mxu0 %v410
        %433 = vmatprep.subr.mxu0 0.0
        %434 = vmatpush1.msra.mxu0 %v411
        %435 = vmatprep.subr.mxu0 0.0
        %436 = vmatpush1.msra.mxu0 0.0
        %437 = vmatprep.subr.mxu0 0.0
        %438 = vmatpush1.msra.mxu0 0.0
        %439 = vmatprep.subr.mxu0 0.0
        %440 = vmatpush1.msra.mxu0 0.0
        %441 = vmatprep.subr.mxu0 0.0
        %442 = vmatpush1.msra.mxu0 0.0
        %443 = vmatprep.subr.mxu0 0.0
        %444 = vmatpush1.msra.mxu0 0.0
        %445 = vmatprep.subr.mxu0 0.0
        %446 = vmatpush1.msra.mxu0 0.0
        %447 = vmatprep.subr.mxu0 0.0
        %448 = vmatpush1.msra.mxu0 0.0
        %449 = vmatprep.subr.mxu0 0.0
        %450 = vmatpush1.msra.mxu0 0.0
        %451 = vmatprep.subr.mxu0 0.0
        %452 = vmatpush1.msra.mxu0 0.0
        %453 = vmatprep.subr.mxu0 0.0
        %454 = vmatpush1.msra.mxu0 0.0
        %455 = vmatprep.subr.mxu0 0.0
        %456 = vmatpush1.msra.mxu0 0.0
        %457 = vmatprep.subr.mxu0 0.0
        %458 = vmatpush1.msra.mxu0 0.0
        %459 = vmatprep.subr.mxu0 0.0
        %460 = vmatpush1.msra.mxu0 0.0
        %461 = vmatprep.subr.mxu0 0.0
        %462 = vmatpush1.msra.mxu0 0.0
        %463 = vmatprep.subr.mxu0 0.0
        %464 = vmatpush1.msra.mxu0 0.0
        %465 = vmatprep.subr.mxu0 0.0
        %466 = vmatpush1.msra.mxu0 0.0
        %467 = vmatprep.subr.mxu0 0.0
        %468 = vmatpush1.msra.mxu0 0.0
        %469 = vmatprep.subr.mxu0 0.0
        %470 = vmatpush1.msra.mxu0 0.0
        %471 = vmatprep.subr.mxu0 0.0
        %472 = vmatpush1.msra.mxu0 0.0
        %473 = vmatprep.subr.mxu0 0.0
        %474 = vmatpush1.msra.mxu0 0.0
        %475 = vmatprep.subr.mxu0 0.0
        %476 = vmatpush1.msra.mxu0 0.0
        %477 = vmatprep.subr.mxu0 0.0
        %478 = vmatpush1.msra.mxu0 0.0
        %479 = vmatprep.subr.mxu0 0.0
        %480 = vmatpush1.msra.mxu0 0.0
        %481 = vmatprep.subr.mxu0 0.0
        %482 = vmatpush1.msra.mxu0 0.0
        %483 = vmatprep.mubr.f32.mxu0 0.0
        %484 = vmatmul.mubr.f32.gmra.mrb[0].mxu0 %v414
        %v485 = vpop.f32.mrb[0].mxu0
        %v486 = vadd.f32 0.0, %v485
        %v487 = vpop.f32.mrb[0].mxu0
        %488 = vmatprep.mubr.f32.mxu0 0.0
        %489 = vmatmul.mubr.f32.gmra.mrb[0].mxu0 %v417
        %v490 = vpop.f32.mrb[0].mxu0
        %v491 = vadd.f32 0.0, %v490
        %v492 = vpop.f32.mrb[0].mxu0
        %493 = vdwg.mxu0
        %v494 = vld [vmem:[#allocation2] sm:$0xff]
        %v495 = vld [vmem:[#allocation2 + $0x8] sm:$0xff]
        %vm496 = vcmask 64512
        %v498 = vsel %vm496, %v486, 0
        %v501 = vsel %vm496, %v491, 0
        %v504 = vsel %vm496, %v494, 0
        %v507 = vsel %vm496, %v495, 0
        %509 = vmatprep.subr.mxu0 0.0
        %510 = vmatpush1.xpose.msra.mxu0 %v504
        %511 = vmatprep.subr.mxu0 0.0
        %512 = vmatpush1.xpose.msra.mxu0 %v507
        %513 = vmatprep.subr.mxu0 0.0
        %514 = vmatpush1.xpose.msra.mxu0 0.0
        %515 = vmatprep.subr.mxu0 0.0
        %516 = vmatpush1.xpose.msra.mxu0 0.0
        %517 = vmatprep.subr.mxu0 0.0
        %518 = vmatpush1.xpose.msra.mxu0 0.0
        %519 = vmatprep.subr.mxu0 0.0
        %520 = vmatpush1.xpose.msra.mxu0 0.0
        %521 = vmatprep.subr.mxu0 0.0
        %522 = vmatpush1.xpose.msra.mxu0 0.0
        %523 = vmatprep.subr.mxu0 0.0
        %524 = vmatpush1.xpose.msra.mxu0 0.0
        %525 = vmatprep.subr.mxu0 0.0
        %526 = vmatpush1.xpose.msra.mxu0 0.0
        %527 = vmatprep.subr.mxu0 0.0
        %528 = vmatpush1.xpose.msra.mxu0 0.0
        %529 = vmatprep.subr.mxu0 0.0
        %530 = vmatpush1.xpose.msra.mxu0 0.0
        %531 = vmatprep.subr.mxu0 0.0
        %532 = vmatpush1.xpose.msra.mxu0 0.0
        %533 = vmatprep.subr.mxu0 0.0
        %534 = vmatpush1.xpose.msra.mxu0 0.0
        %535 = vmatprep.subr.mxu0 0.0
        %536 = vmatpush1.xpose.msra.mxu0 0.0
        %537 = vmatprep.subr.mxu0 0.0
        %538 = vmatpush1.xpose.msra.mxu0 0.0
        %539 = vmatprep.subr.mxu0 0.0
        %540 = vmatpush1.xpose.msra.mxu0 0.0
        %541 = vmatprep.subr.mxu0 0.0
        %542 = vmatpush1.xpose.msra.mxu0 0.0
        %543 = vmatprep.subr.mxu0 0.0
        %544 = vmatpush1.xpose.msra.mxu0 0.0
        %545 = vmatprep.subr.mxu0 0.0
        %546 = vmatpush1.xpose.msra.mxu0 0.0
        %547 = vmatprep.subr.mxu0 0.0
        %548 = vmatpush1.xpose.msra.mxu0 0.0
        %549 = vmatprep.subr.mxu0 0.0
        %550 = vmatpush1.xpose.msra.mxu0 0.0
        %551 = vmatprep.subr.mxu0 0.0
        %552 = vmatpush1.xpose.msra.mxu0 0.0
        %553 = vmatprep.subr.mxu0 0.0
        %554 = vmatpush1.xpose.msra.mxu0 0.0
        %555 = vmatprep.subr.mxu0 0.0
        %556 = vmatpush1.xpose.msra.mxu0 0.0
        %557 = vmatprep.subr.mxu0 0.0
        %558 = vmatpush1.xpose.msra.mxu0 0.0
        %559 = vmatprep.subr.mxu0 0.0
        %560 = vmatpush1.xpose.msra.mxu0 0.0
        %561 = vmatprep.subr.mxu0 0.0
        %562 = vmatpush1.xpose.msra.mxu0 0.0
        %563 = vmatprep.subr.mxu0 0.0
        %564 = vmatpush1.xpose.msra.mxu0 0.0
        %565 = vmatprep.subr.mxu0 0.0
        %566 = vmatpush1.xpose.msra.mxu0 0.0
        %567 = vmatprep.subr.mxu0 0.0
        %568 = vmatpush1.xpose.msra.mxu0 0.0
        %569 = vmatprep.subr.mxu0 0.0
        %570 = vmatpush1.xpose.msra.mxu0 0.0
        %571 = vmatprep.subr.mxu0 0.0
        %572 = vmatpush1.xpose.msra.mxu0 0.0
        %573 = vmatprep.mubr.f32.mxu0 0.0
        %574 = vmatmul.mubr.f32.gmra.mrb[0].mxu0 %v498
        %v575 = vpop.f32.mrb[0].mxu0
        %v576 = vadd.f32 0.0, %v575
        %v577 = vpop.f32.mrb[0].mxu0
        %578 = vmatprep.mubr.f32.mxu0 0.0
        %579 = vmatmul.mubr.f32.gmra.mrb[0].mxu0 %v501
        %v580 = vpop.f32.mrb[0].mxu0
        %v581 = vadd.f32 0.0, %v580
        %v582 = vpop.f32.mrb[0].mxu0
        %583 = vdwg.mxu0
        %vm584 = vcmask 130048
        %v585 = vsel %vm584, %v576, -inf
        %586 = vmax.xlane.f32.xlu0 %v585
        %v587 = vpop.xlane.xlu0 %586
        %v588 = vsel %vm584, %v581, -inf
        %589 = vmax.xlane.f32.xlu0 %v588
        %v590 = vpop.xlane.xlu0 %589
        %v591 = vsub.f32 %v576, %v587
        %v592 = vsub.f32 %v581, %v590
        %v593 = vmul.f32 %v591, 1.442695
        %v594 = vpow.pop %v593
        %v595 = vmul.f32 %v592, 1.442695
        %v596 = vpow.pop %v595
        %v597 = vsel %vm584, %v594, 0.0
        %598 = vadd.xlane.f32.xlu0 %v597
        %v599 = vpop.xlane.xlu0 %598
        %v600 = vsel %vm584, %v596, 0.0
        %601 = vadd.xlane.f32.xlu0 %v600
        %v602 = vpop.xlane.xlu0 %601
        %v603 = vrcp.pop %v599
        %v604 = vrcp.pop %v602
        %v605 = vmul.f32 %v594, %v603
        %v606 = vmul.f32 %v596, %v604
        %607 = vrot.lane.b32.xlu0 %v494, 64
        %v608 = vpop.permute.xlu0 %607
        %609 = vrot.lane.b32.xlu0 %v495, 64
        %v610 = vpop.permute.xlu0 %609
        %v614 = vsel %vm584, %v605, 0
        %v617 = vsel %vm584, %v606, 0
        %619 = vmatprep.subr.mxu0 0.0
        %620 = vmatpush1.msra.mxu0 %v608
        %621 = vmatprep.subr.mxu0 0.0
        %622 = vmatpush1.msra.mxu0 %v610
        %623 = vmatprep.subr.mxu0 0.0
        %624 = vmatpush1.msra.mxu0 0.0
        %625 = vmatprep.subr.mxu0 0.0
        %626 = vmatpush1.msra.mxu0 0.0
        %627 = vmatprep.subr.mxu0 0.0
        %628 = vmatpush1.msra.mxu0 0.0
        %629 = vmatprep.subr.mxu0 0.0
        %630 = vmatpush1.msra.mxu0 0.0
        %631 = vmatprep.subr.mxu0 0.0
        %632 = vmatpush1.msra.mxu0 0.0
        %633 = vmatprep.subr.mxu0 0.0
        %634 = vmatpush1.msra.mxu0 0.0
        %635 = vmatprep.subr.mxu0 0.0
        %636 = vmatpush1.msra.mxu0 0.0
        %637 = vmatprep.subr.mxu0 0.0
        %638 = vmatpush1.msra.mxu0 0.0
        %639 = vmatprep.subr.mxu0 0.0
        %640 = vmatpush1.msra.mxu0 0.0
        %641 = vmatprep.subr.mxu0 0.0
        %642 = vmatpush1.msra.mxu0 0.0
        %643 = vmatprep.subr.mxu0 0.0
        %644 = vmatpush1.msra.mxu0 0.0
        %645 = vmatprep.subr.mxu0 0.0
        %646 = vmatpush1.msra.mxu0 0.0
        %647 = vmatprep.subr.mxu0 0.0
        %648 = vmatpush1.msra.mxu0 0.0
        %649 = vmatprep.subr.mxu0 0.0
        %650 = vmatpush1.msra.mxu0 0.0
        %651 = vmatprep.subr.mxu0 0.0
        %652 = vmatpush1.msra.mxu0 0.0
        %653 = vmatprep.subr.mxu0 0.0
        %654 = vmatpush1.msra.mxu0 0.0
        %655 = vmatprep.subr.mxu0 0.0
        %656 = vmatpush1.msra.mxu0 0.0
        %657 = vmatprep.subr.mxu0 0.0
        %658 = vmatpush1.msra.mxu0 0.0
        %659 = vmatprep.subr.mxu0 0.0
        %660 = vmatpush1.msra.mxu0 0.0
        %661 = vmatprep.subr.mxu0 0.0
        %662 = vmatpush1.msra.mxu0 0.0
        %663 = vmatprep.subr.mxu0 0.0
        %664 = vmatpush1.msra.mxu0 0.0
        %665 = vmatprep.subr.mxu0 0.0
        %666 = vmatpush1.msra.mxu0 0.0
        %667 = vmatprep.subr.mxu0 0.0
        %668 = vmatpush1.msra.mxu0 0.0
        %669 = vmatprep.subr.mxu0 0.0
        %670 = vmatpush1.msra.mxu0 0.0
        %671 = vmatprep.subr.mxu0 0.0
        %672 = vmatpush1.msra.mxu0 0.0
        %673 = vmatprep.subr.mxu0 0.0
        %674 = vmatpush1.msra.mxu0 0.0
        %675 = vmatprep.subr.mxu0 0.0
        %676 = vmatpush1.msra.mxu0 0.0
        %677 = vmatprep.subr.mxu0 0.0
        %678 = vmatpush1.msra.mxu0 0.0
        %679 = vmatprep.subr.mxu0 0.0
        %680 = vmatpush1.msra.mxu0 0.0
        %681 = vmatprep.subr.mxu0 0.0
        %682 = vmatpush1.msra.mxu0 0.0
        %683 = vmatprep.mubr.f32.mxu0 0.0
        %684 = vmatmul.mubr.f32.gmra.mrb[0].mxu0 %v614
        %v685 = vpop.f32.mrb[0].mxu0
        %v686 = vadd.f32 0.0, %v685
        %v687 = vpop.f32.mrb[0].mxu0
        %688 = vmatprep.mubr.f32.mxu0 0.0
        %689 = vmatmul.mubr.f32.gmra.mrb[0].mxu0 %v617
        %v690 = vpop.f32.mrb[0].mxu0
        %v691 = vadd.f32 0.0, %v690
        %v692 = vpop.f32.mrb[0].mxu0
        %693 = vdwg.mxu0
        %694 = vst.msk [vmem:[#allocation3] sm:$0xff] %vm496, %v686
        %695 = vst.msk [vmem:[#allocation3 + $0x8] sm:$0xff] %vm496, %v691
        %v696 = vld [vmem:[#allocation2] sm:$0xff]
        %v697 = vld [vmem:[#allocation2 + $0x8] sm:$0xff]
        %698 = vrot.lane.b32.xlu0 %v486, 120
        %v699 = vpop.permute.xlu0 %698
        %700 = vrot.lane.b32.xlu0 %v491, 120
        %v701 = vpop.permute.xlu0 %700
        %704 = vrot.lane.b32.xlu0 %v696, 120
        %v705 = vpop.permute.xlu0 %704
        %706 = vrot.lane.b32.xlu0 %v697, 120
        %v707 = vpop.permute.xlu0 %706
        %v708 = vsel %vm496, %v699, 0
        %v710 = vsel %vm496, %v701, 0
        %v712 = vsel %vm496, %v705, 0
        %v714 = vsel %vm496, %v707, 0
        %716 = vmatprep.subr.mxu0 0.0
        %717 = vmatpush1.xpose.msra.mxu0 %v712
        %718 = vmatprep.subr.mxu0 0.0
        %719 = vmatpush1.xpose.msra.mxu0 %v714
        %720 = vmatprep.subr.mxu0 0.0
        %721 = vmatpush1.xpose.msra.mxu0 0.0
        %722 = vmatprep.subr.mxu0 0.0
        %723 = vmatpush1.xpose.msra.mxu0 0.0
        %724 = vmatprep.subr.mxu0 0.0
        %725 = vmatpush1.xpose.msra.mxu0 0.0
        %726 = vmatprep.subr.mxu0 0.0
        %727 = vmatpush1.xpose.msra.mxu0 0.0
        %728 = vmatprep.subr.mxu0 0.0
        %729 = vmatpush1.xpose.msra.mxu0 0.0
        %730 = vmatprep.subr.mxu0 0.0
        %731 = vmatpush1.xpose.msra.mxu0 0.0
        %732 = vmatprep.subr.mxu0 0.0
        %733 = vmatpush1.xpose.msra.mxu0 0.0
        %734 = vmatprep.subr.mxu0 0.0
        %735 = vmatpush1.xpose.msra.mxu0 0.0
        %736 = vmatprep.subr.mxu0 0.0
        %737 = vmatpush1.xpose.msra.mxu0 0.0
        %738 = vmatprep.subr.mxu0 0.0
        %739 = vmatpush1.xpose.msra.mxu0 0.0
        %740 = vmatprep.subr.mxu0 0.0
        %741 = vmatpush1.xpose.msra.mxu0 0.0
        %742 = vmatprep.subr.mxu0 0.0
        %743 = vmatpush1.xpose.msra.mxu0 0.0
        %744 = vmatprep.subr.mxu0 0.0
        %745 = vmatpush1.xpose.msra.mxu0 0.0
        %746 = vmatprep.subr.mxu0 0.0
        %747 = vmatpush1.xpose.msra.mxu0 0.0
        %748 = vmatprep.subr.mxu0 0.0
        %749 = vmatpush1.xpose.msra.mxu0 0.0
        %750 = vmatprep.subr.mxu0 0.0
        %751 = vmatpush1.xpose.msra.mxu0 0.0
        %752 = vmatprep.subr.mxu0 0.0
        %753 = vmatpush1.xpose.msra.mxu0 0.0
        %754 = vmatprep.subr.mxu0 0.0
        %755 = vmatpush1.xpose.msra.mxu0 0.0
        %756 = vmatprep.subr.mxu0 0.0
        %757 = vmatpush1.xpose.msra.mxu0 0.0
        %758 = vmatprep.subr.mxu0 0.0
        %759 = vmatpush1.xpose.msra.mxu0 0.0
        %760 = vmatprep.subr.mxu0 0.0
        %761 = vmatpush1.xpose.msra.mxu0 0.0
        %762 = vmatprep.subr.mxu0 0.0
        %763 = vmatpush1.xpose.msra.mxu0 0.0
        %764 = vmatprep.subr.mxu0 0.0
        %765 = vmatpush1.xpose.msra.mxu0 0.0
        %766 = vmatprep.subr.mxu0 0.0
        %767 = vmatpush1.xpose.msra.mxu0 0.0
        %768 = vmatprep.subr.mxu0 0.0
        %769 = vmatpush1.xpose.msra.mxu0 0.0
        %770 = vmatprep.subr.mxu0 0.0
        %771 = vmatpush1.xpose.msra.mxu0 0.0
        %772 = vmatprep.subr.mxu0 0.0
        %773 = vmatpush1.xpose.msra.mxu0 0.0
        %774 = vmatprep.subr.mxu0 0.0
        %775 = vmatpush1.xpose.msra.mxu0 0.0
        %776 = vmatprep.subr.mxu0 0.0
        %777 = vmatpush1.xpose.msra.mxu0 0.0
        %778 = vmatprep.subr.mxu0 0.0
        %779 = vmatpush1.xpose.msra.mxu0 0.0
        %780 = vmatprep.mubr.f32.mxu0 0.0
        %781 = vmatmul.mubr.f32.gmra.mrb[0].mxu0 %v708
        %v782 = vpop.f32.mrb[0].mxu0
        %v783 = vadd.f32 0.0, %v782
        %v784 = vpop.f32.mrb[0].mxu0
        %785 = vmatprep.mubr.f32.mxu0 0.0
        %786 = vmatmul.mubr.f32.gmra.mrb[0].mxu0 %v710
        %v787 = vpop.f32.mrb[0].mxu0
        %v788 = vadd.f32 0.0, %v787
        %v789 = vpop.f32.mrb[0].mxu0
        %790 = vdwg.mxu0
        %v791 = vsel %vm584, %v783, -inf
        %792 = vmax.xlane.f32.xlu0 %v791
        %v793 = vpop.xlane.xlu0 %792
        %v794 = vsel %vm584, %v788, -inf
        %795 = vmax.xlane.f32.xlu0 %v794
        %v796 = vpop.xlane.xlu0 %795
        %v797 = vsub.f32 %v783, %v793
        %v798 = vsub.f32 %v788, %v796
        %v799 = vmul.f32 %v797, 1.442695
        %v800 = vpow.pop %v799
        %v801 = vmul.f32 %v798, 1.442695
        %v802 = vpow.pop %v801
        %v803 = vsel %vm584, %v800, 0.0
        %804 = vadd.xlane.f32.xlu0 %v803
        %v805 = vpop.xlane.xlu0 %804
        %v806 = vsel %vm584, %v802, 0.0
        %807 = vadd.xlane.f32.xlu0 %v806
        %v808 = vpop.xlane.xlu0 %807
        %v809 = vrcp.pop %v805
        %v810 = vrcp.pop %v808
        %v811 = vmul.f32 %v800, %v809
        %v812 = vmul.f32 %v802, %v810
        %813 = vrot.lane.b32.xlu0 %v696, 56
        %v814 = vpop.permute.xlu0 %813
        %815 = vrot.lane.b32.xlu0 %v697, 56
        %v816 = vpop.permute.xlu0 %815
        %v820 = vsel %vm584, %v811, 0
        %v823 = vsel %vm584, %v812, 0
        %825 = vmatprep.subr.mxu0 0.0
        %826 = vmatpush1.msra.mxu0 %v814
        %827 = vmatprep.subr.mxu0 0.0
        %828 = vmatpush1.msra.mxu0 %v816
        %829 = vmatprep.subr.mxu0 0.0
        %830 = vmatpush1.msra.mxu0 0.0
        %831 = vmatprep.subr.mxu0 0.0
        %832 = vmatpush1.msra.mxu0 0.0
        %833 = vmatprep.subr.mxu0 0.0
        %834 = vmatpush1.msra.mxu0 0.0
        %835 = vmatprep.subr.mxu0 0.0
        %836 = vmatpush1.msra.mxu0 0.0
        %837 = vmatprep.subr.mxu0 0.0
        %838 = vmatpush1.msra.mxu0 0.0
        %839 = vmatprep.subr.mxu0 0.0
        %840 = vmatpush1.msra.mxu0 0.0
        %841 = vmatprep.subr.mxu0 0.0
        %842 = vmatpush1.msra.mxu0 0.0
        %843 = vmatprep.subr.mxu0 0.0
        %844 = vmatpush1.msra.mxu0 0.0
        %845 = vmatprep.subr.mxu0 0.0
        %846 = vmatpush1.msra.mxu0 0.0
        %847 = vmatprep.subr.mxu0 0.0
        %848 = vmatpush1.msra.mxu0 0.0
        %849 = vmatprep.subr.mxu0 0.0
        %850 = vmatpush1.msra.mxu0 0.0
        %851 = vmatprep.subr.mxu0 0.0
        %852 = vmatpush1.msra.mxu0 0.0
        %853 = vmatprep.subr.mxu0 0.0
        %854 = vmatpush1.msra.mxu0 0.0
        %855 = vmatprep.subr.mxu0 0.0
        %856 = vmatpush1.msra.mxu0 0.0
        %857 = vmatprep.subr.mxu0 0.0
        %858 = vmatpush1.msra.mxu0 0.0
        %859 = vmatprep.subr.mxu0 0.0
        %860 = vmatpush1.msra.mxu0 0.0
        %861 = vmatprep.subr.mxu0 0.0
        %862 = vmatpush1.msra.mxu0 0.0
        %863 = vmatprep.subr.mxu0 0.0
        %864 = vmatpush1.msra.mxu0 0.0
        %865 = vmatprep.subr.mxu0 0.0
        %866 = vmatpush1.msra.mxu0 0.0
        %867 = vmatprep.subr.mxu0 0.0
        %868 = vmatpush1.msra.mxu0 0.0
        %869 = vmatprep.subr.mxu0 0.0
        %870 = vmatpush1.msra.mxu0 0.0
        %871 = vmatprep.subr.mxu0 0.0
        %872 = vmatpush1.msra.mxu0 0.0
        %873 = vmatprep.subr.mxu0 0.0
        %874 = vmatpush1.msra.mxu0 0.0
        %875 = vmatprep.subr.mxu0 0.0
        %876 = vmatpush1.msra.mxu0 0.0
        %877 = vmatprep.subr.mxu0 0.0
        %878 = vmatpush1.msra.mxu0 0.0
        %879 = vmatprep.subr.mxu0 0.0
        %880 = vmatpush1.msra.mxu0 0.0
        %881 = vmatprep.subr.mxu0 0.0
        %882 = vmatpush1.msra.mxu0 0.0
        %883 = vmatprep.subr.mxu0 0.0
        %884 = vmatpush1.msra.mxu0 0.0
        %885 = vmatprep.subr.mxu0 0.0
        %886 = vmatpush1.msra.mxu0 0.0
        %887 = vmatprep.subr.mxu0 0.0
        %888 = vmatpush1.msra.mxu0 0.0
        %889 = vmatprep.mubr.f32.mxu0 0.0
        %890 = vmatmul.mubr.f32.gmra.mrb[0].mxu0 %v820
        %v891 = vpop.f32.mrb[0].mxu0
        %v892 = vadd.f32 0.0, %v891
        %v893 = vpop.f32.mrb[0].mxu0
        %894 = vmatprep.mubr.f32.mxu0 0.0
        %895 = vmatmul.mubr.f32.gmra.mrb[0].mxu0 %v823
        %v896 = vpop.f32.mrb[0].mxu0
        %v897 = vadd.f32 0.0, %v896
        %v898 = vpop.f32.mrb[0].mxu0
        %899 = vdwg.mxu0
        %902 = vrot.lane.b32.xlu0 %v892, 8
        %v903 = vpop.permute.xlu0 %902
        %904 = vrot.lane.b32.xlu0 %v897, 8
        %v905 = vpop.permute.xlu0 %904
        %vm908 = vcmask 130112
        %909 = vst.msk [vmem:[#allocation3] sm:$0xff] %vm908, %v903
        %910 = vst.msk [vmem:[#allocation3 + $0x8] sm:$0xff] %vm908, %v905
        %v911 = vld [vmem:[#allocation2] sm:$0xff]
        %v912 = vld [vmem:[#allocation2 + $0x8] sm:$0xff]
        %913 = vrot.lane.b32.xlu0 %v486, 112
        %v914 = vpop.permute.xlu0 %913
        %915 = vrot.lane.b32.xlu0 %v491, 112
        %v916 = vpop.permute.xlu0 %915
        %919 = vrot.lane.b32.xlu0 %v911, 112
        %v920 = vpop.permute.xlu0 %919
        %921 = vrot.lane.b32.xlu0 %v912, 112
        %v922 = vpop.permute.xlu0 %921
        %v923 = vsel %vm496, %v914, 0
        %v925 = vsel %vm496, %v916, 0
        %v927 = vsel %vm496, %v920, 0
        %v929 = vsel %vm496, %v922, 0
        %931 = vmatprep.subr.mxu0 0.0
        %932 = vmatpush1.xpose.msra.mxu0 %v927
        %933 = vmatprep.subr.mxu0 0.0
        %934 = vmatpush1.xpose.msra.mxu0 %v929
        %935 = vmatprep.subr.mxu0 0.0
        %936 = vmatpush1.xpose.msra.mxu0 0.0
        %937 = vmatprep.subr.mxu0 0.0
        %938 = vmatpush1.xpose.msra.mxu0 0.0
        %939 = vmatprep.subr.mxu0 0.0
        %940 = vmatpush1.xpose.msra.mxu0 0.0
        %941 = vmatprep.subr.mxu0 0.0
        %942 = vmatpush1.xpose.msra.mxu0 0.0
        %943 = vmatprep.subr.mxu0 0.0
        %944 = vmatpush1.xpose.msra.mxu0 0.0
        %945 = vmatprep.subr.mxu0 0.0
        %946 = vmatpush1.xpose.msra.mxu0 0.0
        %947 = vmatprep.subr.mxu0 0.0
        %948 = vmatpush1.xpose.msra.mxu0 0.0
        %949 = vmatprep.subr.mxu0 0.0
        %950 = vmatpush1.xpose.msra.mxu0 0.0
        %951 = vmatprep.subr.mxu0 0.0
        %952 = vmatpush1.xpose.msra.mxu0 0.0
        %953 = vmatprep.subr.mxu0 0.0
        %954 = vmatpush1.xpose.msra.mxu0 0.0
        %955 = vmatprep.subr.mxu0 0.0
        %956 = vmatpush1.xpose.msra.mxu0 0.0
        %957 = vmatprep.subr.mxu0 0.0
        %958 = vmatpush1.xpose.msra.mxu0 0.0
        %959 = vmatprep.subr.mxu0 0.0
        %960 = vmatpush1.xpose.msra.mxu0 0.0
        %961 = vmatprep.subr.mxu0 0.0
        %962 = vmatpush1.xpose.msra.mxu0 0.0
        %963 = vmatprep.subr.mxu0 0.0
        %964 = vmatpush1.xpose.msra.mxu0 0.0
        %965 = vmatprep.subr.mxu0 0.0
        %966 = vmatpush1.xpose.msra.mxu0 0.0
        %967 = vmatprep.subr.mxu0 0.0
        %968 = vmatpush1.xpose.msra.mxu0 0.0
        %969 = vmatprep.subr.mxu0 0.0
        %970 = vmatpush1.xpose.msra.mxu0 0.0
        %971 = vmatprep.subr.mxu0 0.0
        %972 = vmatpush1.xpose.msra.mxu0 0.0
        %973 = vmatprep.subr.mxu0 0.0
        %974 = vmatpush1.xpose.msra.mxu0 0.0
        %975 = vmatprep.subr.mxu0 0.0
        %976 = vmatpush1.xpose.msra.mxu0 0.0
        %977 = vmatprep.subr.mxu0 0.0
        %978 = vmatpush1.xpose.msra.mxu0 0.0
        %979 = vmatprep.subr.mxu0 0.0
        %980 = vmatpush1.xpose.msra.mxu0 0.0
        %981 = vmatprep.subr.mxu0 0.0
        %982 = vmatpush1.xpose.msra.mxu0 0.0
        %983 = vmatprep.subr.mxu0 0.0
        %984 = vmatpush1.xpose.msra.mxu0 0.0
        %985 = vmatprep.subr.mxu0 0.0
        %986 = vmatpush1.xpose.msra.mxu0 0.0
        %987 = vmatprep.subr.mxu0 0.0
        %988 = vmatpush1.xpose.msra.mxu0 0.0
        %989 = vmatprep.subr.mxu0 0.0
        %990 = vmatpush1.xpose.msra.mxu0 0.0
        %991 = vmatprep.subr.mxu0 0.0
        %992 = vmatpush1.xpose.msra.mxu0 0.0
        %993 = vmatprep.subr.mxu0 0.0
        %994 = vmatpush1.xpose.msra.mxu0 0.0
        %995 = vmatprep.mubr.f32.mxu0 0.0
        %996 = vmatmul.mubr.f32.gmra.mrb[0].mxu0 %v923
        %v997 = vpop.f32.mrb[0].mxu0
        %v998 = vadd.f32 0.0, %v997
        %v999 = vpop.f32.mrb[0].mxu0
        %1000 = vmatprep.mubr.f32.mxu0 0.0
        %1001 = vmatmul.mubr.f32.gmra.mrb[0].mxu0 %v925
        %v1002 = vpop.f32.mrb[0].mxu0
        %v1003 = vadd.f32 0.0, %v1002
        %v1004 = vpop.f32.mrb[0].mxu0
        %1005 = vdwg.mxu0
        %v1006 = vsel %vm584, %v998, -inf
        %1007 = vmax.xlane.f32.xlu0 %v1006
        %v1008 = vpop.xlane.xlu0 %1007
        %v1009 = vsel %vm584, %v1003, -inf
        %1010 = vmax.xlane.f32.xlu0 %v1009
        %v1011 = vpop.xlane.xlu0 %1010
        %v1012 = vsub.f32 %v998, %v1008
        %v1013 = vsub.f32 %v1003, %v1011
        %v1014 = vmul.f32 %v1012, 1.442695
        %v1015 = vpow.pop %v1014
        %v1016 = vmul.f32 %v1013, 1.442695
        %v1017 = vpow.pop %v1016
        %v1018 = vsel %vm584, %v1015, 0.0
        %1019 = vadd.xlane.f32.xlu0 %v1018
        %v1020 = vpop.xlane.xlu0 %1019
        %v1021 = vsel %vm584, %v1017, 0.0
        %1022 = vadd.xlane.f32.xlu0 %v1021
        %v1023 = vpop.xlane.xlu0 %1022
        %v1024 = vrcp.pop %v1020
        %v1025 = vrcp.pop %v1023
        %v1026 = vmul.f32 %v1015, %v1024
        %v1027 = vmul.f32 %v1017, %v1025
        %1028 = vrot.lane.b32.xlu0 %v911, 48
        %v1029 = vpop.permute.xlu0 %1028
        %1030 = vrot.lane.b32.xlu0 %v912, 48
        %v1031 = vpop.permute.xlu0 %1030
        %v1035 = vsel %vm584, %v1026, 0
        %v1038 = vsel %vm584, %v1027, 0
        %1040 = vmatprep.subr.mxu0 0.0
        %1041 = vmatpush1.msra.mxu0 %v1029
        %1042 = vmatprep.subr.mxu0 0.0
        %1043 = vmatpush1.msra.mxu0 %v1031
        %1044 = vmatprep.subr.mxu0 0.0
        %1045 = vmatpush1.msra.mxu0 0.0
        %1046 = vmatprep.subr.mxu0 0.0
        %1047 = vmatpush1.msra.mxu0 0.0
        %1048 = vmatprep.subr.mxu0 0.0
        %1049 = vmatpush1.msra.mxu0 0.0
        %1050 = vmatprep.subr.mxu0 0.0
        %1051 = vmatpush1.msra.mxu0 0.0
        %1052 = vmatprep.subr.mxu0 0.0
        %1053 = vmatpush1.msra.mxu0 0.0
        %1054 = vmatprep.subr.mxu0 0.0
        %1055 = vmatpush1.msra.mxu0 0.0
        %1056 = vmatprep.subr.mxu0 0.0
        %1057 = vmatpush1.msra.mxu0 0.0
        %1058 = vmatprep.subr.mxu0 0.0
        %1059 = vmatpush1.msra.mxu0 0.0
        %1060 = vmatprep.subr.mxu0 0.0
        %1061 = vmatpush1.msra.mxu0 0.0
        %1062 = vmatprep.subr.mxu0 0.0
        %1063 = vmatpush1.msra.mxu0 0.0
        %1064 = vmatprep.subr.mxu0 0.0
        %1065 = vmatpush1.msra.mxu0 0.0
        %1066 = vmatprep.subr.mxu0 0.0
        %1067 = vmatpush1.msra.mxu0 0.0
        %1068 = vmatprep.subr.mxu0 0.0
        %1069 = vmatpush1.msra.mxu0 0.0
        %1070 = vmatprep.subr.mxu0 0.0
        %1071 = vmatpush1.msra.mxu0 0.0
        %1072 = vmatprep.subr.mxu0 0.0
        %1073 = vmatpush1.msra.mxu0 0.0
        %1074 = vmatprep.subr.mxu0 0.0
        %1075 = vmatpush1.msra.mxu0 0.0
        %1076 = vmatprep.subr.mxu0 0.0
        %1077 = vmatpush1.msra.mxu0 0.0
        %1078 = vmatprep.subr.mxu0 0.0
        %1079 = vmatpush1.msra.mxu0 0.0
        %1080 = vmatprep.subr.mxu0 0.0
        %1081 = vmatpush1.msra.mxu0 0.0
        %1082 = vmatprep.subr.mxu0 0.0
        %1083 = vmatpush1.msra.mxu0 0.0
        %1084 = vmatprep.subr.mxu0 0.0
        %1085 = vmatpush1.msra.mxu0 0.0
        %1086 = vmatprep.subr.mxu0 0.0
        %1087 = vmatpush1.msra.mxu0 0.0
        %1088 = vmatprep.subr.mxu0 0.0
        %1089 = vmatpush1.msra.mxu0 0.0
        %1090 = vmatprep.subr.mxu0 0.0
        %1091 = vmatpush1.msra.mxu0 0.0
        %1092 = vmatprep.subr.mxu0 0.0
        %1093 = vmatpush1.msra.mxu0 0.0
        %1094 = vmatprep.subr.mxu0 0.0
        %1095 = vmatpush1.msra.mxu0 0.0
        %1096 = vmatprep.subr.mxu0 0.0
        %1097 = vmatpush1.msra.mxu0 0.0
        %1098 = vmatprep.subr.mxu0 0.0
        %1099 = vmatpush1.msra.mxu0 0.0
        %1100 = vmatprep.subr.mxu0 0.0
        %1101 = vmatpush1.msra.mxu0 0.0
        %1102 = vmatprep.subr.mxu0 0.0
        %1103 = vmatpush1.msra.mxu0 0.0
        %1104 = vmatprep.mubr.f32.mxu0 0.0
        %1105 = vmatmul.mubr.f32.gmra.mrb[0].mxu0 %v1035
        %v1106 = vpop.f32.mrb[0].mxu0
        %v1107 = vadd.f32 0.0, %v1106
        %v1108 = vpop.f32.mrb[0].mxu0
        %1109 = vmatprep.mubr.f32.mxu0 0.0
        %1110 = vmatmul.mubr.f32.gmra.mrb[0].mxu0 %v1038
        %v1111 = vpop.f32.mrb[0].mxu0
        %v1112 = vadd.f32 0.0, %v1111
        %v1113 = vpop.f32.mrb[0].mxu0
        %1114 = vdwg.mxu0
        %1117 = vrot.lane.b32.xlu0 %v1107, 16
        %v1118 = vpop.permute.xlu0 %1117
        %1119 = vrot.lane.b32.xlu0 %v1112, 16
        %v1120 = vpop.permute.xlu0 %1119
        %vm1123 = vcmask 195712
        %1124 = vst.msk [vmem:[#allocation3] sm:$0xff] %vm1123, %v1118
        %1125 = vst.msk [vmem:[#allocation3 + $0x8] sm:$0xff] %vm1123, %v1120
        %v1126 = vld [vmem:[#allocation2] sm:$0xff]
        %v1127 = vld [vmem:[#allocation2 + $0x8] sm:$0xff]
        %1128 = vrot.lane.b32.xlu0 %v486, 104
        %v1129 = vpop.permute.xlu0 %1128
        %1130 = vrot.lane.b32.xlu0 %v491, 104
        %v1131 = vpop.permute.xlu0 %1130
        %1134 = vrot.lane.b32.xlu0 %v1126, 104
        %v1135 = vpop.permute.xlu0 %1134
        %1136 = vrot.lane.b32.xlu0 %v1127, 104
        %v1137 = vpop.permute.xlu0 %1136
        %v1138 = vsel %vm496, %v1129, 0
        %v1140 = vsel %vm496, %v1131, 0
        %v1142 = vsel %vm496, %v1135, 0
        %v1144 = vsel %vm496, %v1137, 0
        %1146 = vmatprep.subr.mxu0 0.0
        %1147 = vmatpush1.xpose.msra.mxu0 %v1142
        %1148 = vmatprep.subr.mxu0 0.0
        %1149 = vmatpush1.xpose.msra.mxu0 %v1144
        %1150 = vmatprep.subr.mxu0 0.0
        %1151 = vmatpush1.xpose.msra.mxu0 0.0
        %1152 = vmatprep.subr.mxu0 0.0
        %1153 = vmatpush1.xpose.msra.mxu0 0.0
        %1154 = vmatprep.subr.mxu0 0.0
        %1155 = vmatpush1.xpose.msra.mxu0 0.0
        %1156 = vmatprep.subr.mxu0 0.0
        %1157 = vmatpush1.xpose.msra.mxu0 0.0
        %1158 = vmatprep.subr.mxu0 0.0
        %1159 = vmatpush1.xpose.msra.mxu0 0.0
        %1160 = vmatprep.subr.mxu0 0.0
        %1161 = vmatpush1.xpose.msra.mxu0 0.0
        %1162 = vmatprep.subr.mxu0 0.0
        %1163 = vmatpush1.xpose.msra.mxu0 0.0
        %1164 = vmatprep.subr.mxu0 0.0
        %1165 = vmatpush1.xpose.msra.mxu0 0.0
        %1166 = vmatprep.subr.mxu0 0.0
        %1167 = vmatpush1.xpose.msra.mxu0 0.0
        %1168 = vmatprep.subr.mxu0 0.0
        %1169 = vmatpush1.xpose.msra.mxu0 0.0
        %1170 = vmatprep.subr.mxu0 0.0
        %1171 = vmatpush1.xpose.msra.mxu0 0.0
        %1172 = vmatprep.subr.mxu0 0.0
        %1173 = vmatpush1.xpose.msra.mxu0 0.0
        %1174 = vmatprep.subr.mxu0 0.0
        %1175 = vmatpush1.xpose.msra.mxu0 0.0
        %1176 = vmatprep.subr.mxu0 0.0
        %1177 = vmatpush1.xpose.msra.mxu0 0.0
        %1178 = vmatprep.subr.mxu0 0.0
        %1179 = vmatpush1.xpose.msra.mxu0 0.0
        %1180 = vmatprep.subr.mxu0 0.0
        %1181 = vmatpush1.xpose.msra.mxu0 0.0
        %1182 = vmatprep.subr.mxu0 0.0
        %1183 = vmatpush1.xpose.msra.mxu0 0.0
        %1184 = vmatprep.subr.mxu0 0.0
        %1185 = vmatpush1.xpose.msra.mxu0 0.0
        %1186 = vmatprep.subr.mxu0 0.0
        %1187 = vmatpush1.xpose.msra.mxu0 0.0
        %1188 = vmatprep.subr.mxu0 0.0
        %1189 = vmatpush1.xpose.msra.mxu0 0.0
        %1190 = vmatprep.subr.mxu0 0.0
        %1191 = vmatpush1.xpose.msra.mxu0 0.0
        %1192 = vmatprep.subr.mxu0 0.0
        %1193 = vmatpush1.xpose.msra.mxu0 0.0
        %1194 = vmatprep.subr.mxu0 0.0
        %1195 = vmatpush1.xpose.msra.mxu0 0.0
        %1196 = vmatprep.subr.mxu0 0.0
        %1197 = vmatpush1.xpose.msra.mxu0 0.0
        %1198 = vmatprep.subr.mxu0 0.0
        %1199 = vmatpush1.xpose.msra.mxu0 0.0
        %1200 = vmatprep.subr.mxu0 0.0
        %1201 = vmatpush1.xpose.msra.mxu0 0.0
        %1202 = vmatprep.subr.mxu0 0.0
        %1203 = vmatpush1.xpose.msra.mxu0 0.0
        %1204 = vmatprep.subr.mxu0 0.0
        %1205 = vmatpush1.xpose.msra.mxu0 0.0
        %1206 = vmatprep.subr.mxu0 0.0
        %1207 = vmatpush1.xpose.msra.mxu0 0.0
        %1208 = vmatprep.subr.mxu0 0.0
        %1209 = vmatpush1.xpose.msra.mxu0 0.0
        %1210 = vmatprep.mubr.f32.mxu0 0.0
        %1211 = vmatmul.mubr.f32.gmra.mrb[0].mxu0 %v1138
        %v1212 = vpop.f32.mrb[0].mxu0
        %v1213 = vadd.f32 0.0, %v1212
        %v1214 = vpop.f32.mrb[0].mxu0
        %1215 = vmatprep.mubr.f32.mxu0 0.0
        %1216 = vmatmul.mubr.f32.gmra.mrb[0].mxu0 %v1140
        %v1217 = vpop.f32.mrb[0].mxu0
        %v1218 = vadd.f32 0.0, %v1217
        %v1219 = vpop.f32.mrb[0].mxu0
        %1220 = vdwg.mxu0
        %v1221 = vsel %vm584, %v1213, -inf
        %1222 = vmax.xlane.f32.xlu0 %v1221
        %v1223 = vpop.xlane.xlu0 %1222
        %v1224 = vsel %vm584, %v1218, -inf
        %1225 = vmax.xlane.f32.xlu0 %v1224
        %v1226 = vpop.xlane.xlu0 %1225
        %v1227 = vsub.f32 %v1213, %v1223
        %v1228 = vsub.f32 %v1218, %v1226
        %v1229 = vmul.f32 %v1227, 1.442695
        %v1230 = vpow.pop %v1229
        %v1231 = vmul.f32 %v1228, 1.442695
        %v1232 = vpow.pop %v1231
        %v1233 = vsel %vm584, %v1230, 0.0
        %1234 = vadd.xlane.f32.xlu0 %v1233
        %v1235 = vpop.xlane.xlu0 %1234
        %v1236 = vsel %vm584, %v1232, 0.0
        %1237 = vadd.xlane.f32.xlu0 %v1236
        %v1238 = vpop.xlane.xlu0 %1237
        %v1239 = vrcp.pop %v1235
        %v1240 = vrcp.pop %v1238
        %v1241 = vmul.f32 %v1230, %v1239
        %v1242 = vmul.f32 %v1232, %v1240
        %1243 = vrot.lane.b32.xlu0 %v1126, 40
        %v1244 = vpop.permute.xlu0 %1243
        %1245 = vrot.lane.b32.xlu0 %v1127, 40
        %v1246 = vpop.permute.xlu0 %1245
        %v1250 = vsel %vm584, %v1241, 0
        %v1253 = vsel %vm584, %v1242, 0
        %1255 = vmatprep.subr.mxu0 0.0
        %1256 = vmatpush1.msra.mxu0 %v1244
        %1257 = vmatprep.subr.mxu0 0.0
        %1258 = vmatpush1.msra.mxu0 %v1246
        %1259 = vmatprep.subr.mxu0 0.0
        %1260 = vmatpush1.msra.mxu0 0.0
        %1261 = vmatprep.subr.mxu0 0.0
        %1262 = vmatpush1.msra.mxu0 0.0
        %1263 = vmatprep.subr.mxu0 0.0
        %1264 = vmatpush1.msra.mxu0 0.0
        %1265 = vmatprep.subr.mxu0 0.0
        %1266 = vmatpush1.msra.mxu0 0.0
        %1267 = vmatprep.subr.mxu0 0.0
        %1268 = vmatpush1.msra.mxu0 0.0
        %1269 = vmatprep.subr.mxu0 0.0
        %1270 = vmatpush1.msra.mxu0 0.0
        %1271 = vmatprep.subr.mxu0 0.0
        %1272 = vmatpush1.msra.mxu0 0.0
        %1273 = vmatprep.subr.mxu0 0.0
        %1274 = vmatpush1.msra.mxu0 0.0
        %1275 = vmatprep.subr.mxu0 0.0
        %1276 = vmatpush1.msra.mxu0 0.0
        %1277 = vmatprep.subr.mxu0 0.0
        %1278 = vmatpush1.msra.mxu0 0.0
        %1279 = vmatprep.subr.mxu0 0.0
        %1280 = vmatpush1.msra.mxu0 0.0
        %1281 = vmatprep.subr.mxu0 0.0
        %1282 = vmatpush1.msra.mxu0 0.0
        %1283 = vmatprep.subr.mxu0 0.0
        %1284 = vmatpush1.msra.mxu0 0.0
        %1285 = vmatprep.subr.mxu0 0.0
        %1286 = vmatpush1.msra.mxu0 0.0
        %1287 = vmatprep.subr.mxu0 0.0
        %1288 = vmatpush1.msra.mxu0 0.0
        %1289 = vmatprep.subr.mxu0 0.0
        %1290 = vmatpush1.msra.mxu0 0.0
        %1291 = vmatprep.subr.mxu0 0.0
        %1292 = vmatpush1.msra.mxu0 0.0
        %1293 = vmatprep.subr.mxu0 0.0
        %1294 = vmatpush1.msra.mxu0 0.0
        %1295 = vmatprep.subr.mxu0 0.0
        %1296 = vmatpush1.msra.mxu0 0.0
        %1297 = vmatprep.subr.mxu0 0.0
        %1298 = vmatpush1.msra.mxu0 0.0
        %1299 = vmatprep.subr.mxu0 0.0
        %1300 = vmatpush1.msra.mxu0 0.0
        %1301 = vmatprep.subr.mxu0 0.0
        %1302 = vmatpush1.msra.mxu0 0.0
        %1303 = vmatprep.subr.mxu0 0.0
        %1304 = vmatpush1.msra.mxu0 0.0
        %1305 = vmatprep.subr.mxu0 0.0
        %1306 = vmatpush1.msra.mxu0 0.0
        %1307 = vmatprep.subr.mxu0 0.0
        %1308 = vmatpush1.msra.mxu0 0.0
        %1309 = vmatprep.subr.mxu0 0.0
        %1310 = vmatpush1.msra.mxu0 0.0
        %1311 = vmatprep.subr.mxu0 0.0
        %1312 = vmatpush1.msra.mxu0 0.0
        %1313 = vmatprep.subr.mxu0 0.0
        %1314 = vmatpush1.msra.mxu0 0.0
        %1315 = vmatprep.subr.mxu0 0.0
        %1316 = vmatpush1.msra.mxu0 0.0
        %1317 = vmatprep.subr.mxu0 0.0
        %1318 = vmatpush1.msra.mxu0 0.0
        %1319 = vmatprep.mubr.f32.mxu0 0.0
        %1320 = vmatmul.mubr.f32.gmra.mrb[0].mxu0 %v1250
        %v1321 = vpop.f32.mrb[0].mxu0
        %v1322 = vadd.f32 0.0, %v1321
        %v1323 = vpop.f32.mrb[0].mxu0
        %1324 = vmatprep.mubr.f32.mxu0 0.0
        %1325 = vmatmul.mubr.f32.gmra.mrb[0].mxu0 %v1253
        %v1326 = vpop.f32.mrb[0].mxu0
        %v1327 = vadd.f32 0.0, %v1326
        %v1328 = vpop.f32.mrb[0].mxu0
        %1329 = vdwg.mxu0
        %1332 = vrot.lane.b32.xlu0 %v1322, 24
        %v1333 = vpop.permute.xlu0 %1332
        %1334 = vrot.lane.b32.xlu0 %v1327, 24
        %v1335 = vpop.permute.xlu0 %1334
        %vm1338 = vcmask 261312
        %1339 = vst.msk [vmem:[#allocation3] sm:$0xff] %vm1338, %v1333
        %1340 = vst.msk [vmem:[#allocation3 + $0x8] sm:$0xff] %vm1338, %v1335
        %v1341 = vld [vmem:[#allocation2] sm:$0xff]
        %v1342 = vld [vmem:[#allocation2 + $0x8] sm:$0xff]
        %1343 = vrot.lane.b32.xlu0 %v486, 96
        %v1344 = vpop.permute.xlu0 %1343
        %1345 = vrot.lane.b32.xlu0 %v491, 96
        %v1346 = vpop.permute.xlu0 %1345
        %1349 = vrot.lane.b32.xlu0 %v1341, 96
        %v1350 = vpop.permute.xlu0 %1349
        %1351 = vrot.lane.b32.xlu0 %v1342, 96
        %v1352 = vpop.permute.xlu0 %1351
        %v1353 = vsel %vm496, %v1344, 0
        %v1355 = vsel %vm496, %v1346, 0
        %v1357 = vsel %vm496, %v1350, 0
        %v1359 = vsel %vm496, %v1352, 0
        %1361 = vmatprep.subr.mxu0 0.0
        %1362 = vmatpush1.xpose.msra.mxu0 %v1357
        %1363 = vmatprep.subr.mxu0 0.0
        %1364 = vmatpush1.xpose.msra.mxu0 %v1359
        %1365 = vmatprep.subr.mxu0 0.0
        %1366 = vmatpush1.xpose.msra.mxu0 0.0
        %1367 = vmatprep.subr.mxu0 0.0
        %1368 = vmatpush1.xpose.msra.mxu0 0.0
        %1369 = vmatprep.subr.mxu0 0.0
        %1370 = vmatpush1.xpose.msra.mxu0 0.0
        %1371 = vmatprep.subr.mxu0 0.0
        %1372 = vmatpush1.xpose.msra.mxu0 0.0
        %1373 = vmatprep.subr.mxu0 0.0
        %1374 = vmatpush1.xpose.msra.mxu0 0.0
        %1375 = vmatprep.subr.mxu0 0.0
        %1376 = vmatpush1.xpose.msra.mxu0 0.0
        %1377 = vmatprep.subr.mxu0 0.0
        %1378 = vmatpush1.xpose.msra.mxu0 0.0
        %1379 = vmatprep.subr.mxu0 0.0
        %1380 = vmatpush1.xpose.msra.mxu0 0.0
        %1381 = vmatprep.subr.mxu0 0.0
        %1382 = vmatpush1.xpose.msra.mxu0 0.0
        %1383 = vmatprep.subr.mxu0 0.0
        %1384 = vmatpush1.xpose.msra.mxu0 0.0
        %1385 = vmatprep.subr.mxu0 0.0
        %1386 = vmatpush1.xpose.msra.mxu0 0.0
        %1387 = vmatprep.subr.mxu0 0.0
        %1388 = vmatpush1.xpose.msra.mxu0 0.0
        %1389 = vmatprep.subr.mxu0 0.0
        %1390 = vmatpush1.xpose.msra.mxu0 0.0
        %1391 = vmatprep.subr.mxu0 0.0
        %1392 = vmatpush1.xpose.msra.mxu0 0.0
        %1393 = vmatprep.subr.mxu0 0.0
        %1394 = vmatpush1.xpose.msra.mxu0 0.0
        %1395 = vmatprep.subr.mxu0 0.0
        %1396 = vmatpush1.xpose.msra.mxu0 0.0
        %1397 = vmatprep.subr.mxu0 0.0
        %1398 = vmatpush1.xpose.msra.mxu0 0.0
        %1399 = vmatprep.subr.mxu0 0.0
        %1400 = vmatpush1.xpose.msra.mxu0 0.0
        %1401 = vmatprep.subr.mxu0 0.0
        %1402 = vmatpush1.xpose.msra.mxu0 0.0
        %1403 = vmatprep.subr.mxu0 0.0
        %1404 = vmatpush1.xpose.msra.mxu0 0.0
        %1405 = vmatprep.subr.mxu0 0.0
        %1406 = vmatpush1.xpose.msra.mxu0 0.0
        %1407 = vmatprep.subr.mxu0 0.0
        %1408 = vmatpush1.xpose.msra.mxu0 0.0
        %1409 = vmatprep.subr.mxu0 0.0
        %1410 = vmatpush1.xpose.msra.mxu0 0.0
        %1411 = vmatprep.subr.mxu0 0.0
        %1412 = vmatpush1.xpose.msra.mxu0 0.0
        %1413 = vmatprep.subr.mxu0 0.0
        %1414 = vmatpush1.xpose.msra.mxu0 0.0
        %1415 = vmatprep.subr.mxu0 0.0
        %1416 = vmatpush1.xpose.msra.mxu0 0.0
        %1417 = vmatprep.subr.mxu0 0.0
        %1418 = vmatpush1.xpose.msra.mxu0 0.0
        %1419 = vmatprep.subr.mxu0 0.0
        %1420 = vmatpush1.xpose.msra.mxu0 0.0
        %1421 = vmatprep.subr.mxu0 0.0
        %1422 = vmatpush1.xpose.msra.mxu0 0.0
        %1423 = vmatprep.subr.mxu0 0.0
        %1424 = vmatpush1.xpose.msra.mxu0 0.0
        %1425 = vmatprep.mubr.f32.mxu0 0.0
        %1426 = vmatmul.mubr.f32.gmra.mrb[0].mxu0 %v1353
        %v1427 = vpop.f32.mrb[0].mxu0
        %v1428 = vadd.f32 0.0, %v1427
        %v1429 = vpop.f32.mrb[0].mxu0
        %1430 = vmatprep.mubr.f32.mxu0 0.0
        %1431 = vmatmul.mubr.f32.gmra.mrb[0].mxu0 %v1355
        %v1432 = vpop.f32.mrb[0].mxu0
        %v1433 = vadd.f32 0.0, %v1432
        %v1434 = vpop.f32.mrb[0].mxu0
        %1435 = vdwg.mxu0
        %v1436 = vsel %vm584, %v1428, -inf
        %1437 = vmax.xlane.f32.xlu0 %v1436
        %v1438 = vpop.xlane.xlu0 %1437
        %v1439 = vsel %vm584, %v1433, -inf
        %1440 = vmax.xlane.f32.xlu0 %v1439
        %v1441 = vpop.xlane.xlu0 %1440
        %v1442 = vsub.f32 %v1428, %v1438
        %v1443 = vsub.f32 %v1433, %v1441
        %v1444 = vmul.f32 %v1442, 1.442695
        %v1445 = vpow.pop %v1444
        %v1446 = vmul.f32 %v1443, 1.442695
        %v1447 = vpow.pop %v1446
        %v1448 = vsel %vm584, %v1445, 0.0
        %1449 = vadd.xlane.f32.xlu0 %v1448
        %v1450 = vpop.xlane.xlu0 %1449
        %v1451 = vsel %vm584, %v1447, 0.0
        %1452 = vadd.xlane.f32.xlu0 %v1451
        %v1453 = vpop.xlane.xlu0 %1452
        %v1454 = vrcp.pop %v1450
        %v1455 = vrcp.pop %v1453
        %v1456 = vmul.f32 %v1445, %v1454
        %v1457 = vmul.f32 %v1447, %v1455
        %1458 = vrot.lane.b32.xlu0 %v1341, 32
        %v1459 = vpop.permute.xlu0 %1458
        %1460 = vrot.lane.b32.xlu0 %v1342, 32
        %v1461 = vpop.permute.xlu0 %1460
        %v1465 = vsel %vm584, %v1456, 0
        %v1468 = vsel %vm584, %v1457, 0
        %1470 = vmatprep.subr.mxu0 0.0
        %1471 = vmatpush1.msra.mxu0 %v1459
        %1472 = vmatprep.subr.mxu0 0.0
        %1473 = vmatpush1.msra.mxu0 %v1461
        %1474 = vmatprep.subr.mxu0 0.0
        %1475 = vmatpush1.msra.mxu0 0.0
        %1476 = vmatprep.subr.mxu0 0.0
        %1477 = vmatpush1.msra.mxu0 0.0
        %1478 = vmatprep.subr.mxu0 0.0
        %1479 = vmatpush1.msra.mxu0 0.0
        %1480 = vmatprep.subr.mxu0 0.0
        %1481 = vmatpush1.msra.mxu0 0.0
        %1482 = vmatprep.subr.mxu0 0.0
        %1483 = vmatpush1.msra.mxu0 0.0
        %1484 = vmatprep.subr.mxu0 0.0
        %1485 = vmatpush1.msra.mxu0 0.0
        %1486 = vmatprep.subr.mxu0 0.0
        %1487 = vmatpush1.msra.mxu0 0.0
        %1488 = vmatprep.subr.mxu0 0.0
        %1489 = vmatpush1.msra.mxu0 0.0
        %1490 = vmatprep.subr.mxu0 0.0
        %1491 = vmatpush1.msra.mxu0 0.0
        %1492 = vmatprep.subr.mxu0 0.0
        %1493 = vmatpush1.msra.mxu0 0.0
        %1494 = vmatprep.subr.mxu0 0.0
        %1495 = vmatpush1.msra.mxu0 0.0
        %1496 = vmatprep.subr.mxu0 0.0
        %1497 = vmatpush1.msra.mxu0 0.0
        %1498 = vmatprep.subr.mxu0 0.0
        %1499 = vmatpush1.msra.mxu0 0.0
        %1500 = vmatprep.subr.mxu0 0.0
        %1501 = vmatpush1.msra.mxu0 0.0
        %1502 = vmatprep.subr.mxu0 0.0
        %1503 = vmatpush1.msra.mxu0 0.0
        %1504 = vmatprep.subr.mxu0 0.0
        %1505 = vmatpush1.msra.mxu0 0.0
        %1506 = vmatprep.subr.mxu0 0.0
        %1507 = vmatpush1.msra.mxu0 0.0
        %1508 = vmatprep.subr.mxu0 0.0
        %1509 = vmatpush1.msra.mxu0 0.0
        %1510 = vmatprep.subr.mxu0 0.0
        %1511 = vmatpush1.msra.mxu0 0.0
        %1512 = vmatprep.subr.mxu0 0.0
        %1513 = vmatpush1.msra.mxu0 0.0
        %1514 = vmatprep.subr.mxu0 0.0
        %1515 = vmatpush1.msra.mxu0 0.0
        %1516 = vmatprep.subr.mxu0 0.0
        %1517 = vmatpush1.msra.mxu0 0.0
        %1518 = vmatprep.subr.mxu0 0.0
        %1519 = vmatpush1.msra.mxu0 0.0
        %1520 = vmatprep.subr.mxu0 0.0
        %1521 = vmatpush1.msra.mxu0 0.0
        %1522 = vmatprep.subr.mxu0 0.0
        %1523 = vmatpush1.msra.mxu0 0.0
        %1524 = vmatprep.subr.mxu0 0.0
        %1525 = vmatpush1.msra.mxu0 0.0
        %1526 = vmatprep.subr.mxu0 0.0
        %1527 = vmatpush1.msra.mxu0 0.0
        %1528 = vmatprep.subr.mxu0 0.0
        %1529 = vmatpush1.msra.mxu0 0.0
        %1530 = vmatprep.subr.mxu0 0.0
        %1531 = vmatpush1.msra.mxu0 0.0
        %1532 = vmatprep.subr.mxu0 0.0
        %1533 = vmatpush1.msra.mxu0 0.0
        %1534 = vmatprep.mubr.f32.mxu0 0.0
        %1535 = vmatmul.mubr.f32.gmra.mrb[0].mxu0 %v1465
        %v1536 = vpop.f32.mrb[0].mxu0
        %v1537 = vadd.f32 0.0, %v1536
        %v1538 = vpop.f32.mrb[0].mxu0
        %1539 = vmatprep.mubr.f32.mxu0 0.0
        %1540 = vmatmul.mubr.f32.gmra.mrb[0].mxu0 %v1468
        %v1541 = vpop.f32.mrb[0].mxu0
        %v1542 = vadd.f32 0.0, %v1541
        %v1543 = vpop.f32.mrb[0].mxu0
        %1544 = vdwg.mxu0
        %1547 = vrot.lane.b32.xlu0 %v1537, 32
        %v1548 = vpop.permute.xlu0 %1547
        %1549 = vrot.lane.b32.xlu0 %v1542, 32
        %v1550 = vpop.permute.xlu0 %1549
        %vm1553 = vcmask 326912
        %1554 = vst.msk [vmem:[#allocation3] sm:$0xff] %vm1553, %v1548
        %1555 = vst.msk [vmem:[#allocation3 + $0x8] sm:$0xff] %vm1553, %v1550
        %v1556 = vld [vmem:[#allocation2] sm:$0xff]
        %v1557 = vld [vmem:[#allocation2 + $0x8] sm:$0xff]
        %1558 = vrot.lane.b32.xlu0 %v486, 88
        %v1559 = vpop.permute.xlu0 %1558
        %1560 = vrot.lane.b32.xlu0 %v491, 88
        %v1561 = vpop.permute.xlu0 %1560
        %1564 = vrot.lane.b32.xlu0 %v1556, 88
        %v1565 = vpop.permute.xlu0 %1564
        %1566 = vrot.lane.b32.xlu0 %v1557, 88
        %v1567 = vpop.permute.xlu0 %1566
        %v1568 = vsel %vm496, %v1559, 0
        %v1570 = vsel %vm496, %v1561, 0
        %v1572 = vsel %vm496, %v1565, 0
        %v1574 = vsel %vm496, %v1567, 0
        %1576 = vmatprep.subr.mxu0 0.0
        %1577 = vmatpush1.xpose.msra.mxu0 %v1572
        %1578 = vmatprep.subr.mxu0 0.0
        %1579 = vmatpush1.xpose.msra.mxu0 %v1574
        %1580 = vmatprep.subr.mxu0 0.0
        %1581 = vmatpush1.xpose.msra.mxu0 0.0
        %1582 = vmatprep.subr.mxu0 0.0
        %1583 = vmatpush1.xpose.msra.mxu0 0.0
        %1584 = vmatprep.subr.mxu0 0.0
        %1585 = vmatpush1.xpose.msra.mxu0 0.0
        %1586 = vmatprep.subr.mxu0 0.0
        %1587 = vmatpush1.xpose.msra.mxu0 0.0
        %1588 = vmatprep.subr.mxu0 0.0
        %1589 = vmatpush1.xpose.msra.mxu0 0.0
        %1590 = vmatprep.subr.mxu0 0.0
        %1591 = vmatpush1.xpose.msra.mxu0 0.0
        %1592 = vmatprep.subr.mxu0 0.0
        %1593 = vmatpush1.xpose.msra.mxu0 0.0
        %1594 = vmatprep.subr.mxu0 0.0
        %1595 = vmatpush1.xpose.msra.mxu0 0.0
        %1596 = vmatprep.subr.mxu0 0.0
        %1597 = vmatpush1.xpose.msra.mxu0 0.0
        %1598 = vmatprep.subr.mxu0 0.0
        %1599 = vmatpush1.xpose.msra.mxu0 0.0
        %1600 = vmatprep.subr.mxu0 0.0
        %1601 = vmatpush1.xpose.msra.mxu0 0.0
        %1602 = vmatprep.subr.mxu0 0.0
        %1603 = vmatpush1.xpose.msra.mxu0 0.0
        %1604 = vmatprep.subr.mxu0 0.0
        %1605 = vmatpush1.xpose.msra.mxu0 0.0
        %1606 = vmatprep.subr.mxu0 0.0
        %1607 = vmatpush1.xpose.msra.mxu0 0.0
        %1608 = vmatprep.subr.mxu0 0.0
        %1609 = vmatpush1.xpose.msra.mxu0 0.0
        %1610 = vmatprep.subr.mxu0 0.0
        %1611 = vmatpush1.xpose.msra.mxu0 0.0
        %1612 = vmatprep.subr.mxu0 0.0
        %1613 = vmatpush1.xpose.msra.mxu0 0.0
        %1614 = vmatprep.subr.mxu0 0.0
        %1615 = vmatpush1.xpose.msra.mxu0 0.0
        %1616 = vmatprep.subr.mxu0 0.0
        %1617 = vmatpush1.xpose.msra.mxu0 0.0
        %1618 = vmatprep.subr.mxu0 0.0
        %1619 = vmatpush1.xpose.msra.mxu0 0.0
        %1620 = vmatprep.subr.mxu0 0.0
        %1621 = vmatpush1.xpose.msra.mxu0 0.0
        %1622 = vmatprep.subr.mxu0 0.0
        %1623 = vmatpush1.xpose.msra.mxu0 0.0
        %1624 = vmatprep.subr.mxu0 0.0
        %1625 = vmatpush1.xpose.msra.mxu0 0.0
        %1626 = vmatprep.subr.mxu0 0.0
        %1627 = vmatpush1.xpose.msra.mxu0 0.0
        %1628 = vmatprep.subr.mxu0 0.0
        %1629 = vmatpush1.xpose.msra.mxu0 0.0
        %1630 = vmatprep.subr.mxu0 0.0
        %1631 = vmatpush1.xpose.msra.mxu0 0.0
        %1632 = vmatprep.subr.mxu0 0.0
        %1633 = vmatpush1.xpose.msra.mxu0 0.0
        %1634 = vmatprep.subr.mxu0 0.0
        %1635 = vmatpush1.xpose.msra.mxu0 0.0
        %1636 = vmatprep.subr.mxu0 0.0
        %1637 = vmatpush1.xpose.msra.mxu0 0.0
        %1638 = vmatprep.subr.mxu0 0.0
        %1639 = vmatpush1.xpose.msra.mxu0 0.0
        %1640 = vmatprep.mubr.f32.mxu0 0.0
        %1641 = vmatmul.mubr.f32.gmra.mrb[0].mxu0 %v1568
        %v1642 = vpop.f32.mrb[0].mxu0
        %v1643 = vadd.f32 0.0, %v1642
        %v1644 = vpop.f32.mrb[0].mxu0
        %1645 = vmatprep.mubr.f32.mxu0 0.0
        %1646 = vmatmul.mubr.f32.gmra.mrb[0].mxu0 %v1570
        %v1647 = vpop.f32.mrb[0].mxu0
        %v1648 = vadd.f32 0.0, %v1647
        %v1649 = vpop.f32.mrb[0].mxu0
        %1650 = vdwg.mxu0
        %v1651 = vsel %vm584, %v1643, -inf
        %1652 = vmax.xlane.f32.xlu0 %v1651
        %v1653 = vpop.xlane.xlu0 %1652
        %v1654 = vsel %vm584, %v1648, -inf
        %1655 = vmax.xlane.f32.xlu0 %v1654
        %v1656 = vpop.xlane.xlu0 %1655
        %v1657 = vsub.f32 %v1643, %v1653
        %v1658 = vsub.f32 %v1648, %v1656
        %v1659 = vmul.f32 %v1657, 1.442695
        %v1660 = vpow.pop %v1659
        %v1661 = vmul.f32 %v1658, 1.442695
        %v1662 = vpow.pop %v1661
        %v1663 = vsel %vm584, %v1660, 0.0
        %1664 = vadd.xlane.f32.xlu0 %v1663
        %v1665 = vpop.xlane.xlu0 %1664
        %v1666 = vsel %vm584, %v1662, 0.0
        %1667 = vadd.xlane.f32.xlu0 %v1666
        %v1668 = vpop.xlane.xlu0 %1667
        %v1669 = vrcp.pop %v1665
        %v1670 = vrcp.pop %v1668
        %v1671 = vmul.f32 %v1660, %v1669
        %v1672 = vmul.f32 %v1662, %v1670
        %1673 = vrot.lane.b32.xlu0 %v1556, 24
        %v1674 = vpop.permute.xlu0 %1673
        %1675 = vrot.lane.b32.xlu0 %v1557, 24
        %v1676 = vpop.permute.xlu0 %1675
        %v1680 = vsel %vm584, %v1671, 0
        %v1683 = vsel %vm584, %v1672, 0
        %1685 = vmatprep.subr.mxu0 0.0
        %1686 = vmatpush1.msra.mxu0 %v1674
        %1687 = vmatprep.subr.mxu0 0.0
        %1688 = vmatpush1.msra.mxu0 %v1676
        %1689 = vmatprep.subr.mxu0 0.0
        %1690 = vmatpush1.msra.mxu0 0.0
        %1691 = vmatprep.subr.mxu0 0.0
        %1692 = vmatpush1.msra.mxu0 0.0
        %1693 = vmatprep.subr.mxu0 0.0
        %1694 = vmatpush1.msra.mxu0 0.0
        %1695 = vmatprep.subr.mxu0 0.0
        %1696 = vmatpush1.msra.mxu0 0.0
        %1697 = vmatprep.subr.mxu0 0.0
        %1698 = vmatpush1.msra.mxu0 0.0
        %1699 = vmatprep.subr.mxu0 0.0
        %1700 = vmatpush1.msra.mxu0 0.0
        %1701 = vmatprep.subr.mxu0 0.0
        %1702 = vmatpush1.msra.mxu0 0.0
        %1703 = vmatprep.subr.mxu0 0.0
        %1704 = vmatpush1.msra.mxu0 0.0
        %1705 = vmatprep.subr.mxu0 0.0
        %1706 = vmatpush1.msra.mxu0 0.0
        %1707 = vmatprep.subr.mxu0 0.0
        %1708 = vmatpush1.msra.mxu0 0.0
        %1709 = vmatprep.subr.mxu0 0.0
        %1710 = vmatpush1.msra.mxu0 0.0
        %1711 = vmatprep.subr.mxu0 0.0
        %1712 = vmatpush1.msra.mxu0 0.0
        %1713 = vmatprep.subr.mxu0 0.0
        %1714 = vmatpush1.msra.mxu0 0.0
        %1715 = vmatprep.subr.mxu0 0.0
        %1716 = vmatpush1.msra.mxu0 0.0
        %1717 = vmatprep.subr.mxu0 0.0
        %1718 = vmatpush1.msra.mxu0 0.0
        %1719 = vmatprep.subr.mxu0 0.0
        %1720 = vmatpush1.msra.mxu0 0.0
        %1721 = vmatprep.subr.mxu0 0.0
        %1722 = vmatpush1.msra.mxu0 0.0
        %1723 = vmatprep.subr.mxu0 0.0
        %1724 = vmatpush1.msra.mxu0 0.0
        %1725 = vmatprep.subr.mxu0 0.0
        %1726 = vmatpush1.msra.mxu0 0.0
        %1727 = vmatprep.subr.mxu0 0.0
        %1728 = vmatpush1.msra.mxu0 0.0
        %1729 = vmatprep.subr.mxu0 0.0
        %1730 = vmatpush1.msra.mxu0 0.0
        %1731 = vmatprep.subr.mxu0 0.0
        %1732 = vmatpush1.msra.mxu0 0.0
        %1733 = vmatprep.subr.mxu0 0.0
        %1734 = vmatpush1.msra.mxu0 0.0
        %1735 = vmatprep.subr.mxu0 0.0
        %1736 = vmatpush1.msra.mxu0 0.0
        %1737 = vmatprep.subr.mxu0 0.0
        %1738 = vmatpush1.msra.mxu0 0.0
        %1739 = vmatprep.subr.mxu0 0.0
        %1740 = vmatpush1.msra.mxu0 0.0
        %1741 = vmatprep.subr.mxu0 0.0
        %1742 = vmatpush1.msra.mxu0 0.0
        %1743 = vmatprep.subr.mxu0 0.0
        %1744 = vmatpush1.msra.mxu0 0.0
        %1745 = vmatprep.subr.mxu0 0.0
        %1746 = vmatpush1.msra.mxu0 0.0
        %1747 = vmatprep.subr.mxu0 0.0
        %1748 = vmatpush1.msra.mxu0 0.0
        %1749 = vmatprep.mubr.f32.mxu0 0.0
        %1750 = vmatmul.mubr.f32.gmra.mrb[0].mxu0 %v1680
        %v1751 = vpop.f32.mrb[0].mxu0
        %v1752 = vadd.f32 0.0, %v1751
        %v1753 = vpop.f32.mrb[0].mxu0
        %1754 = vmatprep.mubr.f32.mxu0 0.0
        %1755 = vmatmul.mubr.f32.gmra.mrb[0].mxu0 %v1683
        %v1756 = vpop.f32.mrb[0].mxu0
        %v1757 = vadd.f32 0.0, %v1756
        %v1758 = vpop.f32.mrb[0].mxu0
        %1759 = vdwg.mxu0
        %1762 = vrot.lane.b32.xlu0 %v1752, 40
        %v1763 = vpop.permute.xlu0 %1762
        %1764 = vrot.lane.b32.xlu0 %v1757, 40
        %v1765 = vpop.permute.xlu0 %1764
        %vm1768 = vcmask 392512
        %1769 = vst.msk [vmem:[#allocation3] sm:$0xff] %vm1768, %v1763
        %1770 = vst.msk [vmem:[#allocation3 + $0x8] sm:$0xff] %vm1768, %v1765
        %v1771 = vld [vmem:[#allocation2] sm:$0xff]
        %v1772 = vld [vmem:[#allocation2 + $0x8] sm:$0xff]
        %1773 = vrot.lane.b32.xlu0 %v486, 80
        %v1774 = vpop.permute.xlu0 %1773
        %1775 = vrot.lane.b32.xlu0 %v491, 80
        %v1776 = vpop.permute.xlu0 %1775
        %1779 = vrot.lane.b32.xlu0 %v1771, 80
        %v1780 = vpop.permute.xlu0 %1779
        %1781 = vrot.lane.b32.xlu0 %v1772, 80
        %v1782 = vpop.permute.xlu0 %1781
        %v1783 = vsel %vm496, %v1774, 0
        %v1785 = vsel %vm496, %v1776, 0
        %v1787 = vsel %vm496, %v1780, 0
        %v1789 = vsel %vm496, %v1782, 0
        %1791 = vmatprep.subr.mxu0 0.0
        %1792 = vmatpush1.xpose.msra.mxu0 %v1787
        %1793 = vmatprep.subr.mxu0 0.0
        %1794 = vmatpush1.xpose.msra.mxu0 %v1789
        %1795 = vmatprep.subr.mxu0 0.0
        %1796 = vmatpush1.xpose.msra.mxu0 0.0
        %1797 = vmatprep.subr.mxu0 0.0
        %1798 = vmatpush1.xpose.msra.mxu0 0.0
        %1799 = vmatprep.subr.mxu0 0.0
        %1800 = vmatpush1.xpose.msra.mxu0 0.0
        %1801 = vmatprep.subr.mxu0 0.0
        %1802 = vmatpush1.xpose.msra.mxu0 0.0
        %1803 = vmatprep.subr.mxu0 0.0
        %1804 = vmatpush1.xpose.msra.mxu0 0.0
        %1805 = vmatprep.subr.mxu0 0.0
        %1806 = vmatpush1.xpose.msra.mxu0 0.0
        %1807 = vmatprep.subr.mxu0 0.0
        %1808 = vmatpush1.xpose.msra.mxu0 0.0
        %1809 = vmatprep.subr.mxu0 0.0
        %1810 = vmatpush1.xpose.msra.mxu0 0.0
        %1811 = vmatprep.subr.mxu0 0.0
        %1812 = vmatpush1.xpose.msra.mxu0 0.0
        %1813 = vmatprep.subr.mxu0 0.0
        %1814 = vmatpush1.xpose.msra.mxu0 0.0
        %1815 = vmatprep.subr.mxu0 0.0
        %1816 = vmatpush1.xpose.msra.mxu0 0.0
        %1817 = vmatprep.subr.mxu0 0.0
        %1818 = vmatpush1.xpose.msra.mxu0 0.0
        %1819 = vmatprep.subr.mxu0 0.0
        %1820 = vmatpush1.xpose.msra.mxu0 0.0
        %1821 = vmatprep.subr.mxu0 0.0
        %1822 = vmatpush1.xpose.msra.mxu0 0.0
        %1823 = vmatprep.subr.mxu0 0.0
        %1824 = vmatpush1.xpose.msra.mxu0 0.0
        %1825 = vmatprep.subr.mxu0 0.0
        %1826 = vmatpush1.xpose.msra.mxu0 0.0
        %1827 = vmatprep.subr.mxu0 0.0
        %1828 = vmatpush1.xpose.msra.mxu0 0.0
        %1829 = vmatprep.subr.mxu0 0.0
        %1830 = vmatpush1.xpose.msra.mxu0 0.0
        %1831 = vmatprep.subr.mxu0 0.0
        %1832 = vmatpush1.xpose.msra.mxu0 0.0
        %1833 = vmatprep.subr.mxu0 0.0
        %1834 = vmatpush1.xpose.msra.mxu0 0.0
        %1835 = vmatprep.subr.mxu0 0.0
        %1836 = vmatpush1.xpose.msra.mxu0 0.0
        %1837 = vmatprep.subr.mxu0 0.0
        %1838 = vmatpush1.xpose.msra.mxu0 0.0
        %1839 = vmatprep.subr.mxu0 0.0
        %1840 = vmatpush1.xpose.msra.mxu0 0.0
        %1841 = vmatprep.subr.mxu0 0.0
        %1842 = vmatpush1.xpose.msra.mxu0 0.0
        %1843 = vmatprep.subr.mxu0 0.0
        %1844 = vmatpush1.xpose.msra.mxu0 0.0
        %1845 = vmatprep.subr.mxu0 0.0
        %1846 = vmatpush1.xpose.msra.mxu0 0.0
        %1847 = vmatprep.subr.mxu0 0.0
        %1848 = vmatpush1.xpose.msra.mxu0 0.0
        %1849 = vmatprep.subr.mxu0 0.0
        %1850 = vmatpush1.xpose.msra.mxu0 0.0
        %1851 = vmatprep.subr.mxu0 0.0
        %1852 = vmatpush1.xpose.msra.mxu0 0.0
        %1853 = vmatprep.subr.mxu0 0.0
        %1854 = vmatpush1.xpose.msra.mxu0 0.0
        %1855 = vmatprep.mubr.f32.mxu0 0.0
        %1856 = vmatmul.mubr.f32.gmra.mrb[0].mxu0 %v1783
        %v1857 = vpop.f32.mrb[0].mxu0
        %v1858 = vadd.f32 0.0, %v1857
        %v1859 = vpop.f32.mrb[0].mxu0
        %1860 = vmatprep.mubr.f32.mxu0 0.0
        %1861 = vmatmul.mubr.f32.gmra.mrb[0].mxu0 %v1785
        %v1862 = vpop.f32.mrb[0].mxu0
        %v1863 = vadd.f32 0.0, %v1862
        %v1864 = vpop.f32.mrb[0].mxu0
        %1865 = vdwg.mxu0
        %v1866 = vsel %vm584, %v1858, -inf
        %1867 = vmax.xlane.f32.xlu0 %v1866
        %v1868 = vpop.xlane.xlu0 %1867
        %v1869 = vsel %vm584, %v1863, -inf
        %1870 = vmax.xlane.f32.xlu0 %v1869
        %v1871 = vpop.xlane.xlu0 %1870
        %v1872 = vsub.f32 %v1858, %v1868
        %v1873 = vsub.f32 %v1863, %v1871
        %v1874 = vmul.f32 %v1872, 1.442695
        %v1875 = vpow.pop %v1874
        %v1876 = vmul.f32 %v1873, 1.442695
        %v1877 = vpow.pop %v1876
        %v1878 = vsel %vm584, %v1875, 0.0
        %1879 = vadd.xlane.f32.xlu0 %v1878
        %v1880 = vpop.xlane.xlu0 %1879
        %v1881 = vsel %vm584, %v1877, 0.0
        %1882 = vadd.xlane.f32.xlu0 %v1881
        %v1883 = vpop.xlane.xlu0 %1882
        %v1884 = vrcp.pop %v1880
        %v1885 = vrcp.pop %v1883
        %v1886 = vmul.f32 %v1875, %v1884
        %v1887 = vmul.f32 %v1877, %v1885
        %1888 = vrot.lane.b32.xlu0 %v1771, 16
        %v1889 = vpop.permute.xlu0 %1888
        %1890 = vrot.lane.b32.xlu0 %v1772, 16
        %v1891 = vpop.permute.xlu0 %1890
        %v1895 = vsel %vm584, %v1886, 0
        %v1898 = vsel %vm584, %v1887, 0
        %1900 = vmatprep.subr.mxu0 0.0
        %1901 = vmatpush1.msra.mxu0 %v1889
        %1902 = vmatprep.subr.mxu0 0.0
        %1903 = vmatpush1.msra.mxu0 %v1891
        %1904 = vmatprep.subr.mxu0 0.0
        %1905 = vmatpush1.msra.mxu0 0.0
        %1906 = vmatprep.subr.mxu0 0.0
        %1907 = vmatpush1.msra.mxu0 0.0
        %1908 = vmatprep.subr.mxu0 0.0
        %1909 = vmatpush1.msra.mxu0 0.0
        %1910 = vmatprep.subr.mxu0 0.0
        %1911 = vmatpush1.msra.mxu0 0.0
        %1912 = vmatprep.subr.mxu0 0.0
        %1913 = vmatpush1.msra.mxu0 0.0
        %1914 = vmatprep.subr.mxu0 0.0
        %1915 = vmatpush1.msra.mxu0 0.0
        %1916 = vmatprep.subr.mxu0 0.0
        %1917 = vmatpush1.msra.mxu0 0.0
        %1918 = vmatprep.subr.mxu0 0.0
        %1919 = vmatpush1.msra.mxu0 0.0
        %1920 = vmatprep.subr.mxu0 0.0
        %1921 = vmatpush1.msra.mxu0 0.0
        %1922 = vmatprep.subr.mxu0 0.0
        %1923 = vmatpush1.msra.mxu0 0.0
        %1924 = vmatprep.subr.mxu0 0.0
        %1925 = vmatpush1.msra.mxu0 0.0
        %1926 = vmatprep.subr.mxu0 0.0
        %1927 = vmatpush1.msra.mxu0 0.0
        %1928 = vmatprep.subr.mxu0 0.0
        %1929 = vmatpush1.msra.mxu0 0.0
        %1930 = vmatprep.subr.mxu0 0.0
        %1931 = vmatpush1.msra.mxu0 0.0
        %1932 = vmatprep.subr.mxu0 0.0
        %1933 = vmatpush1.msra.mxu0 0.0
        %1934 = vmatprep.subr.mxu0 0.0
        %1935 = vmatpush1.msra.mxu0 0.0
        %1936 = vmatprep.subr.mxu0 0.0
        %1937 = vmatpush1.msra.mxu0 0.0
        %1938 = vmatprep.subr.mxu0 0.0
        %1939 = vmatpush1.msra.mxu0 0.0
        %1940 = vmatprep.subr.mxu0 0.0
        %1941 = vmatpush1.msra.mxu0 0.0
        %1942 = vmatprep.subr.mxu0 0.0
        %1943 = vmatpush1.msra.mxu0 0.0
        %1944 = vmatprep.subr.mxu0 0.0
        %1945 = vmatpush1.msra.mxu0 0.0
        %1946 = vmatprep.subr.mxu0 0.0
        %1947 = vmatpush1.msra.mxu0 0.0
        %1948 = vmatprep.subr.mxu0 0.0
        %1949 = vmatpush1.msra.mxu0 0.0
        %1950 = vmatprep.subr.mxu0 0.0
        %1951 = vmatpush1.msra.mxu0 0.0
        %1952 = vmatprep.subr.mxu0 0.0
        %1953 = vmatpush1.msra.mxu0 0.0
        %1954 = vmatprep.subr.mxu0 0.0
        %1955 = vmatpush1.msra.mxu0 0.0
        %1956 = vmatprep.subr.mxu0 0.0
        %1957 = vmatpush1.msra.mxu0 0.0
        %1958 = vmatprep.subr.mxu0 0.0
        %1959 = vmatpush1.msra.mxu0 0.0
        %1960 = vmatprep.subr.mxu0 0.0
        %1961 = vmatpush1.msra.mxu0 0.0
        %1962 = vmatprep.subr.mxu0 0.0
        %1963 = vmatpush1.msra.mxu0 0.0
        %1964 = vmatprep.mubr.f32.mxu0 0.0
        %1965 = vmatmul.mubr.f32.gmra.mrb[0].mxu0 %v1895
        %v1966 = vpop.f32.mrb[0].mxu0
        %v1967 = vadd.f32 0.0, %v1966
        %v1968 = vpop.f32.mrb[0].mxu0
        %1969 = vmatprep.mubr.f32.mxu0 0.0
        %1970 = vmatmul.mubr.f32.gmra.mrb[0].mxu0 %v1898
        %v1971 = vpop.f32.mrb[0].mxu0
        %v1972 = vadd.f32 0.0, %v1971
        %v1973 = vpop.f32.mrb[0].mxu0
        %1974 = vdwg.mxu0
        %1977 = vrot.lane.b32.xlu0 %v1967, 48
        %v1978 = vpop.permute.xlu0 %1977
        %1979 = vrot.lane.b32.xlu0 %v1972, 48
        %v1980 = vpop.permute.xlu0 %1979
        %vm1983 = vcmask 458112
        %1984 = vst.msk [vmem:[#allocation3] sm:$0xff] %vm1983, %v1978
        %1985 = vst.msk [vmem:[#allocation3 + $0x8] sm:$0xff] %vm1983, %v1980
        %v1986 = vld [vmem:[#allocation2] sm:$0xff]
        %v1987 = vld [vmem:[#allocation2 + $0x8] sm:$0xff]
        %1988 = vrot.lane.b32.xlu0 %v486, 72
        %v1989 = vpop.permute.xlu0 %1988
        %1990 = vrot.lane.b32.xlu0 %v491, 72
        %v1991 = vpop.permute.xlu0 %1990
        %1994 = vrot.lane.b32.xlu0 %v1986, 72
        %v1995 = vpop.permute.xlu0 %1994
        %1996 = vrot.lane.b32.xlu0 %v1987, 72
        %v1997 = vpop.permute.xlu0 %1996
        %v1998 = vsel %vm496, %v1989, 0
        %v2000 = vsel %vm496, %v1991, 0
        %v2002 = vsel %vm496, %v1995, 0
        %v2004 = vsel %vm496, %v1997, 0
        %2006 = vmatprep.subr.mxu0 0.0
        %2007 = vmatpush1.xpose.msra.mxu0 %v2002
        %2008 = vmatprep.subr.mxu0 0.0
        %2009 = vmatpush1.xpose.msra.mxu0 %v2004
        %2010 = vmatprep.subr.mxu0 0.0
        %2011 = vmatpush1.xpose.msra.mxu0 0.0
        %2012 = vmatprep.subr.mxu0 0.0
        %2013 = vmatpush1.xpose.msra.mxu0 0.0
        %2014 = vmatprep.subr.mxu0 0.0
        %2015 = vmatpush1.xpose.msra.mxu0 0.0
        %2016 = vmatprep.subr.mxu0 0.0
        %2017 = vmatpush1.xpose.msra.mxu0 0.0
        %2018 = vmatprep.subr.mxu0 0.0
        %2019 = vmatpush1.xpose.msra.mxu0 0.0
        %2020 = vmatprep.subr.mxu0 0.0
        %2021 = vmatpush1.xpose.msra.mxu0 0.0
        %2022 = vmatprep.subr.mxu0 0.0
        %2023 = vmatpush1.xpose.msra.mxu0 0.0
        %2024 = vmatprep.subr.mxu0 0.0
        %2025 = vmatpush1.xpose.msra.mxu0 0.0
        %2026 = vmatprep.subr.mxu0 0.0
        %2027 = vmatpush1.xpose.msra.mxu0 0.0
        %2028 = vmatprep.subr.mxu0 0.0
        %2029 = vmatpush1.xpose.msra.mxu0 0.0
        %2030 = vmatprep.subr.mxu0 0.0
        %2031 = vmatpush1.xpose.msra.mxu0 0.0
        %2032 = vmatprep.subr.mxu0 0.0
        %2033 = vmatpush1.xpose.msra.mxu0 0.0
        %2034 = vmatprep.subr.mxu0 0.0
        %2035 = vmatpush1.xpose.msra.mxu0 0.0
        %2036 = vmatprep.subr.mxu0 0.0
        %2037 = vmatpush1.xpose.msra.mxu0 0.0
        %2038 = vmatprep.subr.mxu0 0.0
        %2039 = vmatpush1.xpose.msra.mxu0 0.0
        %2040 = vmatprep.subr.mxu0 0.0
        %2041 = vmatpush1.xpose.msra.mxu0 0.0
        %2042 = vmatprep.subr.mxu0 0.0
        %2043 = vmatpush1.xpose.msra.mxu0 0.0
        %2044 = vmatprep.subr.mxu0 0.0
        %2045 = vmatpush1.xpose.msra.mxu0 0.0
        %2046 = vmatprep.subr.mxu0 0.0
        %2047 = vmatpush1.xpose.msra.mxu0 0.0
        %2048 = vmatprep.subr.mxu0 0.0
        %2049 = vmatpush1.xpose.msra.mxu0 0.0
        %2050 = vmatprep.subr.mxu0 0.0
        %2051 = vmatpush1.xpose.msra.mxu0 0.0
        %2052 = vmatprep.subr.mxu0 0.0
        %2053 = vmatpush1.xpose.msra.mxu0 0.0
        %2054 = vmatprep.subr.mxu0 0.0
        %2055 = vmatpush1.xpose.msra.mxu0 0.0
        %2056 = vmatprep.subr.mxu0 0.0
        %2057 = vmatpush1.xpose.msra.mxu0 0.0
        %2058 = vmatprep.subr.mxu0 0.0
        %2059 = vmatpush1.xpose.msra.mxu0 0.0
        %2060 = vmatprep.subr.mxu0 0.0
        %2061 = vmatpush1.xpose.msra.mxu0 0.0
        %2062 = vmatprep.subr.mxu0 0.0
        %2063 = vmatpush1.xpose.msra.mxu0 0.0
        %2064 = vmatprep.subr.mxu0 0.0
        %2065 = vmatpush1.xpose.msra.mxu0 0.0
        %2066 = vmatprep.subr.mxu0 0.0
        %2067 = vmatpush1.xpose.msra.mxu0 0.0
        %2068 = vmatprep.subr.mxu0 0.0
        %2069 = vmatpush1.xpose.msra.mxu0 0.0
        %2070 = vmatprep.mubr.f32.mxu0 0.0
        %2071 = vmatmul.mubr.f32.gmra.mrb[0].mxu0 %v1998
        %v2072 = vpop.f32.mrb[0].mxu0
        %v2073 = vadd.f32 0.0, %v2072
        %v2074 = vpop.f32.mrb[0].mxu0
        %2075 = vmatprep.mubr.f32.mxu0 0.0
        %2076 = vmatmul.mubr.f32.gmra.mrb[0].mxu0 %v2000
        %v2077 = vpop.f32.mrb[0].mxu0
        %v2078 = vadd.f32 0.0, %v2077
        %v2079 = vpop.f32.mrb[0].mxu0
        %2080 = vdwg.mxu0
        %v2081 = vsel %vm584, %v2073, -inf
        %2082 = vmax.xlane.f32.xlu0 %v2081
        %v2083 = vpop.xlane.xlu0 %2082
        %v2084 = vsel %vm584, %v2078, -inf
        %2085 = vmax.xlane.f32.xlu0 %v2084
        %v2086 = vpop.xlane.xlu0 %2085
        %v2087 = vsub.f32 %v2073, %v2083
        %v2088 = vsub.f32 %v2078, %v2086
        %v2089 = vmul.f32 %v2087, 1.442695
        %v2090 = vpow.pop %v2089
        %v2091 = vmul.f32 %v2088, 1.442695
        %v2092 = vpow.pop %v2091
        %v2093 = vsel %vm584, %v2090, 0.0
        %2094 = vadd.xlane.f32.xlu0 %v2093
        %v2095 = vpop.xlane.xlu0 %2094
        %v2096 = vsel %vm584, %v2092, 0.0
        %2097 = vadd.xlane.f32.xlu0 %v2096
        %v2098 = vpop.xlane.xlu0 %2097
        %v2099 = vrcp.pop %v2095
        %v2100 = vrcp.pop %v2098
        %v2101 = vmul.f32 %v2090, %v2099
        %v2102 = vmul.f32 %v2092, %v2100
        %2103 = vrot.lane.b32.xlu0 %v1986, 8
        %v2104 = vpop.permute.xlu0 %2103
        %2105 = vrot.lane.b32.xlu0 %v1987, 8
        %v2106 = vpop.permute.xlu0 %2105
        %v2110 = vsel %vm584, %v2101, 0
        %v2113 = vsel %vm584, %v2102, 0
        %2115 = vmatprep.subr.mxu0 0.0
        %2116 = vmatpush1.msra.mxu0 %v2104
        %2117 = vmatprep.subr.mxu0 0.0
        %2118 = vmatpush1.msra.mxu0 %v2106
        %2119 = vmatprep.subr.mxu0 0.0
        %2120 = vmatpush1.msra.mxu0 0.0
        %2121 = vmatprep.subr.mxu0 0.0
        %2122 = vmatpush1.msra.mxu0 0.0
        %2123 = vmatprep.subr.mxu0 0.0
        %2124 = vmatpush1.msra.mxu0 0.0
        %2125 = vmatprep.subr.mxu0 0.0
        %2126 = vmatpush1.msra.mxu0 0.0
        %2127 = vmatprep.subr.mxu0 0.0
        %2128 = vmatpush1.msra.mxu0 0.0
        %2129 = vmatprep.subr.mxu0 0.0
        %2130 = vmatpush1.msra.mxu0 0.0
        %2131 = vmatprep.subr.mxu0 0.0
        %2132 = vmatpush1.msra.mxu0 0.0
        %2133 = vmatprep.subr.mxu0 0.0
        %2134 = vmatpush1.msra.mxu0 0.0
        %2135 = vmatprep.subr.mxu0 0.0
        %2136 = vmatpush1.msra.mxu0 0.0
        %2137 = vmatprep.subr.mxu0 0.0
        %2138 = vmatpush1.msra.mxu0 0.0
        %2139 = vmatprep.subr.mxu0 0.0
        %2140 = vmatpush1.msra.mxu0 0.0
        %2141 = vmatprep.subr.mxu0 0.0
        %2142 = vmatpush1.msra.mxu0 0.0
        %2143 = vmatprep.subr.mxu0 0.0
        %2144 = vmatpush1.msra.mxu0 0.0
        %2145 = vmatprep.subr.mxu0 0.0
        %2146 = vmatpush1.msra.mxu0 0.0
        %2147 = vmatprep.subr.mxu0 0.0
        %2148 = vmatpush1.msra.mxu0 0.0
        %2149 = vmatprep.subr.mxu0 0.0
        %2150 = vmatpush1.msra.mxu0 0.0
        %2151 = vmatprep.subr.mxu0 0.0
        %2152 = vmatpush1.msra.mxu0 0.0
        %2153 = vmatprep.subr.mxu0 0.0
        %2154 = vmatpush1.msra.mxu0 0.0
        %2155 = vmatprep.subr.mxu0 0.0
        %2156 = vmatpush1.msra.mxu0 0.0
        %2157 = vmatprep.subr.mxu0 0.0
        %2158 = vmatpush1.msra.mxu0 0.0
        %2159 = vmatprep.subr.mxu0 0.0
        %2160 = vmatpush1.msra.mxu0 0.0
        %2161 = vmatprep.subr.mxu0 0.0
        %2162 = vmatpush1.msra.mxu0 0.0
        %2163 = vmatprep.subr.mxu0 0.0
        %2164 = vmatpush1.msra.mxu0 0.0
        %2165 = vmatprep.subr.mxu0 0.0
        %2166 = vmatpush1.msra.mxu0 0.0
        %2167 = vmatprep.subr.mxu0 0.0
        %2168 = vmatpush1.msra.mxu0 0.0
        %2169 = vmatprep.subr.mxu0 0.0
        %2170 = vmatpush1.msra.mxu0 0.0
        %2171 = vmatprep.subr.mxu0 0.0
        %2172 = vmatpush1.msra.mxu0 0.0
        %2173 = vmatprep.subr.mxu0 0.0
        %2174 = vmatpush1.msra.mxu0 0.0
        %2175 = vmatprep.subr.mxu0 0.0
        %2176 = vmatpush1.msra.mxu0 0.0
        %2177 = vmatprep.subr.mxu0 0.0
        %2178 = vmatpush1.msra.mxu0 0.0
        %2179 = vmatprep.mubr.f32.mxu0 0.0
        %2180 = vmatmul.mubr.f32.gmra.mrb[0].mxu0 %v2110
        %v2181 = vpop.f32.mrb[0].mxu0
        %v2182 = vadd.f32 0.0, %v2181
        %v2183 = vpop.f32.mrb[0].mxu0
        %2184 = vmatprep.mubr.f32.mxu0 0.0
        %2185 = vmatmul.mubr.f32.gmra.mrb[0].mxu0 %v2113
        %v2186 = vpop.f32.mrb[0].mxu0
        %v2187 = vadd.f32 0.0, %v2186
        %v2188 = vpop.f32.mrb[0].mxu0
        %2189 = vdwg.mxu0
        %2192 = vrot.lane.b32.xlu0 %v2182, 56
        %v2193 = vpop.permute.xlu0 %2192
        %2194 = vrot.lane.b32.xlu0 %v2187, 56
        %v2195 = vpop.permute.xlu0 %2194
        %vm2198 = vcmask 523712
        %2199 = vst.msk [vmem:[#allocation3] sm:$0xff] %vm2198, %v2193
        %2200 = vst.msk [vmem:[#allocation3 + $0x8] sm:$0xff] %vm2198, %v2195
        %v2201 = vld [vmem:[#allocation3] sm:$0xff]
        %v2202 = vld [vmem:[#allocation3 + $0x8] sm:$0xff]
        %v2203 = vld [vmem:[#allocation10] sm:$0xff]
        %v2204 = vld [vmem:[#allocation10 + $0x8] sm:$0xff]
        %v2205 = vld [vmem:[#allocation10 + $0x10] sm:$0xff]
        %v2206 = vld [vmem:[#allocation10 + $0x18] sm:$0xff]
        %v2207 = vld [vmem:[#allocation10 + $0x20] sm:$0xff]
        %v2208 = vld [vmem:[#allocation10 + $0x28] sm:$0xff]
        %v2209 = vld [vmem:[#allocation10 + $0x30] sm:$0xff]
        %v2210 = vld [vmem:[#allocation10 + $0x38] sm:$0xff]
        %v2211 = vld [vmem:[%s4] sm:$0x1]
        %v2213 = vlaneseq
        %v2214 = vshrl.u32 %v2213, 7
        %v2215 = vsub.s32 0, %v2214
        %v2216 = vrot.slane %v2211, %v2215
        %v2219 = vsel %vm412, %v2201, 0
        %v2222 = vsel %vm412, %v2202, 0
        %2224 = vmatprep.subr.mxu0 0.0
        %2225 = vmatpush1.msra.mxu0 %v2203
        %2226 = vmatprep.subr.mxu0 0.0
        %2227 = vmatpush1.msra.mxu0 %v2204
        %2228 = vmatprep.subr.mxu0 0.0
        %2229 = vmatpush1.msra.mxu0 %v2205
        %2230 = vmatprep.subr.mxu0 0.0
        %2231 = vmatpush1.msra.mxu0 %v2206
        %2232 = vmatprep.subr.mxu0 0.0
        %2233 = vmatpush1.msra.mxu0 %v2207
        %2234 = vmatprep.subr.mxu0 0.0
        %2235 = vmatpush1.msra.mxu0 %v2208
        %2236 = vmatprep.subr.mxu0 0.0
        %2237 = vmatpush1.msra.mxu0 %v2209
        %2238 = vmatprep.subr.mxu0 0.0
        %2239 = vmatpush1.msra.mxu0 %v2210
        %2240 = vmatprep.subr.mxu0 0.0
        %2241 = vmatpush1.msra.mxu0 0.0
        %2242 = vmatprep.subr.mxu0 0.0
        %2243 = vmatpush1.msra.mxu0 0.0
        %2244 = vmatprep.subr.mxu0 0.0
        %2245 = vmatpush1.msra.mxu0 0.0
        %2246 = vmatprep.subr.mxu0 0.0
        %2247 = vmatpush1.msra.mxu0 0.0
        %2248 = vmatprep.subr.mxu0 0.0
        %2249 = vmatpush1.msra.mxu0 0.0
        %2250 = vmatprep.subr.mxu0 0.0
        %2251 = vmatpush1.msra.mxu0 0.0
        %2252 = vmatprep.subr.mxu0 0.0
        %2253 = vmatpush1.msra.mxu0 0.0
        %2254 = vmatprep.subr.mxu0 0.0
        %2255 = vmatpush1.msra.mxu0 0.0
        %2256 = vmatprep.subr.mxu0 0.0
        %2257 = vmatpush1.msra.mxu0 0.0
        %2258 = vmatprep.subr.mxu0 0.0
        %2259 = vmatpush1.msra.mxu0 0.0
        %2260 = vmatprep.subr.mxu0 0.0
        %2261 = vmatpush1.msra.mxu0 0.0
        %2262 = vmatprep.subr.mxu0 0.0
        %2263 = vmatpush1.msra.mxu0 0.0
        %2264 = vmatprep.subr.mxu0 0.0
        %2265 = vmatpush1.msra.mxu0 0.0
        %2266 = vmatprep.subr.mxu0 0.0
        %2267 = vmatpush1.msra.mxu0 0.0
        %2268 = vmatprep.subr.mxu0 0.0
        %2269 = vmatpush1.msra.mxu0 0.0
        %2270 = vmatprep.subr.mxu0 0.0
        %2271 = vmatpush1.msra.mxu0 0.0
        %2272 = vmatprep.subr.mxu0 0.0
        %2273 = vmatpush1.msra.mxu0 0.0
        %2274 = vmatprep.subr.mxu0 0.0
        %2275 = vmatpush1.msra.mxu0 0.0
        %2276 = vmatprep.subr.mxu0 0.0
        %2277 = vmatpush1.msra.mxu0 0.0
        %2278 = vmatprep.subr.mxu0 0.0
        %2279 = vmatpush1.msra.mxu0 0.0
        %2280 = vmatprep.subr.mxu0 0.0
        %2281 = vmatpush1.msra.mxu0 0.0
        %2282 = vmatprep.subr.mxu0 0.0
        %2283 = vmatpush1.msra.mxu0 0.0
        %2284 = vmatprep.subr.mxu0 0.0
        %2285 = vmatpush1.msra.mxu0 0.0
        %2286 = vmatprep.subr.mxu0 0.0
        %2287 = vmatpush1.msra.mxu0 0.0
        %2288 = vmatprep.mubr.f32.mxu0 0.0
        %2289 = vmatmul.mubr.f32.gmra.mrb[0].mxu0 %v2219
        %v2290 = vpop.f32.mrb[0].mxu0
        %v2291 = vadd.f32 %v2216, %v2290
        %v2292 = vpop.f32.mrb[0].mxu0
        %2293 = vmatprep.mubr.f32.mxu0 0.0
        %2294 = vmatmul.mubr.f32.gmra.mrb[0].mxu0 %v2222
        %v2295 = vpop.f32.mrb[0].mxu0
        %v2296 = vadd.f32 %v2216, %v2295
        %v2297 = vpop.f32.mrb[0].mxu0
        %2298 = vdwg.mxu0
        %2299 = vst.msk [vmem:[%s300] sm:$0xff] %vm412, %v2291
        %2300 = vst.msk [vmem:[%s300 + $0x8] sm:$0xff] %vm412, %v2296
        %s2301 = sand.u32 %s156, 1
        %s2302 = scalar_lea.sflag [#allocation6], %s2301
        %s2303 = sand.u32 %s156, 1
        %s2304 = smul.addr %s2303, 16
        %s2305 = scalar_lea.vmem [#allocation12], %s2304
        // Predicated region
        $region61: #{tpu_custom_call.1} parent=39 // pred_check
          %p2306 = pneg %p166
        $region62: #{tpu_custom_call.1} parent=39 // pred_check_branch
          %2308 = sbr.rel (%p2306) target = $region64
        $region63: #{tpu_custom_call.1} parent=39 // pred_region
          %s2309 = smul.u32 2, %s29
          %s2311 = ssub.s32 256, 256
          %2312 = vsyncadd %s2302, %s2311
          %s2313 = smul.addr %s28, 2
          %s2314 = sadd.s32 %s2309, %s2313
          %s2315 = smul.addr %s2314, 128
          %s2316 = scalar_lea.hbm %s5, %s2315
          %s2317 = sshll.u32 %s2305, 4
          %s2318 = int_to_ptr.vmem [resolvable:$true] %s2317
          %2323 = dma.vmem_to_hbm [thread:$0]  %s2318, 256, %s2316, %s2302, 128, 128, 8
        $region64: #{tpu_custom_call.1} parent=39 // pred_fallthru
          _
      $region40: #{tpu_custom_call.1} parent=5 // pred_fallthru
        _
      %p2324 = scmp.le.s32.totalorder 2, %s19
      // Predicated region
      $region65: #{tpu_custom_call.1} parent=5 // pred_check
        %p2325 = pneg %p2324
      $region66: #{tpu_custom_call.1} parent=5 // pred_check_branch
        %2327 = sbr.rel (%p2325) target = $region68
      $region67: #{tpu_custom_call.1} parent=5 // pred_region
        %s2328 = ssub.s32 %s19, 2
        // Predicated region
        $region69: #{tpu_custom_call.1} parent=67 // pred_check
          %p2329 = pneg %p172
        $region70: #{tpu_custom_call.1} parent=67 // pred_check_branch
          %2331 = sbr.rel (%p2329) target = $region72
        $region71: #{tpu_custom_call.1} parent=67 // pred_region
          %s2332 = sand.u32 %s157, 1
          %s2333 = scalar_lea.sflag [#allocation6], %s2332
          %s2334 = sand.u32 %s157, 1
          %s2335 = smul.addr %s2334, 16
          %s2336 = scalar_lea.vmem [#allocation12], %s2335
          %2337 = dma.done %s2333, 256
        $region72: #{tpu_custom_call.1} parent=67 // pred_fallthru
          _
      $region68: #{tpu_custom_call.1} parent=5 // pred_fallthru
        _
    $region6: #{tpu_custom_call.1} parent=1 // loop_footer
      %s23 = sadd.s32 1, %s19
    $region7: #{tpu_custom_call.1} parent=1 // loop_footer_branch
      %18 = sbr.rel target = $region3
    $region8: #{tpu_custom_call.1} parent=1 // loop_exit
      _
    %2338 = vsyncpa [#allocation5], 1
    %s2339 = scalar_lea.sflag [#allocation5], 1
    %2340 = vsyncpa %s2339, 1
    %2341 = vsyncpa [#allocation8], 1
    %2342 = vsyncpa [#allocation11], 1
    %2343 = vsyncpa [#allocation6], 1
    %s2344 = scalar_lea.sflag [#allocation6], 1
    %2345 = vsyncpa %s2344, 1

</llo_original>
